<compile_context>
chip_gen: v7x
topology: tpu7x:2x2x1
jax: 0.10.0
libtpu: 0.0.40
codegen_flags: <defaults>
</compile_context>

<pallas_src>
import functools

import jax
import jax.numpy as jnp
import numpy as np
from jax.experimental import pallas as pl
from jax.experimental.pallas import tpu as pltpu


def _round_up(x, m):
    return (x + m - 1) // m * m


def _conv_pool_kernel(patches_ref, wc_ref, bc_ref, out_ref, *,
                      n_windows, w_tile, tiles_per_split, out_ch):
    """One (core-split, batch, W-tile) grid step.

    Fused conv matmul (both convs in a single 256-wide MXU pass), relu*sigmoid
    gating, and a running max into the revisited output block.
    """
    c_idx = pl.program_id(0)          # core-parallel split of the W axis
    w_idx = pl.program_id(2)          # reduction axis (last)
    global_tile = c_idx * tiles_per_split + w_idx

    # Running-max accumulator lives in the revisited output block.
    # NOTE: 0 is a valid identity (and a valid fill for masked rows) ONLY
    # because gated = relu(c1) * sigmoid(c2) >= 0.  If the activation ever
    # changes, both this init and the mask fill must become -inf.
    @pl.when(w_idx == 0)
    def _():
        out_ref[...] = jnp.zeros_like(out_ref)

    p = patches_ref[0]                                         # (W_TILE, K*E) bf16
    c = jnp.dot(p, wc_ref[...], preferred_element_type=jnp.float32) + bc_ref[...]
    gated = jnp.maximum(c[:, :out_ch], 0.0) * jax.nn.sigmoid(c[:, out_ch:])

    tile_start = global_tile * w_tile
    tile_is_full = tile_start + w_tile <= n_windows

    # Steady state: every row valid -> no iota/compare/select on this path.
    @pl.when(tile_is_full)
    def _():
        out_ref[0, 0] = jnp.maximum(out_ref[0, 0],
                                    jnp.max(gated, axis=0, keepdims=True))

    # Boundary / fully-out-of-range (clamped duplicate) tiles: mask invalid
    # rows to 0 BEFORE the max (a select, not arithmetic, so garbage-padded
    # rows are safe even if they contain NaN/Inf).
    @pl.when(jnp.logical_not(tile_is_full))
    def _():
        row = tile_start + jax.lax.broadcasted_iota(jnp.int32, (w_tile, 1), 0)
        masked = jnp.where(row < n_windows, gated, 0.0)
        out_ref[0, 0] = jnp.maximum(out_ref[0, 0],
                                    jnp.max(masked, axis=0, keepdims=True))


def malconv_forward(tokens, params, *, window_size, w_tile=512):
    emb_table = params["emb"]            # (257, E) f32
    w1, b1 = params["w1"], params["b1"]  # (O, E, K), (O,)
    w2, b2 = params["w2"], params["b2"]
    d1w, d1b = params["d1w"], params["d1b"]  # (128, 128), (128,)
    d2w, d2b = params["d2w"], params["d2b"]  # (1, 128), (1,)

    B, L = tokens.shape
    E = emb_table.shape[1]
    O = w1.shape[0]
    K = window_size
    W = L // K                          # number of stride==kernel conv windows
    KE = K * E                          # contraction length (4000 for E=8,K=500)

    # W tile: multiple of 8 sublanes.  Default 512 keeps the double-buffered
    # bf16 patch tile at ~8 MiB and amortizes per-grid-step overhead.
    W_TILE = min(_round_up(w_tile, 8), _round_up(W, 8))
    num_w_tiles = int(pl.cdiv(W, W_TILE))
    # Core-parallel factor of 2 on the W axis so v7x's two TensorCores stay
    # busy even at B=1; harmless (extra parallel grid dim) on v5e/v6e.
    n_splits = 2 if num_w_tiles > 1 else 1
    tiles_per_split = int(pl.cdiv(num_w_tiles, n_splits))

    # ---- wrapper glue: ONE bf16 gather, free reshape, no pads ----
    # (B, W*K, E) -> (B, W, K*E) is a contiguous reshape (no data movement).
    patches = emb_table.astype(jnp.bfloat16)[tokens[:, :W * K]].reshape(B, W, KE)

    def conv_w_to_mat(w):  # (O, E, K) -> (K*E, O), row index = k*E + c
        return jnp.transpose(w, (2, 1, 0)).reshape(KE, O)

    # Both conv weights fused into one (K*E, 2*O) matrix: every patch tile
    # feeds a full 256-wide MXU pass.  Biases/gating/accumulation stay f32.
    wc = jnp.concatenate([conv_w_to_mat(w1), conv_w_to_mat(w2)], axis=1)
    wc = wc.astype(jnp.bfloat16)                               # (KE, 2O)
    bc = jnp.concatenate([b1, b2]).reshape(1, 2 * O).astype(jnp.float32)

    kernel = functools.partial(
        _conv_pool_kernel, n_windows=W, w_tile=W_TILE,
        tiles_per_split=tiles_per_split, out_ch=O)

    # VMEM budget = actual need + headroom (no artificial clamps).
    patch_tile_bytes = W_TILE * KE * 2          # bf16 streaming tile
    weight_bytes = KE * 2 * O * 2               # bf16 fused conv weight
    interm_bytes = 3 * W_TILE * 2 * O * 4       # f32 pre-act / gated / masked
    vmem_limit = int(2 * patch_tile_bytes       # double-buffered patch stream
                     + 2 * weight_bytes         # default double buffer (DMA'd once)
                     + interm_bytes + (12 << 20))

    pooled = pl.pallas_call(
        kernel,
        out_shape=jax.ShapeDtypeStruct((n_splits, B, 1, O), jnp.float32),
        grid_spec=pltpu.PrefetchScalarGridSpec(
            num_scalar_prefetch=0,
            # reduction axis (W tiles) last; leading axis = core-parallel split
            grid=(n_splits, B, tiles_per_split),
            in_specs=[
                # Clamp fully out-of-range tile indices (odd tile counts) onto
                # the last valid tile; the in-kernel row mask zeroes them out.
                pl.BlockSpec(
                    (1, W_TILE, KE),
                    lambda c, b, w: (b, jnp.minimum(c * tiles_per_split + w,
                                                    num_w_tiles - 1), 0)),
                pl.BlockSpec((KE, 2 * O), lambda c, b, w: (0, 0)),   # fused conv W
                pl.BlockSpec((1, 2 * O), lambda c, b, w: (0, 0)),    # fused conv b
            ],
            out_specs=pl.BlockSpec((1, 1, 1, O),
                                   lambda c, b, w: (c, b, 0, 0)),    # lane-dense
        ),
        compiler_params=pltpu.CompilerParams(
            dimension_semantics=("parallel", "parallel", "arbitrary"),
            vmem_limit_bytes=vmem_limit),
    )(patches, wc, bc)

    pooled = jnp.max(pooled[:, :, 0, :], axis=0)               # (B, 128) f32

    # Dense head (tiny, ~16 KFLOP/sample) hoisted out of the hot loop into JAX.
    h = jnp.maximum(pooled @ d1w.T + d1b, 0.0)
    logit = h @ d2w.T + d2b
    return jax.nn.sigmoid(logit)                               # (B, 1)


def reference_forward(tokens, params, *, window_size):
    """Pure-JAX f32 reference matching the PyTorch forward semantics."""
    emb = params["emb"][tokens]                                # (B, L, E)
    x = jnp.transpose(emb, (0, 2, 1))                          # (B, E, L)  (NCW)
    dn = ("NCH", "OIH", "NCH")
    c1 = jax.lax.conv_general_dilated(x, params["w1"], (window_size,), "VALID",
                                      dimension_numbers=dn) + params["b1"][None, :, None]
    c2 = jax.lax.conv_general_dilated(x, params["w2"], (window_size,), "VALID",
                                      dimension_numbers=dn) + params["b2"][None, :, None]
    g = jnp.maximum(c1, 0.0) * jax.nn.sigmoid(c2)              # (B, 128, W)
    pooled = jnp.max(g, axis=-1)                               # (B, 128)
    h = jnp.maximum(pooled @ params["d1w"].T + params["d1b"], 0.0)
    logit = h @ params["d2w"].T + params["d2b"]
    return jax.nn.sigmoid(logit)                               # (B, 1)


def init_params(key, *, vocab=257, emb_dim=8, out_ch=128, window_size=500):
    ks = jax.random.split(key, 8)
    emb = 0.1 * jax.random.normal(ks[0], (vocab, emb_dim), jnp.float32)
    emb = emb.at[0].set(0.0)  # padding_idx=0
    w1 = 0.05 * jax.random.normal(ks[1], (out_ch, emb_dim, window_size), jnp.float32)
    b1 = 0.05 * jax.random.normal(ks[2], (out_ch,), jnp.float32)
    w2 = 0.05 * jax.random.normal(ks[3], (out_ch, emb_dim, window_size), jnp.float32)
    b2 = 0.05 * jax.random.normal(ks[4], (out_ch,), jnp.float32)
    d1w = 0.1 * jax.random.normal(ks[5], (out_ch, out_ch), jnp.float32)
    d1b = jnp.zeros((out_ch,), jnp.float32)
    d2w = 0.1 * jax.random.normal(ks[6], (1, out_ch), jnp.float32)
    d2b = jnp.zeros((1,), jnp.float32)
    return dict(emb=emb, w1=w1, b1=b1, w2=w2, b2=b2,
                d1w=d1w, d1b=d1b, d2w=d2w, d2b=d2b)


if __name__ == "__main__":
    WINDOW = 500          # kernel_size == stride == 500, as in the module
    W_OUT = 21            # odd tile count at W_TILE=8 -> exercises the ragged
                          # last tile AND the clamped fully-out-of-range tile
    B, L = 2, WINDOW * W_OUT   # scaled-down stand-in for the real 2**20 input

    key = jax.random.PRNGKey(0)
    kp, kt = jax.random.split(key)
    params = init_params(kp, window_size=WINDOW)
    tokens = jax.random.randint(kt, (B, L), 0, 257, dtype=jnp.int32)

    # Small W tile in the demo so the running-max / core-split / masking paths
    # are all exercised (production default w_tile=512).
    fwd = jax.jit(functools.partial(malconv_forward, window_size=WINDOW, w_tile=8))
    out = jax.block_until_ready(fwd(tokens, params))

    ref = reference_forward(tokens, params, window_size=WINDOW)
    # bf16 conv inputs (f32 accumulation) -> loosened tolerance vs f32 reference.
    np.testing.assert_allclose(np.asarray(out), np.asarray(ref), rtol=2e-2, atol=1e-2)

    print("KERNEL_OK")
</pallas_src>

<mosaic_0001>
module attributes {stable_mosaic.version = 11 : i64} {
  func.func @_conv_pool_kernel(%arg0: i32, %arg1: i32, %arg2: i32, %arg3: memref<1x8x4000xbf16, #tpu.memory_space<vmem>>, %arg4: memref<4000x256xbf16, #tpu.memory_space<vmem>>, %arg5: memref<1x256xf32, #tpu.memory_space<vmem>>, %arg6: memref<1x1x1x128xf32, #tpu.memory_space<vmem>>) attributes {dimension_semantics = [#tpu.dimension_semantics<parallel>, #tpu.dimension_semantics<parallel>, #tpu.dimension_semantics<arbitrary>], iteration_bounds = array<i64: 2, 2, 2>, scalar_prefetch = 0 : i64, scratch_operands = 0 : i64, tpu.core_type = #tpu.core_type<tc>, window_params = [{transform_indices = @transform_0, window_bounds = array<i64: 1, 8, 4000>}, {pipeline_mode = #tpu.pipeline_mode<synchronous>, transform_indices = @transform_1, window_bounds = array<i64: 4000, 256>}, {pipeline_mode = #tpu.pipeline_mode<synchronous>, transform_indices = @transform_2, window_bounds = array<i64: 1, 256>}, {transform_indices = @transform_3, window_bounds = array<i64: 1, 1, 1, 128>}]} {
    %c2_i32 = arith.constant 2 : i32
    %0 = arith.muli %arg0, %c2_i32 : i32
    %1 = arith.addi %0, %arg2 : i32
    %c0_i32 = arith.constant 0 : i32
    %2 = arith.cmpi eq, %arg2, %c0_i32 : i32
    %3 = arith.extui %2 : i1 to i32
    %c0_i32_0 = arith.constant 0 : i32
    %4 = arith.cmpi ne, %3, %c0_i32_0 : i32
    scf.if %4 {
      %cst_12 = arith.constant 0.000000e+00 : f32
      %30 = vector.broadcast %cst_12 : f32 to vector<1x1x1x128xf32>
      %c0_13 = arith.constant 0 : index
      %c0_14 = arith.constant 0 : index
      %c0_15 = arith.constant 0 : index
      %c0_16 = arith.constant 0 : index
      %31 = vector.load %arg6[%c0_13, %c0_14, %c0_15, %c0_16] : memref<1x1x1x128xf32, #tpu.memory_space<vmem>>, vector<1x1x1x128xf32>
      tpu.vector_store %arg6[%c0_13, %c0_14, %c0_15, %c0_16], %30 {strides = array<i32>} : memref<1x1x1x128xf32, #tpu.memory_space<vmem>>, vector<1x1x1x128xf32>,
    } else {
    }
    %c0 = arith.constant 0 : index
    %c0_1 = arith.constant 0 : index
    %c0_2 = arith.constant 0 : index
    %5 = vector.load %arg3[%c0, %c0_1, %c0_2] : memref<1x8x4000xbf16, #tpu.memory_space<vmem>>, vector<1x8x4000xbf16>
    %6 = vector.shape_cast %5 : vector<1x8x4000xbf16> to vector<8x4000xbf16>
    %c0_3 = arith.constant 0 : index
    %c0_4 = arith.constant 0 : index
    %7 = vector.load %arg4[%c0_3, %c0_4] : memref<4000x256xbf16, #tpu.memory_space<vmem>>, vector<4000x256xbf16>
    %cst = arith.constant dense<0.000000e+00> : vector<8x256xf32>
    %8 = tpu.matmul %6, %7, %cst {dimension_numbers = #tpu.dot_dimension_numbers<[1], [0], [0], [1], [0, 0, 1, 1], [], []>} : vector<8x4000xbf16>, vector<4000x256xbf16>, vector<8x256xf32> -> vector<8x256xf32>
    %c0_5 = arith.constant 0 : index
    %c0_6 = arith.constant 0 : index
    %9 = vector.load %arg5[%c0_5, %c0_6] : memref<1x256xf32, #tpu.memory_space<vmem>>, vector<1x256xf32>
    %10 = vector.broadcast %9 : vector<1x256xf32> to vector<8x256xf32>
    %11 = arith.addf %8, %10 : vector<8x256xf32>
    %12 = vector.extract_strided_slice %11 {offsets = [0, 0], sizes = [8, 128], strides = [1, 1]} : vector<8x256xf32> to vector<8x128xf32>
    %cst_7 = arith.constant 0.000000e+00 : f32
    %13 = vector.broadcast %cst_7 : f32 to vector<8x128xf32>
    %14 = arith.maximumf %12, %13 : vector<8x128xf32>
    %15 = vector.extract_strided_slice %11 {offsets = [0, 128], sizes = [8, 128], strides = [1, 1]} : vector<8x256xf32> to vector<8x128xf32>
    %16 = arith.negf %15 : vector<8x128xf32>
    %17 = math.exp %16 : vector<8x128xf32>
    %cst_8 = arith.constant 1.000000e+00 : f32
    %18 = vector.broadcast %cst_8 : f32 to vector<8x128xf32>
    %19 = arith.addf %18, %17 : vector<8x128xf32>
    %20 = arith.divf %18, %19 : vector<8x128xf32>
    %21 = arith.mulf %14, %20 : vector<8x128xf32>
    %c8_i32 = arith.constant 8 : i32
    %22 = arith.muli %1, %c8_i32 : i32
    %c8_i32_9 = arith.constant 8 : i32
    %23 = arith.addi %22, %c8_i32_9 : i32
    %c21_i32 = arith.constant 21 : i32
    %24 = arith.cmpi sle, %23, %c21_i32 : i32
    %25 = arith.extui %24 : i1 to i32
    %c0_i32_10 = arith.constant 0 : i32
    %26 = arith.cmpi ne, %25, %c0_i32_10 : i32
    scf.if %26 {
      %c0_12 = arith.constant 0 : index
      %c0_13 = arith.constant 0 : index
      %c0_14 = arith.constant 0 : index
      %c0_15 = arith.constant 0 : index
      %30 = vector.load %arg6[%c0_12, %c0_13, %c0_14, %c0_15] : memref<1x1x1x128xf32, #tpu.memory_space<vmem>>, vector<1x1x1x128xf32>
      %31 = vector.shape_cast %30 : vector<1x1x1x128xf32> to vector<1x128xf32>
      %cst_16 = arith.constant dense<0xFF800000> : vector<128xf32>
      %32 = vector.multi_reduction <maximumf>, %21, %cst_16 [0] : vector<8x128xf32> to vector<128xf32>
      %33 = vector.shape_cast %32 : vector<128xf32> to vector<1x128xf32>
      %34 = arith.maximumf %31, %33 : vector<1x128xf32>
      %c0_17 = arith.constant 0 : index
      %c0_18 = arith.constant 0 : index
      %c0_19 = arith.constant 0 : index
      %c0_20 = arith.constant 0 : index
      %35 = vector.load %arg6[%c0_17, %c0_18, %c0_19, %c0_20] : memref<1x1x1x128xf32, #tpu.memory_space<vmem>>, vector<1x1x1x128xf32>
      %36 = vector.shape_cast %35 : vector<1x1x1x128xf32> to vector<1x128xf32>
      %37 = vector.shape_cast %34 : vector<1x128xf32> to vector<1x1x1x128xf32>
      tpu.vector_store %arg6[%c0_17, %c0_18, %c0_19, %c0_20], %37 {strides = array<i32>} : memref<1x1x1x128xf32, #tpu.memory_space<vmem>>, vector<1x1x1x128xf32>,
    } else {
    }
    %true = arith.constant true
    %27 = arith.xori %24, %true : i1
    %28 = arith.extui %27 : i1 to i32
    %c0_i32_11 = arith.constant 0 : i32
    %29 = arith.cmpi ne, %28, %c0_i32_11 : i32
    scf.if %29 {
      %30 = tpu.iota {dimensions = array<i32: 0>} : vector<8x1xi32>
      %31 = vector.broadcast %22 : i32 to vector<8x1xi32>
      %32 = arith.addi %31, %30 : vector<8x1xi32>
      %c21_i32_12 = arith.constant 21 : i32
      %33 = vector.broadcast %c21_i32_12 : i32 to vector<8x1xi32>
      %34 = arith.cmpi slt, %32, %33 : vector<8x1xi32>
      %cst_13 = arith.constant 0.000000e+00 : f32
      %35 = vector.shape_cast %34 : vector<8x1xi1> to vector<8x1xi1>
      %36 = vector.broadcast %35 : vector<8x1xi1> to vector<8x128xi1>
      %37 = vector.broadcast %cst_13 : f32 to vector<8x128xf32>
      %38 = arith.select %36, %21, %37 : vector<8x128xi1>, vector<8x128xf32>
      %c0_14 = arith.constant 0 : index
      %c0_15 = arith.constant 0 : index
      %c0_16 = arith.constant 0 : index
      %c0_17 = arith.constant 0 : index
      %39 = vector.load %arg6[%c0_14, %c0_15, %c0_16, %c0_17] : memref<1x1x1x128xf32, #tpu.memory_space<vmem>>, vector<1x1x1x128xf32>
      %40 = vector.shape_cast %39 : vector<1x1x1x128xf32> to vector<1x128xf32>
      %cst_18 = arith.constant dense<0xFF800000> : vector<128xf32>
      %41 = vector.multi_reduction <maximumf>, %38, %cst_18 [0] : vector<8x128xf32> to vector<128xf32>
      %42 = vector.shape_cast %41 : vector<128xf32> to vector<1x128xf32>
      %43 = arith.maximumf %40, %42 : vector<1x128xf32>
      %c0_19 = arith.constant 0 : index
      %c0_20 = arith.constant 0 : index
      %c0_21 = arith.constant 0 : index
      %c0_22 = arith.constant 0 : index
      %44 = vector.load %arg6[%c0_19, %c0_20, %c0_21, %c0_22] : memref<1x1x1x128xf32, #tpu.memory_space<vmem>>, vector<1x1x1x128xf32>
      %45 = vector.shape_cast %44 : vector<1x1x1x128xf32> to vector<1x128xf32>
      %46 = vector.shape_cast %43 : vector<1x128xf32> to vector<1x1x1x128xf32>
      tpu.vector_store %arg6[%c0_19, %c0_20, %c0_21, %c0_22], %46 {strides = array<i32>} : memref<1x1x1x128xf32, #tpu.memory_space<vmem>>, vector<1x1x1x128xf32>,
    } else {
    }
    return
  }
  func.func @transform_0(%arg0: i32, %arg1: i32, %arg2: i32) -> (i32, i32, i32) {
    %c2_i32 = arith.constant 2 : i32
    %0 = arith.muli %arg0, %c2_i32 : i32
    %1 = arith.addi %0, %arg2 : i32
    %c2_i32_0 = arith.constant 2 : i32
    %2 = arith.minsi %1, %c2_i32_0 : i32
    %c0_i32 = arith.constant 0 : i32
    %c0_i32_1 = arith.constant 0 : i32
    return %arg1, %2, %c0_i32 : i32, i32, i32
  }
  func.func @transform_1(%arg0: i32, %arg1: i32, %arg2: i32) -> (i32, i32) {
    %c0_i32 = arith.constant 0 : i32
    %c0_i32_0 = arith.constant 0 : i32
    %c0_i32_1 = arith.constant 0 : i32
    return %c0_i32, %c0_i32_0 : i32, i32
  }
  func.func @transform_2(%arg0: i32, %arg1: i32, %arg2: i32) -> (i32, i32) {
    %c0_i32 = arith.constant 0 : i32
    %c0_i32_0 = arith.constant 0 : i32
    %c0_i32_1 = arith.constant 0 : i32
    return %c0_i32, %c0_i32_0 : i32, i32
  }
  func.func @transform_3(%arg0: i32, %arg1: i32, %arg2: i32) -> (i32, i32, i32, i32) {
    %c0_i32 = arith.constant 0 : i32
    %c0_i32_0 = arith.constant 0 : i32
    %c0_i32_1 = arith.constant 0 : i32
    return %arg0, %arg1, %c0_i32, %c0_i32_0 : i32, i32, i32, i32
  }
}

</mosaic_0001>

<llo_original>
// kernel: malconv_forward.1
$region0: #{malconv_forward.1}
  #allocation0 [shape = 'u32[]', space=smem, size = 0x4, offset = 0x4, fixed_abs, tag = 'smem constant byte address 0x4 - core index']
  #allocation1 [shape = 'u32[144,128]{1,0:T(1,128)}', space=vmem, size = 0x12000, scoped, tag = 'internal scratch']
  %s0 = inlined_call_operand.vmem [shape: bf16[2,21,4000], index: 0, kind: input, shape index: {}]
  %s1 = inlined_call_operand.vmem [shape: bf16[4000,256], index: 1, kind: input, shape index: {}]
  %s2 = inlined_call_operand.vmem [shape: f32[1,256], index: 2, kind: input, shape index: {}]
  %s3 = inlined_call_operand.vmem [shape: f32[2,2,1,128], index: 3, kind: output, shape index: {}]
  %s4 = sld [smem:[#allocation0]]
  $region57: #{malconv_forward.1} parent=0
    _
  %s6 = ssub.s32 1, %s4
  %s7 = scalar_select 0, %s6, %s4
  loop: start=0, step=1, limit=10
  $region2: #{malconv_forward.1} parent=0 // loop_pre_header
    _
  $region3: #{malconv_forward.1} parent=0 // loop_header
    %s9 = sphi 0, %s13
    %p10 = scmp.ge.s32.totalorder %s9, 10
    %s16 = sphi 0, %s35
    %s17 = sphi 0, %s31
    %s18 = sphi 0, %s27
    %s19 = sphi 0, %s16
    %s20 = sphi 0, %s17
    %s21 = sphi 0, %s18
    %s22 = sphi 0, %s19
    %s23 = sphi 0, %s20
    %s24 = sphi 0, %s21
    %s48 = sphi 0, %s50
    %s51 = sphi 0, %s48
    %s52 = sphi 0, %s51
    %s68 = sphi 0, %s52
    %s72 = sphi 0, %s72
    %s74 = sphi 0, %s72
    %s75 = sphi 0, %s74
    %s89 = sphi 0, %s75
    %s93 = sphi 0, %s93
    %s95 = sphi 0, %s93
    %s96 = sphi 0, %s95
    %s110 = sphi 0, %s96
    %s118 = sphi 0, %s120
    %s121 = sphi 0, %s118
    %s122 = sphi 0, %s121
    %s138 = sphi 0, %s122
  $region4: #{malconv_forward.1} parent=0 // loop_header_branch
    %12 = sbr.rel (%p10) target = $region8
  $region5: #{malconv_forward.1} parent=0 // loop_body
    %s14 = ssub.s32 %s9, 1
    %s15 = ssub.s32 %s9, 2
    %s25 = sadd.s32 1, %s18
    %p26 = scmp.ge.s32.totalorder %s25, 2
    %s27 = scalar_select %p26, 0, %s25
    %s28 = sadd.s32 1, %s17
    %s29 = scalar_select %p26, %s28, %s17
    %p30 = scmp.ge.s32.totalorder %s29, 2
    %s31 = scalar_select %p30, 0, %s29
    %s32 = sadd.s32 1, %s16
    %s33 = scalar_select %p30, %s32, %s16
    %p34 = scmp.ge.s32.totalorder %s33, 2
    %s35 = scalar_select %p34, 0, %s33
    %s36 = smul.u32 %s16, 2
    %s37 = sadd.s32 %s36, %s18
    %p38 = scmp.lt.s32.totalorder %s37, 2
    %s39 = scalar_select %p38, %s37, 2
    %s40 = smul.u32 %s35, 2
    %s41 = sadd.s32 %s40, %s27
    %p42 = scmp.lt.s32.totalorder %s41, 2
    %s43 = scalar_select %p42, %s41, 2
    %s44 = ssub.s32 %s17, %s31
    %s45 = ssub.s32 %s39, %s43
    %s46 = sor.u32 %s44, %s45
    %p47 = scmp.eq.s32.totalorder %s46, 0
    %s49 = sadd.s32 %s48, 1
    %s50 = scalar_select %p47, %s48, %s49
    %p53 = pneg %p47
    %p54 = scmp.eq.s32.totalorder %s9, 7
    %p55 = por %p53, %p54
    %p56 = scmp.ne.s32.totalorder %s48, %s51
    %p57 = scmp.eq.s32.totalorder %s9, 0
    %p58 = por %p56, %p57
    %p59 = scmp.ne.s32.totalorder %s48, %s51
    %p60 = scmp.eq.s32.totalorder %s14, 7
    %p61 = por %p59, %p60
    %p62 = scmp.ne.s32.totalorder %s51, %s52
    %p63 = scmp.eq.s32.totalorder %s14, 0
    %p64 = por %p62, %p63
    %p65 = scmp.ne.s32.totalorder %s51, %s52
    %p66 = scmp.eq.s32.totalorder %s15, 7
    %p67 = por %p65, %p66
    %p69 = scmp.ne.s32.totalorder %s52, %s68
    %p70 = scmp.eq.s32.totalorder %s15, 0
    %p71 = por %p69, %p70
    %s73 = sadd.s32 %s72, 1
    %p76 = scmp.eq.s32.totalorder %s9, 7
    %p77 = scmp.ne.s32.totalorder %s72, %s74
    %p78 = scmp.eq.s32.totalorder %s9, 0
    %p79 = por %p77, %p78
    %p80 = scmp.ne.s32.totalorder %s72, %s74
    %p81 = scmp.eq.s32.totalorder %s14, 7
    %p82 = por %p80, %p81
    %p83 = scmp.ne.s32.totalorder %s74, %s75
    %p84 = scmp.eq.s32.totalorder %s14, 0
    %p85 = por %p83, %p84
    %p86 = scmp.ne.s32.totalorder %s74, %s75
    %p87 = scmp.eq.s32.totalorder %s15, 7
    %p88 = por %p86, %p87
    %p90 = scmp.ne.s32.totalorder %s75, %s89
    %p91 = scmp.eq.s32.totalorder %s15, 0
    %p92 = por %p90, %p91
    %s94 = sadd.s32 %s93, 1
    %p97 = scmp.eq.s32.totalorder %s9, 7
    %p98 = scmp.ne.s32.totalorder %s93, %s95
    %p99 = scmp.eq.s32.totalorder %s9, 0
    %p100 = por %p98, %p99
    %p101 = scmp.ne.s32.totalorder %s93, %s95
    %p102 = scmp.eq.s32.totalorder %s14, 7
    %p103 = por %p101, %p102
    %p104 = scmp.ne.s32.totalorder %s95, %s96
    %p105 = scmp.eq.s32.totalorder %s14, 0
    %p106 = por %p104, %p105
    %p107 = scmp.ne.s32.totalorder %s95, %s96
    %p108 = scmp.eq.s32.totalorder %s15, 7
    %p109 = por %p107, %p108
    %p111 = scmp.ne.s32.totalorder %s96, %s110
    %p112 = scmp.eq.s32.totalorder %s15, 0
    %p113 = por %p111, %p112
    %s114 = ssub.s32 %s16, %s35
    %s115 = ssub.s32 %s17, %s31
    %s116 = sor.u32 %s114, %s115
    %p117 = scmp.eq.s32.totalorder %s116, 0
    %s119 = sadd.s32 %s118, 1
    %s120 = scalar_select %p117, %s118, %s119
    %p123 = pneg %p117
    %p124 = scmp.eq.s32.totalorder %s9, 7
    %p125 = por %p123, %p124
    %p126 = scmp.ne.s32.totalorder %s118, %s121
    %p127 = scmp.eq.s32.totalorder %s9, 0
    %p128 = por %p126, %p127
    %p129 = scmp.ne.s32.totalorder %s118, %s121
    %p130 = scmp.eq.s32.totalorder %s14, 7
    %p131 = por %p129, %p130
    %p132 = scmp.ne.s32.totalorder %s121, %s122
    %p133 = scmp.eq.s32.totalorder %s14, 0
    %p134 = por %p132, %p133
    %p135 = scmp.ne.s32.totalorder %s121, %s122
    %p136 = scmp.eq.s32.totalorder %s15, 7
    %p137 = por %p135, %p136
    %p139 = scmp.ne.s32.totalorder %s122, %s138
    %p140 = scmp.eq.s32.totalorder %s15, 0
    %p141 = por %p139, %p140
    %p142 = scmp.le.s32.totalorder 1, %s9
    %p143 = scmp.lt.s32.totalorder %s9, 9
    %p144 = pnand %p142, %p143
    %p145 = pneg %p144
    // Predicated region
    $region9: #{malconv_forward.1} parent=5 // pred_check
      _
    $region10: #{malconv_forward.1} parent=5 // pred_check_branch
      %147 = sbr.rel (%p144) target = $region12
    $region11: #{malconv_forward.1} parent=5 // pred_region
      %s148 = ssub.s32 %s9, 1
      // Predicated region
      $region13: #{malconv_forward.1} parent=11 // pred_check
        %p149 = pneg %p85
      $region14: #{malconv_forward.1} parent=11 // pred_check_branch
        %151 = sbr.rel (%p149) target = $region16
      $region15: #{malconv_forward.1} parent=11 // pred_region
        _
      $region16: #{malconv_forward.1} parent=11 // pred_fallthru
        _
      // Predicated region
      $region17: #{malconv_forward.1} parent=11 // pred_check
        %p152 = pneg %p106
      $region18: #{malconv_forward.1} parent=11 // pred_check_branch
        %154 = sbr.rel (%p152) target = $region20
      $region19: #{malconv_forward.1} parent=11 // pred_region
        _
      $region20: #{malconv_forward.1} parent=11 // pred_fallthru
        _
    $region12: #{malconv_forward.1} parent=5 // pred_fallthru
      _
    %p155 = scmp.lt.s32.totalorder %s9, 8
    // Predicated region
    $region21: #{malconv_forward.1} parent=5 // pred_check
      %p156 = pneg %p155
    $region22: #{malconv_forward.1} parent=5 // pred_check_branch
      %158 = sbr.rel (%p156) target = $region24
    $region23: #{malconv_forward.1} parent=5 // pred_region
      // Predicated region
      $region25: #{malconv_forward.1} parent=23 // pred_check
        %p159 = pneg %p58
      $region26: #{malconv_forward.1} parent=23 // pred_check_branch
        %161 = sbr.rel (%p159) target = $region28
      $region27: #{malconv_forward.1} parent=23 // pred_region
        %s162 = smul.u32 %s16, 2
        %s163 = sadd.s32 %s162, %s18
        %p164 = scmp.lt.s32.totalorder %s163, 2
        %s165 = scalar_select %p164, %s163, 2
        %p166 = scmp.lt.s32.totalorder %s17, 1
        %s167 = scalar_select %p166, %s17, 1
        %p168 = scmp.lt.s32.totalorder %s165, 2
        %s169 = scalar_select %p168, %s165, 2
        %s170 = smul.addr %s169, 32
        %s171 = smul.addr %s167, 96
        %s172 = sadd.s32 %s170, %s171
        %s173 = smul.addr %s172, 4
        %s174 = scalar_lea.vmem %s0, %s173
        %s175 = smul.u32 %s16, 2
        %s176 = sadd.s32 %s175, %s18
        %p177 = scmp.lt.s32.totalorder %s176, 2
        %s178 = scalar_select %p177, %s176, 2
      $region28: #{malconv_forward.1} parent=23 // pred_fallthru
        _
    $region24: #{malconv_forward.1} parent=5 // pred_fallthru
      _
    %p179 = scmp.le.s32.totalorder 1, %s9
    %p180 = scmp.lt.s32.totalorder %s9, 9
    %p181 = pnand %p179, %p180
    %p182 = pneg %p181
    // Predicated region
    $region29: #{malconv_forward.1} parent=5 // pred_check
      _
    $region30: #{malconv_forward.1} parent=5 // pred_check_branch
      %184 = sbr.rel (%p181) target = $region32
    $region31: #{malconv_forward.1} parent=5 // pred_region
      %s185 = ssub.s32 %s9, 1
      %s186 = smul.u32 %s19, 2
      %s187 = sadd.s32 %s186, %s21
      %p188 = scmp.lt.s32.totalorder %s187, 2
      %s189 = scalar_select %p188, %s187, 2
      %p190 = scmp.lt.s32.totalorder %s20, 1
      %s191 = scalar_select %p190, %s20, 1
      %p192 = scmp.lt.s32.totalorder %s189, 2
      %s193 = scalar_select %p192, %s189, 2
      %s194 = smul.addr %s193, 32
      %s195 = smul.addr %s191, 96
      %s196 = sadd.s32 %s194, %s195
      %s197 = smul.addr %s196, 4
      %s198 = scalar_lea.vmem %s0, %s197
      %p199 = pneg %p64
      %p200 = pneg %p61
      %p201 = pneg %p85
      %p202 = pneg %p82
      %p203 = pneg %p106
      %p204 = pneg %p103
      %p205 = pneg %p134
      %p206 = pneg %p131
      %p207 = scmp.lt.s32.totalorder %s19, 1
      %s208 = scalar_select %p207, %s19, 1
      %p209 = scmp.lt.s32.totalorder %s20, 1
      %s210 = scalar_select %p209, %s20, 1
      %s211 = smul.addr %s208, 2
      %s212 = sadd.s32 %s210, %s211
      %s213 = scalar_lea.vmem %s3, %s212
      %s214 = smul.u32 %s19, 2
      %s215 = sadd.s32 %s214, %s21
      %p216 = scmp.lt.s32.totalorder %s215, 2
      %s217 = scalar_select %p216, %s215, 2
      %p218 = scmp.lt.s32.totalorder %s20, 1
      %s219 = scalar_select %p218, %s20, 1
      %p220 = scmp.lt.s32.totalorder %s217, 2
      %s221 = scalar_select %p220, %s217, 2
      %s222 = smul.addr %s221, 32
      %s223 = smul.addr %s219, 96
      %s224 = sadd.s32 %s222, %s223
      %s225 = smul.addr %s224, 4
      %s226 = scalar_lea.vmem %s0, %s225
      %s227 = smul.u32 %s19, 2
      %s228 = sadd.s32 %s227, %s21
      %p229 = scmp.lt.s32.totalorder %s228, 2
      %s230 = scalar_select %p229, %s228, 2
      %p231 = scmp.lt.s32.totalorder %s19, 1
      %s232 = scalar_select %p231, %s19, 1
      %p233 = scmp.lt.s32.totalorder %s20, 1
      %s234 = scalar_select %p233, %s20, 1
      %s235 = smul.addr %s232, 2
      %s236 = sadd.s32 %s234, %s235
      %s237 = scalar_lea.vmem %s3, %s236
      %s239 = smul.u32 %s19, 2
      %s240 = sadd.s32 %s239, %s21
      %p241 = scmp.eq.s32.totalorder %s21, 0
      // Predicated region
      $region33: #{malconv_forward.1} parent=31 // pred_check
        %p242 = pneg %p241
      $region34: #{malconv_forward.1} parent=31 // pred_check_branch
        %244 = sbr.rel (%p242) target = $region36
      $region35: #{malconv_forward.1} parent=31 // pred_region
        %245 = vst [vmem:[%s237] sm:$0x1] 0.0
      $region36: #{malconv_forward.1} parent=31 // pred_fallthru
        _
      %v246 = vld [vmem:[%s226] sm:$0xff]
      %v247 = vld [vmem:[%s226 + $0x8] sm:$0xff]
      %v248 = vld [vmem:[%s226 + $0x10] sm:$0xff]
      %v249 = vld [vmem:[%s226 + $0x18] sm:$0xff]
      %v250 = vld [vmem:[%s226 + $0x20] sm:$0xff]
      %v251 = vld [vmem:[%s226 + $0x28] sm:$0xff]
      %v252 = vld [vmem:[%s226 + $0x30] sm:$0xff]
      %v253 = vld [vmem:[%s226 + $0x38] sm:$0xff]
      %v254 = vld [vmem:[%s226 + $0x40] sm:$0xff]
      %v255 = vld [vmem:[%s226 + $0x48] sm:$0xff]
      %v256 = vld [vmem:[%s226 + $0x50] sm:$0xff]
      %v257 = vld [vmem:[%s226 + $0x58] sm:$0xff]
      %v258 = vld [vmem:[%s226 + $0x60] sm:$0xff]
      %v259 = vld [vmem:[%s226 + $0x68] sm:$0xff]
      %v260 = vld [vmem:[%s226 + $0x70] sm:$0xff]
      %v261 = vld [vmem:[%s226 + $0x78] sm:$0xff]
      %v262 = vld [vmem:[%s1] sm:$0xff]
      %v263 = vld [vmem:[%s1 + $0x8] sm:$0xff]
      %v264 = vld [vmem:[%s1 + $0x10] sm:$0xff]
      %v265 = vld [vmem:[%s1 + $0x18] sm:$0xff]
      %v266 = vld [vmem:[%s1 + $0x20] sm:$0xff]
      %v267 = vld [vmem:[%s1 + $0x28] sm:$0xff]
      %v268 = vld [vmem:[%s1 + $0x30] sm:$0xff]
      %v269 = vld [vmem:[%s1 + $0x38] sm:$0xff]
      %v270 = vld [vmem:[%s1 + $0x40] sm:$0xff]
      %v271 = vld [vmem:[%s1 + $0x48] sm:$0xff]
      %v272 = vld [vmem:[%s1 + $0x50] sm:$0xff]
      %v273 = vld [vmem:[%s1 + $0x58] sm:$0xff]
      %v274 = vld [vmem:[%s1 + $0x60] sm:$0xff]
      %v275 = vld [vmem:[%s1 + $0x68] sm:$0xff]
      %v276 = vld [vmem:[%s1 + $0x70] sm:$0xff]
      %v277 = vld [vmem:[%s1 + $0x78] sm:$0xff]
      %v278 = vld [vmem:[%s1 + $0x80] sm:$0xff]
      %v279 = vld [vmem:[%s1 + $0x88] sm:$0xff]
      %v280 = vld [vmem:[%s1 + $0x90] sm:$0xff]
      %v281 = vld [vmem:[%s1 + $0x98] sm:$0xff]
      %v282 = vld [vmem:[%s1 + $0xa0] sm:$0xff]
      %v283 = vld [vmem:[%s1 + $0xa8] sm:$0xff]
      %v284 = vld [vmem:[%s1 + $0xb0] sm:$0xff]
      %v285 = vld [vmem:[%s1 + $0xb8] sm:$0xff]
      %v286 = vld [vmem:[%s1 + $0xc0] sm:$0xff]
      %v287 = vld [vmem:[%s1 + $0xc8] sm:$0xff]
      %v288 = vld [vmem:[%s1 + $0xd0] sm:$0xff]
      %v289 = vld [vmem:[%s1 + $0xd8] sm:$0xff]
      %v290 = vld [vmem:[%s1 + $0xe0] sm:$0xff]
      %v291 = vld [vmem:[%s1 + $0xe8] sm:$0xff]
      %v292 = vld [vmem:[%s1 + $0xf0] sm:$0xff]
      %v293 = vld [vmem:[%s1 + $0xf8] sm:$0xff]
      %v294 = vld [vmem:[%s1 + $0x100] sm:$0xff]
      %v295 = vld [vmem:[%s1 + $0x108] sm:$0xff]
      %v296 = vld [vmem:[%s1 + $0x110] sm:$0xff]
      %v297 = vld [vmem:[%s1 + $0x118] sm:$0xff]
      %v298 = vld [vmem:[%s1 + $0x120] sm:$0xff]
      %v299 = vld [vmem:[%s1 + $0x128] sm:$0xff]
      %v300 = vld [vmem:[%s1 + $0x130] sm:$0xff]
      %v301 = vld [vmem:[%s1 + $0x138] sm:$0xff]
      %v302 = vld [vmem:[%s1 + $0x140] sm:$0xff]
      %v303 = vld [vmem:[%s1 + $0x148] sm:$0xff]
      %v304 = vld [vmem:[%s1 + $0x150] sm:$0xff]
      %v305 = vld [vmem:[%s1 + $0x158] sm:$0xff]
      %v306 = vld [vmem:[%s1 + $0x160] sm:$0xff]
      %v307 = vld [vmem:[%s1 + $0x168] sm:$0xff]
      %v308 = vld [vmem:[%s1 + $0x170] sm:$0xff]
      %v309 = vld [vmem:[%s1 + $0x178] sm:$0xff]
      %v310 = vld [vmem:[%s1 + $0x180] sm:$0xff]
      %v311 = vld [vmem:[%s1 + $0x188] sm:$0xff]
      %v312 = vld [vmem:[%s1 + $0x190] sm:$0xff]
      %v313 = vld [vmem:[%s1 + $0x198] sm:$0xff]
      %v314 = vld [vmem:[%s1 + $0x1a0] sm:$0xff]
      %v315 = vld [vmem:[%s1 + $0x1a8] sm:$0xff]
      %v316 = vld [vmem:[%s1 + $0x1b0] sm:$0xff]
      %v317 = vld [vmem:[%s1 + $0x1b8] sm:$0xff]
      %v318 = vld [vmem:[%s1 + $0x1c0] sm:$0xff]
      %v319 = vld [vmem:[%s1 + $0x1c8] sm:$0xff]
      %v320 = vld [vmem:[%s1 + $0x1d0] sm:$0xff]
      %v321 = vld [vmem:[%s1 + $0x1d8] sm:$0xff]
      %v322 = vld [vmem:[%s1 + $0x1e0] sm:$0xff]
      %v323 = vld [vmem:[%s1 + $0x1e8] sm:$0xff]
      %v324 = vld [vmem:[%s1 + $0x1f0] sm:$0xff]
      %v325 = vld [vmem:[%s1 + $0x1f8] sm:$0xff]
      %v326 = vld [vmem:[%s1 + $0x200] sm:$0xff]
      %v327 = vld [vmem:[%s1 + $0x208] sm:$0xff]
      %v328 = vld [vmem:[%s1 + $0x210] sm:$0xff]
      %v329 = vld [vmem:[%s1 + $0x218] sm:$0xff]
      %v330 = vld [vmem:[%s1 + $0x220] sm:$0xff]
      %v331 = vld [vmem:[%s1 + $0x228] sm:$0xff]
      %v332 = vld [vmem:[%s1 + $0x230] sm:$0xff]
      %v333 = vld [vmem:[%s1 + $0x238] sm:$0xff]
      %v334 = vld [vmem:[%s1 + $0x240] sm:$0xff]
      %v335 = vld [vmem:[%s1 + $0x248] sm:$0xff]
      %v336 = vld [vmem:[%s1 + $0x250] sm:$0xff]
      %v337 = vld [vmem:[%s1 + $0x258] sm:$0xff]
      %v338 = vld [vmem:[%s1 + $0x260] sm:$0xff]
      %v339 = vld [vmem:[%s1 + $0x268] sm:$0xff]
      %v340 = vld [vmem:[%s1 + $0x270] sm:$0xff]
      %v341 = vld [vmem:[%s1 + $0x278] sm:$0xff]
      %v342 = vld [vmem:[%s1 + $0x280] sm:$0xff]
      %v343 = vld [vmem:[%s1 + $0x288] sm:$0xff]
      %v344 = vld [vmem:[%s1 + $0x290] sm:$0xff]
      %v345 = vld [vmem:[%s1 + $0x298] sm:$0xff]
      %v346 = vld [vmem:[%s1 + $0x2a0] sm:$0xff]
      %v347 = vld [vmem:[%s1 + $0x2a8] sm:$0xff]
      %v348 = vld [vmem:[%s1 + $0x2b0] sm:$0xff]
      %v349 = vld [vmem:[%s1 + $0x2b8] sm:$0xff]
      %v350 = vld [vmem:[%s1 + $0x2c0] sm:$0xff]
      %v351 = vld [vmem:[%s1 + $0x2c8] sm:$0xff]
      %v352 = vld [vmem:[%s1 + $0x2d0] sm:$0xff]
      %v353 = vld [vmem:[%s1 + $0x2d8] sm:$0xff]
      %v354 = vld [vmem:[%s1 + $0x2e0] sm:$0xff]
      %v355 = vld [vmem:[%s1 + $0x2e8] sm:$0xff]
      %v356 = vld [vmem:[%s1 + $0x2f0] sm:$0xff]
      %v357 = vld [vmem:[%s1 + $0x2f8] sm:$0xff]
      %v358 = vld [vmem:[%s1 + $0x300] sm:$0xff]
      %v359 = vld [vmem:[%s1 + $0x308] sm:$0xff]
      %v360 = vld [vmem:[%s1 + $0x310] sm:$0xff]
      %v361 = vld [vmem:[%s1 + $0x318] sm:$0xff]
      %v362 = vld [vmem:[%s1 + $0x320] sm:$0xff]
      %v363 = vld [vmem:[%s1 + $0x328] sm:$0xff]
      %v364 = vld [vmem:[%s1 + $0x330] sm:$0xff]
      %v365 = vld [vmem:[%s1 + $0x338] sm:$0xff]
      %v366 = vld [vmem:[%s1 + $0x340] sm:$0xff]
      %v367 = vld [vmem:[%s1 + $0x348] sm:$0xff]
      %v368 = vld [vmem:[%s1 + $0x350] sm:$0xff]
      %v369 = vld [vmem:[%s1 + $0x358] sm:$0xff]
      %v370 = vld [vmem:[%s1 + $0x360] sm:$0xff]
      %v371 = vld [vmem:[%s1 + $0x368] sm:$0xff]
      %v372 = vld [vmem:[%s1 + $0x370] sm:$0xff]
      %v373 = vld [vmem:[%s1 + $0x378] sm:$0xff]
      %v374 = vld [vmem:[%s1 + $0x380] sm:$0xff]
      %v375 = vld [vmem:[%s1 + $0x388] sm:$0xff]
      %v376 = vld [vmem:[%s1 + $0x390] sm:$0xff]
      %v377 = vld [vmem:[%s1 + $0x398] sm:$0xff]
      %v378 = vld [vmem:[%s1 + $0x3a0] sm:$0xff]
      %v379 = vld [vmem:[%s1 + $0x3a8] sm:$0xff]
      %v380 = vld [vmem:[%s1 + $0x3b0] sm:$0xff]
      %v381 = vld [vmem:[%s1 + $0x3b8] sm:$0xff]
      %v382 = vld [vmem:[%s1 + $0x3c0] sm:$0xff]
      %v383 = vld [vmem:[%s1 + $0x3c8] sm:$0xff]
      %v384 = vld [vmem:[%s1 + $0x3d0] sm:$0xff]
      %v385 = vld [vmem:[%s1 + $0x3d8] sm:$0xff]
      %v386 = vld [vmem:[%s1 + $0x3e0] sm:$0xff]
      %v387 = vld [vmem:[%s1 + $0x3e8] sm:$0xff]
      %v388 = vld [vmem:[%s1 + $0x3f0] sm:$0xff]
      %v389 = vld [vmem:[%s1 + $0x3f8] sm:$0xff]
      %v390 = vld [vmem:[%s1 + $0x400] sm:$0xff]
      %v391 = vld [vmem:[%s1 + $0x408] sm:$0xff]
      %v392 = vld [vmem:[%s1 + $0x410] sm:$0xff]
      %v393 = vld [vmem:[%s1 + $0x418] sm:$0xff]
      %v394 = vld [vmem:[%s1 + $0x420] sm:$0xff]
      %v395 = vld [vmem:[%s1 + $0x428] sm:$0xff]
      %v396 = vld [vmem:[%s1 + $0x430] sm:$0xff]
      %v397 = vld [vmem:[%s1 + $0x438] sm:$0xff]
      %v398 = vld [vmem:[%s1 + $0x440] sm:$0xff]
      %v399 = vld [vmem:[%s1 + $0x448] sm:$0xff]
      %v400 = vld [vmem:[%s1 + $0x450] sm:$0xff]
      %v401 = vld [vmem:[%s1 + $0x458] sm:$0xff]
      %v402 = vld [vmem:[%s1 + $0x460] sm:$0xff]
      %v403 = vld [vmem:[%s1 + $0x468] sm:$0xff]
      %v404 = vld [vmem:[%s1 + $0x470] sm:$0xff]
      %v405 = vld [vmem:[%s1 + $0x478] sm:$0xff]
      %v406 = vld [vmem:[%s1 + $0x480] sm:$0xff]
      %v407 = vld [vmem:[%s1 + $0x488] sm:$0xff]
      %v408 = vld [vmem:[%s1 + $0x490] sm:$0xff]
      %v409 = vld [vmem:[%s1 + $0x498] sm:$0xff]
      %v410 = vld [vmem:[%s1 + $0x4a0] sm:$0xff]
      %v411 = vld [vmem:[%s1 + $0x4a8] sm:$0xff]
      %v412 = vld [vmem:[%s1 + $0x4b0] sm:$0xff]
      %v413 = vld [vmem:[%s1 + $0x4b8] sm:$0xff]
      %v414 = vld [vmem:[%s1 + $0x4c0] sm:$0xff]
      %v415 = vld [vmem:[%s1 + $0x4c8] sm:$0xff]
      %v416 = vld [vmem:[%s1 + $0x4d0] sm:$0xff]
      %v417 = vld [vmem:[%s1 + $0x4d8] sm:$0xff]
      %v418 = vld [vmem:[%s1 + $0x4e0] sm:$0xff]
      %v419 = vld [vmem:[%s1 + $0x4e8] sm:$0xff]
      %v420 = vld [vmem:[%s1 + $0x4f0] sm:$0xff]
      %v421 = vld [vmem:[%s1 + $0x4f8] sm:$0xff]
      %v422 = vld [vmem:[%s1 + $0x500] sm:$0xff]
      %v423 = vld [vmem:[%s1 + $0x508] sm:$0xff]
      %v424 = vld [vmem:[%s1 + $0x510] sm:$0xff]
      %v425 = vld [vmem:[%s1 + $0x518] sm:$0xff]
      %v426 = vld [vmem:[%s1 + $0x520] sm:$0xff]
      %v427 = vld [vmem:[%s1 + $0x528] sm:$0xff]
      %v428 = vld [vmem:[%s1 + $0x530] sm:$0xff]
      %v429 = vld [vmem:[%s1 + $0x538] sm:$0xff]
      %v430 = vld [vmem:[%s1 + $0x540] sm:$0xff]
      %v431 = vld [vmem:[%s1 + $0x548] sm:$0xff]
      %v432 = vld [vmem:[%s1 + $0x550] sm:$0xff]
      %v433 = vld [vmem:[%s1 + $0x558] sm:$0xff]
      %v434 = vld [vmem:[%s1 + $0x560] sm:$0xff]
      %v435 = vld [vmem:[%s1 + $0x568] sm:$0xff]
      %v436 = vld [vmem:[%s1 + $0x570] sm:$0xff]
      %v437 = vld [vmem:[%s1 + $0x578] sm:$0xff]
      %v438 = vld [vmem:[%s1 + $0x580] sm:$0xff]
      %v439 = vld [vmem:[%s1 + $0x588] sm:$0xff]
      %v440 = vld [vmem:[%s1 + $0x590] sm:$0xff]
      %v441 = vld [vmem:[%s1 + $0x598] sm:$0xff]
      %v442 = vld [vmem:[%s1 + $0x5a0] sm:$0xff]
      %v443 = vld [vmem:[%s1 + $0x5a8] sm:$0xff]
      %v444 = vld [vmem:[%s1 + $0x5b0] sm:$0xff]
      %v445 = vld [vmem:[%s1 + $0x5b8] sm:$0xff]
      %v446 = vld [vmem:[%s1 + $0x5c0] sm:$0xff]
      %v447 = vld [vmem:[%s1 + $0x5c8] sm:$0xff]
      %v448 = vld [vmem:[%s1 + $0x5d0] sm:$0xff]
      %v449 = vld [vmem:[%s1 + $0x5d8] sm:$0xff]
      %v450 = vld [vmem:[%s1 + $0x5e0] sm:$0xff]
      %v451 = vld [vmem:[%s1 + $0x5e8] sm:$0xff]
      %v452 = vld [vmem:[%s1 + $0x5f0] sm:$0xff]
      %v453 = vld [vmem:[%s1 + $0x5f8] sm:$0xff]
      %v454 = vld [vmem:[%s1 + $0x600] sm:$0xff]
      %v455 = vld [vmem:[%s1 + $0x608] sm:$0xff]
      %v456 = vld [vmem:[%s1 + $0x610] sm:$0xff]
      %v457 = vld [vmem:[%s1 + $0x618] sm:$0xff]
      %v458 = vld [vmem:[%s1 + $0x620] sm:$0xff]
      %v459 = vld [vmem:[%s1 + $0x628] sm:$0xff]
      %v460 = vld [vmem:[%s1 + $0x630] sm:$0xff]
      %v461 = vld [vmem:[%s1 + $0x638] sm:$0xff]
      %v462 = vld [vmem:[%s1 + $0x640] sm:$0xff]
      %v463 = vld [vmem:[%s1 + $0x648] sm:$0xff]
      %v464 = vld [vmem:[%s1 + $0x650] sm:$0xff]
      %v465 = vld [vmem:[%s1 + $0x658] sm:$0xff]
      %v466 = vld [vmem:[%s1 + $0x660] sm:$0xff]
      %v467 = vld [vmem:[%s1 + $0x668] sm:$0xff]
      %v468 = vld [vmem:[%s1 + $0x670] sm:$0xff]
      %v469 = vld [vmem:[%s1 + $0x678] sm:$0xff]
      %v470 = vld [vmem:[%s1 + $0x680] sm:$0xff]
      %v471 = vld [vmem:[%s1 + $0x688] sm:$0xff]
      %v472 = vld [vmem:[%s1 + $0x690] sm:$0xff]
      %v473 = vld [vmem:[%s1 + $0x698] sm:$0xff]
      %v474 = vld [vmem:[%s1 + $0x6a0] sm:$0xff]
      %v475 = vld [vmem:[%s1 + $0x6a8] sm:$0xff]
      %v476 = vld [vmem:[%s1 + $0x6b0] sm:$0xff]
      %v477 = vld [vmem:[%s1 + $0x6b8] sm:$0xff]
      %v478 = vld [vmem:[%s1 + $0x6c0] sm:$0xff]
      %v479 = vld [vmem:[%s1 + $0x6c8] sm:$0xff]
      %v480 = vld [vmem:[%s1 + $0x6d0] sm:$0xff]
      %v481 = vld [vmem:[%s1 + $0x6d8] sm:$0xff]
      %v482 = vld [vmem:[%s1 + $0x6e0] sm:$0xff]
      %v483 = vld [vmem:[%s1 + $0x6e8] sm:$0xff]
      %v484 = vld [vmem:[%s1 + $0x6f0] sm:$0xff]
      %v485 = vld [vmem:[%s1 + $0x6f8] sm:$0xff]
      %v486 = vld [vmem:[%s1 + $0x700] sm:$0xff]
      %v487 = vld [vmem:[%s1 + $0x708] sm:$0xff]
      %v488 = vld [vmem:[%s1 + $0x710] sm:$0xff]
      %v489 = vld [vmem:[%s1 + $0x718] sm:$0xff]
      %v490 = vld [vmem:[%s1 + $0x720] sm:$0xff]
      %v491 = vld [vmem:[%s1 + $0x728] sm:$0xff]
      %v492 = vld [vmem:[%s1 + $0x730] sm:$0xff]
      %v493 = vld [vmem:[%s1 + $0x738] sm:$0xff]
      %v494 = vld [vmem:[%s1 + $0x740] sm:$0xff]
      %v495 = vld [vmem:[%s1 + $0x748] sm:$0xff]
      %v496 = vld [vmem:[%s1 + $0x750] sm:$0xff]
      %v497 = vld [vmem:[%s1 + $0x758] sm:$0xff]
      %v498 = vld [vmem:[%s1 + $0x760] sm:$0xff]
      %v499 = vld [vmem:[%s1 + $0x768] sm:$0xff]
      %v500 = vld [vmem:[%s1 + $0x770] sm:$0xff]
      %v501 = vld [vmem:[%s1 + $0x778] sm:$0xff]
      %v502 = vld [vmem:[%s1 + $0x780] sm:$0xff]
      %v503 = vld [vmem:[%s1 + $0x788] sm:$0xff]
      %v504 = vld [vmem:[%s1 + $0x790] sm:$0xff]
      %v505 = vld [vmem:[%s1 + $0x798] sm:$0xff]
      %v506 = vld [vmem:[%s1 + $0x7a0] sm:$0xff]
      %v507 = vld [vmem:[%s1 + $0x7a8] sm:$0xff]
      %v508 = vld [vmem:[%s1 + $0x7b0] sm:$0xff]
      %v509 = vld [vmem:[%s1 + $0x7b8] sm:$0xff]
      %v510 = vld [vmem:[%s1 + $0x7c0] sm:$0xff]
      %v511 = vld [vmem:[%s1 + $0x7c8] sm:$0xff]
      %v512 = vld [vmem:[%s1 + $0x7d0] sm:$0xff]
      %v513 = vld [vmem:[%s1 + $0x7d8] sm:$0xff]
      %v514 = vld [vmem:[%s1 + $0x7e0] sm:$0xff]
      %v515 = vld [vmem:[%s1 + $0x7e8] sm:$0xff]
      %v516 = vld [vmem:[%s1 + $0x7f0] sm:$0xff]
      %v517 = vld [vmem:[%s1 + $0x7f8] sm:$0xff]
      %v518 = vld [vmem:[%s1 + $0x800] sm:$0xff]
      %v519 = vld [vmem:[%s1 + $0x808] sm:$0xff]
      %v520 = vld [vmem:[%s1 + $0x810] sm:$0xff]
      %v521 = vld [vmem:[%s1 + $0x818] sm:$0xff]
      %v522 = vld [vmem:[%s1 + $0x820] sm:$0xff]
      %v523 = vld [vmem:[%s1 + $0x828] sm:$0xff]
      %v524 = vld [vmem:[%s1 + $0x830] sm:$0xff]
      %v525 = vld [vmem:[%s1 + $0x838] sm:$0xff]
      %v526 = vld [vmem:[%s1 + $0x840] sm:$0xff]
      %v527 = vld [vmem:[%s1 + $0x848] sm:$0xff]
      %v528 = vld [vmem:[%s1 + $0x850] sm:$0xff]
      %v529 = vld [vmem:[%s1 + $0x858] sm:$0xff]
      %v530 = vld [vmem:[%s1 + $0x860] sm:$0xff]
      %v531 = vld [vmem:[%s1 + $0x868] sm:$0xff]
      %v532 = vld [vmem:[%s1 + $0x870] sm:$0xff]
      %v533 = vld [vmem:[%s1 + $0x878] sm:$0xff]
      %v534 = vld [vmem:[%s1 + $0x880] sm:$0xff]
      %v535 = vld [vmem:[%s1 + $0x888] sm:$0xff]
      %v536 = vld [vmem:[%s1 + $0x890] sm:$0xff]
      %v537 = vld [vmem:[%s1 + $0x898] sm:$0xff]
      %v538 = vld [vmem:[%s1 + $0x8a0] sm:$0xff]
      %v539 = vld [vmem:[%s1 + $0x8a8] sm:$0xff]
      %v540 = vld [vmem:[%s1 + $0x8b0] sm:$0xff]
      %v541 = vld [vmem:[%s1 + $0x8b8] sm:$0xff]
      %v542 = vld [vmem:[%s1 + $0x8c0] sm:$0xff]
      %v543 = vld [vmem:[%s1 + $0x8c8] sm:$0xff]
      %v544 = vld [vmem:[%s1 + $0x8d0] sm:$0xff]
      %v545 = vld [vmem:[%s1 + $0x8d8] sm:$0xff]
      %v546 = vld [vmem:[%s1 + $0x8e0] sm:$0xff]
      %v547 = vld [vmem:[%s1 + $0x8e8] sm:$0xff]
      %v548 = vld [vmem:[%s1 + $0x8f0] sm:$0xff]
      %v549 = vld [vmem:[%s1 + $0x8f8] sm:$0xff]
      %v550 = vld [vmem:[%s1 + $0x900] sm:$0xff]
      %v551 = vld [vmem:[%s1 + $0x908] sm:$0xff]
      %v552 = vld [vmem:[%s1 + $0x910] sm:$0xff]
      %v553 = vld [vmem:[%s1 + $0x918] sm:$0xff]
      %v554 = vld [vmem:[%s1 + $0x920] sm:$0xff]
      %v555 = vld [vmem:[%s1 + $0x928] sm:$0xff]
      %v556 = vld [vmem:[%s1 + $0x930] sm:$0xff]
      %v557 = vld [vmem:[%s1 + $0x938] sm:$0xff]
      %v558 = vld [vmem:[%s1 + $0x940] sm:$0xff]
      %v559 = vld [vmem:[%s1 + $0x948] sm:$0xff]
      %v560 = vld [vmem:[%s1 + $0x950] sm:$0xff]
      %v561 = vld [vmem:[%s1 + $0x958] sm:$0xff]
      %v562 = vld [vmem:[%s1 + $0x960] sm:$0xff]
      %v563 = vld [vmem:[%s1 + $0x968] sm:$0xff]
      %v564 = vld [vmem:[%s1 + $0x970] sm:$0xff]
      %v565 = vld [vmem:[%s1 + $0x978] sm:$0xff]
      %v566 = vld [vmem:[%s1 + $0x980] sm:$0xff]
      %v567 = vld [vmem:[%s1 + $0x988] sm:$0xff]
      %v568 = vld [vmem:[%s1 + $0x990] sm:$0xff]
      %v569 = vld [vmem:[%s1 + $0x998] sm:$0xff]
      %v570 = vld [vmem:[%s1 + $0x9a0] sm:$0xff]
      %v571 = vld [vmem:[%s1 + $0x9a8] sm:$0xff]
      %v572 = vld [vmem:[%s1 + $0x9b0] sm:$0xff]
      %v573 = vld [vmem:[%s1 + $0x9b8] sm:$0xff]
      %v574 = vld [vmem:[%s1 + $0x9c0] sm:$0xff]
      %v575 = vld [vmem:[%s1 + $0x9c8] sm:$0xff]
      %v576 = vld [vmem:[%s1 + $0x9d0] sm:$0xff]
      %v577 = vld [vmem:[%s1 + $0x9d8] sm:$0xff]
      %v578 = vld [vmem:[%s1 + $0x9e0] sm:$0xff]
      %v579 = vld [vmem:[%s1 + $0x9e8] sm:$0xff]
      %v580 = vld [vmem:[%s1 + $0x9f0] sm:$0xff]
      %v581 = vld [vmem:[%s1 + $0x9f8] sm:$0xff]
      %v582 = vld [vmem:[%s1 + $0xa00] sm:$0xff]
      %v583 = vld [vmem:[%s1 + $0xa08] sm:$0xff]
      %v584 = vld [vmem:[%s1 + $0xa10] sm:$0xff]
      %v585 = vld [vmem:[%s1 + $0xa18] sm:$0xff]
      %v586 = vld [vmem:[%s1 + $0xa20] sm:$0xff]
      %v587 = vld [vmem:[%s1 + $0xa28] sm:$0xff]
      %v588 = vld [vmem:[%s1 + $0xa30] sm:$0xff]
      %v589 = vld [vmem:[%s1 + $0xa38] sm:$0xff]
      %v590 = vld [vmem:[%s1 + $0xa40] sm:$0xff]
      %v591 = vld [vmem:[%s1 + $0xa48] sm:$0xff]
      %v592 = vld [vmem:[%s1 + $0xa50] sm:$0xff]
      %v593 = vld [vmem:[%s1 + $0xa58] sm:$0xff]
      %v594 = vld [vmem:[%s1 + $0xa60] sm:$0xff]
      %v595 = vld [vmem:[%s1 + $0xa68] sm:$0xff]
      %v596 = vld [vmem:[%s1 + $0xa70] sm:$0xff]
      %v597 = vld [vmem:[%s1 + $0xa78] sm:$0xff]
      %v598 = vld [vmem:[%s1 + $0xa80] sm:$0xff]
      %v599 = vld [vmem:[%s1 + $0xa88] sm:$0xff]
      %v600 = vld [vmem:[%s1 + $0xa90] sm:$0xff]
      %v601 = vld [vmem:[%s1 + $0xa98] sm:$0xff]
      %v602 = vld [vmem:[%s1 + $0xaa0] sm:$0xff]
      %v603 = vld [vmem:[%s1 + $0xaa8] sm:$0xff]
      %v604 = vld [vmem:[%s1 + $0xab0] sm:$0xff]
      %v605 = vld [vmem:[%s1 + $0xab8] sm:$0xff]
      %v606 = vld [vmem:[%s1 + $0xac0] sm:$0xff]
      %v607 = vld [vmem:[%s1 + $0xac8] sm:$0xff]
      %v608 = vld [vmem:[%s1 + $0xad0] sm:$0xff]
      %v609 = vld [vmem:[%s1 + $0xad8] sm:$0xff]
      %v610 = vld [vmem:[%s1 + $0xae0] sm:$0xff]
      %v611 = vld [vmem:[%s1 + $0xae8] sm:$0xff]
      %v612 = vld [vmem:[%s1 + $0xaf0] sm:$0xff]
      %v613 = vld [vmem:[%s1 + $0xaf8] sm:$0xff]
      %v614 = vld [vmem:[%s1 + $0xb00] sm:$0xff]
      %v615 = vld [vmem:[%s1 + $0xb08] sm:$0xff]
      %v616 = vld [vmem:[%s1 + $0xb10] sm:$0xff]
      %v617 = vld [vmem:[%s1 + $0xb18] sm:$0xff]
      %v618 = vld [vmem:[%s1 + $0xb20] sm:$0xff]
      %v619 = vld [vmem:[%s1 + $0xb28] sm:$0xff]
      %v620 = vld [vmem:[%s1 + $0xb30] sm:$0xff]
      %v621 = vld [vmem:[%s1 + $0xb38] sm:$0xff]
      %v622 = vld [vmem:[%s1 + $0xb40] sm:$0xff]
      %v623 = vld [vmem:[%s1 + $0xb48] sm:$0xff]
      %v624 = vld [vmem:[%s1 + $0xb50] sm:$0xff]
      %v625 = vld [vmem:[%s1 + $0xb58] sm:$0xff]
      %v626 = vld [vmem:[%s1 + $0xb60] sm:$0xff]
      %v627 = vld [vmem:[%s1 + $0xb68] sm:$0xff]
      %v628 = vld [vmem:[%s1 + $0xb70] sm:$0xff]
      %v629 = vld [vmem:[%s1 + $0xb78] sm:$0xff]
      %v630 = vld [vmem:[%s1 + $0xb80] sm:$0xff]
      %v631 = vld [vmem:[%s1 + $0xb88] sm:$0xff]
      %v632 = vld [vmem:[%s1 + $0xb90] sm:$0xff]
      %v633 = vld [vmem:[%s1 + $0xb98] sm:$0xff]
      %v634 = vld [vmem:[%s1 + $0xba0] sm:$0xff]
      %v635 = vld [vmem:[%s1 + $0xba8] sm:$0xff]
      %v636 = vld [vmem:[%s1 + $0xbb0] sm:$0xff]
      %v637 = vld [vmem:[%s1 + $0xbb8] sm:$0xff]
      %v638 = vld [vmem:[%s1 + $0xbc0] sm:$0xff]
      %v639 = vld [vmem:[%s1 + $0xbc8] sm:$0xff]
      %v640 = vld [vmem:[%s1 + $0xbd0] sm:$0xff]
      %v641 = vld [vmem:[%s1 + $0xbd8] sm:$0xff]
      %v642 = vld [vmem:[%s1 + $0xbe0] sm:$0xff]
      %v643 = vld [vmem:[%s1 + $0xbe8] sm:$0xff]
      %v644 = vld [vmem:[%s1 + $0xbf0] sm:$0xff]
      %v645 = vld [vmem:[%s1 + $0xbf8] sm:$0xff]
      %v646 = vld [vmem:[%s1 + $0xc00] sm:$0xff]
      %v647 = vld [vmem:[%s1 + $0xc08] sm:$0xff]
      %v648 = vld [vmem:[%s1 + $0xc10] sm:$0xff]
      %v649 = vld [vmem:[%s1 + $0xc18] sm:$0xff]
      %v650 = vld [vmem:[%s1 + $0xc20] sm:$0xff]
      %v651 = vld [vmem:[%s1 + $0xc28] sm:$0xff]
      %v652 = vld [vmem:[%s1 + $0xc30] sm:$0xff]
      %v653 = vld [vmem:[%s1 + $0xc38] sm:$0xff]
      %v654 = vld [vmem:[%s1 + $0xc40] sm:$0xff]
      %v655 = vld [vmem:[%s1 + $0xc48] sm:$0xff]
      %v656 = vld [vmem:[%s1 + $0xc50] sm:$0xff]
      %v657 = vld [vmem:[%s1 + $0xc58] sm:$0xff]
      %v658 = vld [vmem:[%s1 + $0xc60] sm:$0xff]
      %v659 = vld [vmem:[%s1 + $0xc68] sm:$0xff]
      %v660 = vld [vmem:[%s1 + $0xc70] sm:$0xff]
      %v661 = vld [vmem:[%s1 + $0xc78] sm:$0xff]
      %v662 = vld [vmem:[%s1 + $0xc80] sm:$0xff]
      %v663 = vld [vmem:[%s1 + $0xc88] sm:$0xff]
      %v664 = vld [vmem:[%s1 + $0xc90] sm:$0xff]
      %v665 = vld [vmem:[%s1 + $0xc98] sm:$0xff]
      %v666 = vld [vmem:[%s1 + $0xca0] sm:$0xff]
      %v667 = vld [vmem:[%s1 + $0xca8] sm:$0xff]
      %v668 = vld [vmem:[%s1 + $0xcb0] sm:$0xff]
      %v669 = vld [vmem:[%s1 + $0xcb8] sm:$0xff]
      %v670 = vld [vmem:[%s1 + $0xcc0] sm:$0xff]
      %v671 = vld [vmem:[%s1 + $0xcc8] sm:$0xff]
      %v672 = vld [vmem:[%s1 + $0xcd0] sm:$0xff]
      %v673 = vld [vmem:[%s1 + $0xcd8] sm:$0xff]
      %v674 = vld [vmem:[%s1 + $0xce0] sm:$0xff]
      %v675 = vld [vmem:[%s1 + $0xce8] sm:$0xff]
      %v676 = vld [vmem:[%s1 + $0xcf0] sm:$0xff]
      %v677 = vld [vmem:[%s1 + $0xcf8] sm:$0xff]
      %v678 = vld [vmem:[%s1 + $0xd00] sm:$0xff]
      %v679 = vld [vmem:[%s1 + $0xd08] sm:$0xff]
      %v680 = vld [vmem:[%s1 + $0xd10] sm:$0xff]
      %v681 = vld [vmem:[%s1 + $0xd18] sm:$0xff]
      %v682 = vld [vmem:[%s1 + $0xd20] sm:$0xff]
      %v683 = vld [vmem:[%s1 + $0xd28] sm:$0xff]
      %v684 = vld [vmem:[%s1 + $0xd30] sm:$0xff]
      %v685 = vld [vmem:[%s1 + $0xd38] sm:$0xff]
      %v686 = vld [vmem:[%s1 + $0xd40] sm:$0xff]
      %v687 = vld [vmem:[%s1 + $0xd48] sm:$0xff]
      %v688 = vld [vmem:[%s1 + $0xd50] sm:$0xff]
      %v689 = vld [vmem:[%s1 + $0xd58] sm:$0xff]
      %v690 = vld [vmem:[%s1 + $0xd60] sm:$0xff]
      %v691 = vld [vmem:[%s1 + $0xd68] sm:$0xff]
      %v692 = vld [vmem:[%s1 + $0xd70] sm:$0xff]
      %v693 = vld [vmem:[%s1 + $0xd78] sm:$0xff]
      %v694 = vld [vmem:[%s1 + $0xd80] sm:$0xff]
      %v695 = vld [vmem:[%s1 + $0xd88] sm:$0xff]
      %v696 = vld [vmem:[%s1 + $0xd90] sm:$0xff]
      %v697 = vld [vmem:[%s1 + $0xd98] sm:$0xff]
      %v698 = vld [vmem:[%s1 + $0xda0] sm:$0xff]
      %v699 = vld [vmem:[%s1 + $0xda8] sm:$0xff]
      %v700 = vld [vmem:[%s1 + $0xdb0] sm:$0xff]
      %v701 = vld [vmem:[%s1 + $0xdb8] sm:$0xff]
      %v702 = vld [vmem:[%s1 + $0xdc0] sm:$0xff]
      %v703 = vld [vmem:[%s1 + $0xdc8] sm:$0xff]
      %v704 = vld [vmem:[%s1 + $0xdd0] sm:$0xff]
      %v705 = vld [vmem:[%s1 + $0xdd8] sm:$0xff]
      %v706 = vld [vmem:[%s1 + $0xde0] sm:$0xff]
      %v707 = vld [vmem:[%s1 + $0xde8] sm:$0xff]
      %v708 = vld [vmem:[%s1 + $0xdf0] sm:$0xff]
      %v709 = vld [vmem:[%s1 + $0xdf8] sm:$0xff]
      %v710 = vld [vmem:[%s1 + $0xe00] sm:$0xff]
      %v711 = vld [vmem:[%s1 + $0xe08] sm:$0xff]
      %v712 = vld [vmem:[%s1 + $0xe10] sm:$0xff]
      %v713 = vld [vmem:[%s1 + $0xe18] sm:$0xff]
      %v714 = vld [vmem:[%s1 + $0xe20] sm:$0xff]
      %v715 = vld [vmem:[%s1 + $0xe28] sm:$0xff]
      %v716 = vld [vmem:[%s1 + $0xe30] sm:$0xff]
      %v717 = vld [vmem:[%s1 + $0xe38] sm:$0xff]
      %v718 = vld [vmem:[%s1 + $0xe40] sm:$0xff]
      %v719 = vld [vmem:[%s1 + $0xe48] sm:$0xff]
      %v720 = vld [vmem:[%s1 + $0xe50] sm:$0xff]
      %v721 = vld [vmem:[%s1 + $0xe58] sm:$0xff]
      %v722 = vld [vmem:[%s1 + $0xe60] sm:$0xff]
      %v723 = vld [vmem:[%s1 + $0xe68] sm:$0xff]
      %v724 = vld [vmem:[%s1 + $0xe70] sm:$0xff]
      %v725 = vld [vmem:[%s1 + $0xe78] sm:$0xff]
      %v726 = vld [vmem:[%s1 + $0xe80] sm:$0xff]
      %v727 = vld [vmem:[%s1 + $0xe88] sm:$0xff]
      %v728 = vld [vmem:[%s1 + $0xe90] sm:$0xff]
      %v729 = vld [vmem:[%s1 + $0xe98] sm:$0xff]
      %v730 = vld [vmem:[%s1 + $0xea0] sm:$0xff]
      %v731 = vld [vmem:[%s1 + $0xea8] sm:$0xff]
      %v732 = vld [vmem:[%s1 + $0xeb0] sm:$0xff]
      %v733 = vld [vmem:[%s1 + $0xeb8] sm:$0xff]
      %v734 = vld [vmem:[%s1 + $0xec0] sm:$0xff]
      %v735 = vld [vmem:[%s1 + $0xec8] sm:$0xff]
      %v736 = vld [vmem:[%s1 + $0xed0] sm:$0xff]
      %v737 = vld [vmem:[%s1 + $0xed8] sm:$0xff]
      %v738 = vld [vmem:[%s1 + $0xee0] sm:$0xff]
      %v739 = vld [vmem:[%s1 + $0xee8] sm:$0xff]
      %v740 = vld [vmem:[%s1 + $0xef0] sm:$0xff]
      %v741 = vld [vmem:[%s1 + $0xef8] sm:$0xff]
      %v742 = vld [vmem:[%s1 + $0xf00] sm:$0xff]
      %v743 = vld [vmem:[%s1 + $0xf08] sm:$0xff]
      %v744 = vld [vmem:[%s1 + $0xf10] sm:$0xff]
      %v745 = vld [vmem:[%s1 + $0xf18] sm:$0xff]
      %v746 = vld [vmem:[%s1 + $0xf20] sm:$0xff]
      %v747 = vld [vmem:[%s1 + $0xf28] sm:$0xff]
      %v748 = vld [vmem:[%s1 + $0xf30] sm:$0xff]
      %v749 = vld [vmem:[%s1 + $0xf38] sm:$0xff]
      %v750 = vld [vmem:[%s1 + $0xf40] sm:$0xff]
      %v751 = vld [vmem:[%s1 + $0xf48] sm:$0xff]
      %v752 = vld [vmem:[%s1 + $0xf50] sm:$0xff]
      %v753 = vld [vmem:[%s1 + $0xf58] sm:$0xff]
      %v754 = vld [vmem:[%s1 + $0xf60] sm:$0xff]
      %v755 = vld [vmem:[%s1 + $0xf68] sm:$0xff]
      %v756 = vld [vmem:[%s1 + $0xf70] sm:$0xff]
      %v757 = vld [vmem:[%s1 + $0xf78] sm:$0xff]
      %v758 = vld [vmem:[%s1 + $0xf80] sm:$0xff]
      %v759 = vld [vmem:[%s1 + $0xf88] sm:$0xff]
      %v760 = vld [vmem:[%s1 + $0xf90] sm:$0xff]
      %v761 = vld [vmem:[%s1 + $0xf98] sm:$0xff]
      %v762 = vld [vmem:[%s2] sm:$0x3]
      %v764 = vlaneseq
      %v765 = vshrl.u32 %v764, 7
      %v766 = vsub.s32 0, %v765
      %v767 = vrot.slane %v762, %v766
      %v768 = vlaneseq
      %v769 = vshrl.u32 %v768, 7
      %v770 = vsub.s32 1, %v769
      %v771 = vrot.slane %v762, %v770
      %v790 = vunpack.c.l.b16 %v246
      %v791 = vunpack.c.h.b16 %v246
      %v792 = vunpack.c.l.b16 %v247
      %v793 = vunpack.c.h.b16 %v247
      %v794 = vunpack.c.l.b16 %v248
      %v795 = vunpack.c.h.b16 %v248
      %v796 = vunpack.c.l.b16 %v249
      %v797 = vunpack.c.h.b16 %v249
      %v798 = vunpack.c.l.b16 %v250
      %v799 = vunpack.c.h.b16 %v250
      %v800 = vunpack.c.l.b16 %v251
      %v801 = vunpack.c.h.b16 %v251
      %v802 = vunpack.c.l.b16 %v252
      %v803 = vunpack.c.h.b16 %v252
      %v804 = vunpack.c.l.b16 %v253
      %v805 = vunpack.c.h.b16 %v253
      %v806 = vunpack.c.l.b16 %v254
      %v807 = vunpack.c.h.b16 %v254
      %v808 = vunpack.c.l.b16 %v255
      %v809 = vunpack.c.h.b16 %v255
      %v810 = vunpack.c.l.b16 %v256
      %v811 = vunpack.c.h.b16 %v256
      %v812 = vunpack.c.l.b16 %v257
      %v813 = vunpack.c.h.b16 %v257
      %v814 = vunpack.c.l.b16 %v258
      %v815 = vunpack.c.h.b16 %v258
      %v816 = vunpack.c.l.b16 %v259
      %v817 = vunpack.c.h.b16 %v259
      %v818 = vunpack.c.l.b16 %v260
      %v819 = vunpack.c.h.b16 %v260
      %v820 = vunpack.c.l.b16 %v261
      %v821 = vunpack.c.h.b16 %v261
      %v822 = vpack.c.b16 %v790, %v790
      %v823 = vpack.c.b16 %v791, %v791
      %v824 = vpack.c.b16 %v792, %v792
      %v825 = vpack.c.b16 %v793, %v793
      %v826 = vpack.c.b16 %v794, %v794
      %v827 = vpack.c.b16 %v795, %v795
      %v828 = vpack.c.b16 %v796, %v796
      %v829 = vpack.c.b16 %v797, %v797
      %v830 = vpack.c.b16 %v798, %v798
      %v831 = vpack.c.b16 %v799, %v799
      %v832 = vpack.c.b16 %v800, %v800
      %v833 = vpack.c.b16 %v801, %v801
      %v834 = vpack.c.b16 %v802, %v802
      %v835 = vpack.c.b16 %v803, %v803
      %v836 = vpack.c.b16 %v804, %v804
      %v837 = vpack.c.b16 %v805, %v805
      %v838 = vpack.c.b16 %v806, %v806
      %v839 = vpack.c.b16 %v807, %v807
      %v840 = vpack.c.b16 %v808, %v808
      %v841 = vpack.c.b16 %v809, %v809
      %v842 = vpack.c.b16 %v810, %v810
      %v843 = vpack.c.b16 %v811, %v811
      %v844 = vpack.c.b16 %v812, %v812
      %v845 = vpack.c.b16 %v813, %v813
      %v846 = vpack.c.b16 %v814, %v814
      %v847 = vpack.c.b16 %v815, %v815
      %v848 = vpack.c.b16 %v816, %v816
      %v849 = vpack.c.b16 %v817, %v817
      %v850 = vpack.c.b16 %v818, %v818
      %v851 = vpack.c.b16 %v819, %v819
      %v852 = vpack.c.b16 %v820, %v820
      %v853 = vpack.c.b16 %v821, %v821
      %v1385 = vunpack.c.l.b16 %v262
      %v1386 = vunpack.c.h.b16 %v262
      %v1387 = vunpack.c.l.b16 %v263
      %v1388 = vunpack.c.h.b16 %v263
      %v1389 = vunpack.c.l.b16 %v264
      %v1390 = vunpack.c.h.b16 %v264
      %v1391 = vunpack.c.l.b16 %v265
      %v1392 = vunpack.c.h.b16 %v265
      %v1393 = vunpack.c.l.b16 %v266
      %v1394 = vunpack.c.h.b16 %v266
      %v1395 = vunpack.c.l.b16 %v267
      %v1396 = vunpack.c.h.b16 %v267
      %v1397 = vunpack.c.l.b16 %v268
      %v1398 = vunpack.c.h.b16 %v268
      %v1399 = vunpack.c.l.b16 %v269
      %v1400 = vunpack.c.h.b16 %v269
      %v1401 = vunpack.c.l.b16 %v270
      %v1402 = vunpack.c.h.b16 %v270
      %v1403 = vunpack.c.l.b16 %v271
      %v1404 = vunpack.c.h.b16 %v271
      %v1405 = vunpack.c.l.b16 %v272
      %v1406 = vunpack.c.h.b16 %v272
      %v1407 = vunpack.c.l.b16 %v273
      %v1408 = vunpack.c.h.b16 %v273
      %v1409 = vunpack.c.l.b16 %v274
      %v1410 = vunpack.c.h.b16 %v274
      %v1411 = vunpack.c.l.b16 %v275
      %v1412 = vunpack.c.h.b16 %v275
      %v1413 = vunpack.c.l.b16 %v276
      %v1414 = vunpack.c.h.b16 %v276
      %v1415 = vunpack.c.l.b16 %v277
      %v1416 = vunpack.c.h.b16 %v277
      %v1417 = vunpack.c.l.b16 %v278
      %v1418 = vunpack.c.h.b16 %v278
      %v1419 = vunpack.c.l.b16 %v279
      %v1420 = vunpack.c.h.b16 %v279
      %v1421 = vunpack.c.l.b16 %v280
      %v1422 = vunpack.c.h.b16 %v280
      %v1423 = vunpack.c.l.b16 %v281
      %v1424 = vunpack.c.h.b16 %v281
      %v1425 = vunpack.c.l.b16 %v282
      %v1426 = vunpack.c.h.b16 %v282
      %v1427 = vunpack.c.l.b16 %v283
      %v1428 = vunpack.c.h.b16 %v283
      %v1429 = vunpack.c.l.b16 %v284
      %v1430 = vunpack.c.h.b16 %v284
      %v1431 = vunpack.c.l.b16 %v285
      %v1432 = vunpack.c.h.b16 %v285
      %v1433 = vunpack.c.l.b16 %v286
      %v1434 = vunpack.c.h.b16 %v286
      %v1435 = vunpack.c.l.b16 %v287
      %v1436 = vunpack.c.h.b16 %v287
      %v1437 = vunpack.c.l.b16 %v288
      %v1438 = vunpack.c.h.b16 %v288
      %v1439 = vunpack.c.l.b16 %v289
      %v1440 = vunpack.c.h.b16 %v289
      %v1441 = vunpack.c.l.b16 %v290
      %v1442 = vunpack.c.h.b16 %v290
      %v1443 = vunpack.c.l.b16 %v291
      %v1444 = vunpack.c.h.b16 %v291
      %v1445 = vunpack.c.l.b16 %v292
      %v1446 = vunpack.c.h.b16 %v292
      %v1447 = vunpack.c.l.b16 %v293
      %v1448 = vunpack.c.h.b16 %v293
      %v1449 = vunpack.c.l.b16 %v294
      %v1450 = vunpack.c.h.b16 %v294
      %v1451 = vunpack.c.l.b16 %v295
      %v1452 = vunpack.c.h.b16 %v295
      %v1453 = vunpack.c.l.b16 %v296
      %v1454 = vunpack.c.h.b16 %v296
      %v1455 = vunpack.c.l.b16 %v297
      %v1456 = vunpack.c.h.b16 %v297
      %v1457 = vunpack.c.l.b16 %v298
      %v1458 = vunpack.c.h.b16 %v298
      %v1459 = vunpack.c.l.b16 %v299
      %v1460 = vunpack.c.h.b16 %v299
      %v1461 = vunpack.c.l.b16 %v300
      %v1462 = vunpack.c.h.b16 %v300
      %v1463 = vunpack.c.l.b16 %v301
      %v1464 = vunpack.c.h.b16 %v301
      %v1465 = vunpack.c.l.b16 %v302
      %v1466 = vunpack.c.h.b16 %v302
      %v1467 = vunpack.c.l.b16 %v303
      %v1468 = vunpack.c.h.b16 %v303
      %v1469 = vunpack.c.l.b16 %v304
      %v1470 = vunpack.c.h.b16 %v304
      %v1471 = vunpack.c.l.b16 %v305
      %v1472 = vunpack.c.h.b16 %v305
      %v1473 = vunpack.c.l.b16 %v306
      %v1474 = vunpack.c.h.b16 %v306
      %v1475 = vunpack.c.l.b16 %v307
      %v1476 = vunpack.c.h.b16 %v307
      %v1477 = vunpack.c.l.b16 %v308
      %v1478 = vunpack.c.h.b16 %v308
      %v1479 = vunpack.c.l.b16 %v309
      %v1480 = vunpack.c.h.b16 %v309
      %v1481 = vunpack.c.l.b16 %v310
      %v1482 = vunpack.c.h.b16 %v310
      %v1483 = vunpack.c.l.b16 %v311
      %v1484 = vunpack.c.h.b16 %v311
      %v1485 = vunpack.c.l.b16 %v312
      %v1486 = vunpack.c.h.b16 %v312
      %v1487 = vunpack.c.l.b16 %v313
      %v1488 = vunpack.c.h.b16 %v313
      %v1489 = vunpack.c.l.b16 %v314
      %v1490 = vunpack.c.h.b16 %v314
      %v1491 = vunpack.c.l.b16 %v315
      %v1492 = vunpack.c.h.b16 %v315
      %v1493 = vunpack.c.l.b16 %v316
      %v1494 = vunpack.c.h.b16 %v316
      %v1495 = vunpack.c.l.b16 %v317
      %v1496 = vunpack.c.h.b16 %v317
      %v1497 = vunpack.c.l.b16 %v318
      %v1498 = vunpack.c.h.b16 %v318
      %v1499 = vunpack.c.l.b16 %v319
      %v1500 = vunpack.c.h.b16 %v319
      %v1501 = vunpack.c.l.b16 %v320
      %v1502 = vunpack.c.h.b16 %v320
      %v1503 = vunpack.c.l.b16 %v321
      %v1504 = vunpack.c.h.b16 %v321
      %v1505 = vunpack.c.l.b16 %v322
      %v1506 = vunpack.c.h.b16 %v322
      %v1507 = vunpack.c.l.b16 %v323
      %v1508 = vunpack.c.h.b16 %v323
      %v1509 = vunpack.c.l.b16 %v324
      %v1510 = vunpack.c.h.b16 %v324
      %v1511 = vunpack.c.l.b16 %v325
      %v1512 = vunpack.c.h.b16 %v325
      %v1513 = vunpack.c.l.b16 %v326
      %v1514 = vunpack.c.h.b16 %v326
      %v1515 = vunpack.c.l.b16 %v327
      %v1516 = vunpack.c.h.b16 %v327
      %v1517 = vunpack.c.l.b16 %v328
      %v1518 = vunpack.c.h.b16 %v328
      %v1519 = vunpack.c.l.b16 %v329
      %v1520 = vunpack.c.h.b16 %v329
      %v1521 = vunpack.c.l.b16 %v330
      %v1522 = vunpack.c.h.b16 %v330
      %v1523 = vunpack.c.l.b16 %v331
      %v1524 = vunpack.c.h.b16 %v331
      %v1525 = vunpack.c.l.b16 %v332
      %v1526 = vunpack.c.h.b16 %v332
      %v1527 = vunpack.c.l.b16 %v333
      %v1528 = vunpack.c.h.b16 %v333
      %v1529 = vunpack.c.l.b16 %v334
      %v1530 = vunpack.c.h.b16 %v334
      %v1531 = vunpack.c.l.b16 %v335
      %v1532 = vunpack.c.h.b16 %v335
      %v1533 = vunpack.c.l.b16 %v336
      %v1534 = vunpack.c.h.b16 %v336
      %v1535 = vunpack.c.l.b16 %v337
      %v1536 = vunpack.c.h.b16 %v337
      %v1537 = vunpack.c.l.b16 %v338
      %v1538 = vunpack.c.h.b16 %v338
      %v1539 = vunpack.c.l.b16 %v339
      %v1540 = vunpack.c.h.b16 %v339
      %v1541 = vunpack.c.l.b16 %v340
      %v1542 = vunpack.c.h.b16 %v340
      %v1543 = vunpack.c.l.b16 %v341
      %v1544 = vunpack.c.h.b16 %v341
      %v1545 = vunpack.c.l.b16 %v342
      %v1546 = vunpack.c.h.b16 %v342
      %v1547 = vunpack.c.l.b16 %v343
      %v1548 = vunpack.c.h.b16 %v343
      %v1549 = vunpack.c.l.b16 %v344
      %v1550 = vunpack.c.h.b16 %v344
      %v1551 = vunpack.c.l.b16 %v345
      %v1552 = vunpack.c.h.b16 %v345
      %v1553 = vunpack.c.l.b16 %v346
      %v1554 = vunpack.c.h.b16 %v346
      %v1555 = vunpack.c.l.b16 %v347
      %v1556 = vunpack.c.h.b16 %v347
      %v1557 = vunpack.c.l.b16 %v348
      %v1558 = vunpack.c.h.b16 %v348
      %v1559 = vunpack.c.l.b16 %v349
      %v1560 = vunpack.c.h.b16 %v349
      %v1561 = vunpack.c.l.b16 %v350
      %v1562 = vunpack.c.h.b16 %v350
      %v1563 = vunpack.c.l.b16 %v351
      %v1564 = vunpack.c.h.b16 %v351
      %v1565 = vunpack.c.l.b16 %v352
      %v1566 = vunpack.c.h.b16 %v352
      %v1567 = vunpack.c.l.b16 %v353
      %v1568 = vunpack.c.h.b16 %v353
      %v1569 = vunpack.c.l.b16 %v354
      %v1570 = vunpack.c.h.b16 %v354
      %v1571 = vunpack.c.l.b16 %v355
      %v1572 = vunpack.c.h.b16 %v355
      %v1573 = vunpack.c.l.b16 %v356
      %v1574 = vunpack.c.h.b16 %v356
      %v1575 = vunpack.c.l.b16 %v357
      %v1576 = vunpack.c.h.b16 %v357
      %v1577 = vunpack.c.l.b16 %v358
      %v1578 = vunpack.c.h.b16 %v358
      %v1579 = vunpack.c.l.b16 %v359
      %v1580 = vunpack.c.h.b16 %v359
      %v1581 = vunpack.c.l.b16 %v360
      %v1582 = vunpack.c.h.b16 %v360
      %v1583 = vunpack.c.l.b16 %v361
      %v1584 = vunpack.c.h.b16 %v361
      %v1585 = vunpack.c.l.b16 %v362
      %v1586 = vunpack.c.h.b16 %v362
      %v1587 = vunpack.c.l.b16 %v363
      %v1588 = vunpack.c.h.b16 %v363
      %v1589 = vunpack.c.l.b16 %v364
      %v1590 = vunpack.c.h.b16 %v364
      %v1591 = vunpack.c.l.b16 %v365
      %v1592 = vunpack.c.h.b16 %v365
      %v1593 = vunpack.c.l.b16 %v366
      %v1594 = vunpack.c.h.b16 %v366
      %v1595 = vunpack.c.l.b16 %v367
      %v1596 = vunpack.c.h.b16 %v367
      %v1597 = vunpack.c.l.b16 %v368
      %v1598 = vunpack.c.h.b16 %v368
      %v1599 = vunpack.c.l.b16 %v369
      %v1600 = vunpack.c.h.b16 %v369
      %v1601 = vunpack.c.l.b16 %v370
      %v1602 = vunpack.c.h.b16 %v370
      %v1603 = vunpack.c.l.b16 %v371
      %v1604 = vunpack.c.h.b16 %v371
      %v1605 = vunpack.c.l.b16 %v372
      %v1606 = vunpack.c.h.b16 %v372
      %v1607 = vunpack.c.l.b16 %v373
      %v1608 = vunpack.c.h.b16 %v373
      %v1609 = vunpack.c.l.b16 %v374
      %v1610 = vunpack.c.h.b16 %v374
      %v1611 = vunpack.c.l.b16 %v375
      %v1612 = vunpack.c.h.b16 %v375
      %v1613 = vunpack.c.l.b16 %v376
      %v1614 = vunpack.c.h.b16 %v376
      %v1615 = vunpack.c.l.b16 %v377
      %v1616 = vunpack.c.h.b16 %v377
      %v1617 = vunpack.c.l.b16 %v378
      %v1618 = vunpack.c.h.b16 %v378
      %v1619 = vunpack.c.l.b16 %v379
      %v1620 = vunpack.c.h.b16 %v379
      %v1621 = vunpack.c.l.b16 %v380
      %v1622 = vunpack.c.h.b16 %v380
      %v1623 = vunpack.c.l.b16 %v381
      %v1624 = vunpack.c.h.b16 %v381
      %v1625 = vunpack.c.l.b16 %v382
      %v1626 = vunpack.c.h.b16 %v382
      %v1627 = vunpack.c.l.b16 %v383
      %v1628 = vunpack.c.h.b16 %v383
      %v1629 = vunpack.c.l.b16 %v384
      %v1630 = vunpack.c.h.b16 %v384
      %v1631 = vunpack.c.l.b16 %v385
      %v1632 = vunpack.c.h.b16 %v385
      %v1633 = vunpack.c.l.b16 %v386
      %v1634 = vunpack.c.h.b16 %v386
      %v1635 = vunpack.c.l.b16 %v387
      %v1636 = vunpack.c.h.b16 %v387
      %v1637 = vunpack.c.l.b16 %v388
      %v1638 = vunpack.c.h.b16 %v388
      %v1639 = vunpack.c.l.b16 %v389
      %v1640 = vunpack.c.h.b16 %v389
      %v1641 = vunpack.c.l.b16 %v390
      %v1642 = vunpack.c.h.b16 %v390
      %v1643 = vunpack.c.l.b16 %v391
      %v1644 = vunpack.c.h.b16 %v391
      %v1645 = vunpack.c.l.b16 %v392
      %v1646 = vunpack.c.h.b16 %v392
      %v1647 = vunpack.c.l.b16 %v393
      %v1648 = vunpack.c.h.b16 %v393
      %v1649 = vunpack.c.l.b16 %v394
      %v1650 = vunpack.c.h.b16 %v394
      %v1651 = vunpack.c.l.b16 %v395
      %v1652 = vunpack.c.h.b16 %v395
      %v1653 = vunpack.c.l.b16 %v396
      %v1654 = vunpack.c.h.b16 %v396
      %v1655 = vunpack.c.l.b16 %v397
      %v1656 = vunpack.c.h.b16 %v397
      %v1657 = vunpack.c.l.b16 %v398
      %v1658 = vunpack.c.h.b16 %v398
      %v1659 = vunpack.c.l.b16 %v399
      %v1660 = vunpack.c.h.b16 %v399
      %v1661 = vunpack.c.l.b16 %v400
      %v1662 = vunpack.c.h.b16 %v400
      %v1663 = vunpack.c.l.b16 %v401
      %v1664 = vunpack.c.h.b16 %v401
      %v1665 = vunpack.c.l.b16 %v402
      %v1666 = vunpack.c.h.b16 %v402
      %v1667 = vunpack.c.l.b16 %v403
      %v1668 = vunpack.c.h.b16 %v403
      %v1669 = vunpack.c.l.b16 %v404
      %v1670 = vunpack.c.h.b16 %v404
      %v1671 = vunpack.c.l.b16 %v405
      %v1672 = vunpack.c.h.b16 %v405
      %v1673 = vunpack.c.l.b16 %v406
      %v1674 = vunpack.c.h.b16 %v406
      %v1675 = vunpack.c.l.b16 %v407
      %v1676 = vunpack.c.h.b16 %v407
      %v1677 = vunpack.c.l.b16 %v408
      %v1678 = vunpack.c.h.b16 %v408
      %v1679 = vunpack.c.l.b16 %v409
      %v1680 = vunpack.c.h.b16 %v409
      %v1681 = vunpack.c.l.b16 %v410
      %v1682 = vunpack.c.h.b16 %v410
      %v1683 = vunpack.c.l.b16 %v411
      %v1684 = vunpack.c.h.b16 %v411
      %v1685 = vunpack.c.l.b16 %v412
      %v1686 = vunpack.c.h.b16 %v412
      %v1687 = vunpack.c.l.b16 %v413
      %v1688 = vunpack.c.h.b16 %v413
      %v1689 = vunpack.c.l.b16 %v414
      %v1690 = vunpack.c.h.b16 %v414
      %v1691 = vunpack.c.l.b16 %v415
      %v1692 = vunpack.c.h.b16 %v415
      %v1693 = vunpack.c.l.b16 %v416
      %v1694 = vunpack.c.h.b16 %v416
      %v1695 = vunpack.c.l.b16 %v417
      %v1696 = vunpack.c.h.b16 %v417
      %v1697 = vunpack.c.l.b16 %v418
      %v1698 = vunpack.c.h.b16 %v418
      %v1699 = vunpack.c.l.b16 %v419
      %v1700 = vunpack.c.h.b16 %v419
      %v1701 = vunpack.c.l.b16 %v420
      %v1702 = vunpack.c.h.b16 %v420
      %v1703 = vunpack.c.l.b16 %v421
      %v1704 = vunpack.c.h.b16 %v421
      %v1705 = vunpack.c.l.b16 %v422
      %v1706 = vunpack.c.h.b16 %v422
      %v1707 = vunpack.c.l.b16 %v423
      %v1708 = vunpack.c.h.b16 %v423
      %v1709 = vunpack.c.l.b16 %v424
      %v1710 = vunpack.c.h.b16 %v424
      %v1711 = vunpack.c.l.b16 %v425
      %v1712 = vunpack.c.h.b16 %v425
      %v1713 = vunpack.c.l.b16 %v426
      %v1714 = vunpack.c.h.b16 %v426
      %v1715 = vunpack.c.l.b16 %v427
      %v1716 = vunpack.c.h.b16 %v427
      %v1717 = vunpack.c.l.b16 %v428
      %v1718 = vunpack.c.h.b16 %v428
      %v1719 = vunpack.c.l.b16 %v429
      %v1720 = vunpack.c.h.b16 %v429
      %v1721 = vunpack.c.l.b16 %v430
      %v1722 = vunpack.c.h.b16 %v430
      %v1723 = vunpack.c.l.b16 %v431
      %v1724 = vunpack.c.h.b16 %v431
      %v1725 = vunpack.c.l.b16 %v432
      %v1726 = vunpack.c.h.b16 %v432
      %v1727 = vunpack.c.l.b16 %v433
      %v1728 = vunpack.c.h.b16 %v433
      %v1729 = vunpack.c.l.b16 %v434
      %v1730 = vunpack.c.h.b16 %v434
      %v1731 = vunpack.c.l.b16 %v435
      %v1732 = vunpack.c.h.b16 %v435
      %v1733 = vunpack.c.l.b16 %v436
      %v1734 = vunpack.c.h.b16 %v436
      %v1735 = vunpack.c.l.b16 %v437
      %v1736 = vunpack.c.h.b16 %v437
      %v1737 = vunpack.c.l.b16 %v438
      %v1738 = vunpack.c.h.b16 %v438
      %v1739 = vunpack.c.l.b16 %v439
      %v1740 = vunpack.c.h.b16 %v439
      %v1741 = vunpack.c.l.b16 %v440
      %v1742 = vunpack.c.h.b16 %v440
      %v1743 = vunpack.c.l.b16 %v441
      %v1744 = vunpack.c.h.b16 %v441
      %v1745 = vunpack.c.l.b16 %v442
      %v1746 = vunpack.c.h.b16 %v442
      %v1747 = vunpack.c.l.b16 %v443
      %v1748 = vunpack.c.h.b16 %v443
      %v1749 = vunpack.c.l.b16 %v444
      %v1750 = vunpack.c.h.b16 %v444
      %v1751 = vunpack.c.l.b16 %v445
      %v1752 = vunpack.c.h.b16 %v445
      %v1753 = vunpack.c.l.b16 %v446
      %v1754 = vunpack.c.h.b16 %v446
      %v1755 = vunpack.c.l.b16 %v447
      %v1756 = vunpack.c.h.b16 %v447
      %v1757 = vunpack.c.l.b16 %v448
      %v1758 = vunpack.c.h.b16 %v448
      %v1759 = vunpack.c.l.b16 %v449
      %v1760 = vunpack.c.h.b16 %v449
      %v1761 = vunpack.c.l.b16 %v450
      %v1762 = vunpack.c.h.b16 %v450
      %v1763 = vunpack.c.l.b16 %v451
      %v1764 = vunpack.c.h.b16 %v451
      %v1765 = vunpack.c.l.b16 %v452
      %v1766 = vunpack.c.h.b16 %v452
      %v1767 = vunpack.c.l.b16 %v453
      %v1768 = vunpack.c.h.b16 %v453
      %v1769 = vunpack.c.l.b16 %v454
      %v1770 = vunpack.c.h.b16 %v454
      %v1771 = vunpack.c.l.b16 %v455
      %v1772 = vunpack.c.h.b16 %v455
      %v1773 = vunpack.c.l.b16 %v456
      %v1774 = vunpack.c.h.b16 %v456
      %v1775 = vunpack.c.l.b16 %v457
      %v1776 = vunpack.c.h.b16 %v457
      %v1777 = vunpack.c.l.b16 %v458
      %v1778 = vunpack.c.h.b16 %v458
      %v1779 = vunpack.c.l.b16 %v459
      %v1780 = vunpack.c.h.b16 %v459
      %v1781 = vunpack.c.l.b16 %v460
      %v1782 = vunpack.c.h.b16 %v460
      %v1783 = vunpack.c.l.b16 %v461
      %v1784 = vunpack.c.h.b16 %v461
      %v1785 = vunpack.c.l.b16 %v462
      %v1786 = vunpack.c.h.b16 %v462
      %v1787 = vunpack.c.l.b16 %v463
      %v1788 = vunpack.c.h.b16 %v463
      %v1789 = vunpack.c.l.b16 %v464
      %v1790 = vunpack.c.h.b16 %v464
      %v1791 = vunpack.c.l.b16 %v465
      %v1792 = vunpack.c.h.b16 %v465
      %v1793 = vunpack.c.l.b16 %v466
      %v1794 = vunpack.c.h.b16 %v466
      %v1795 = vunpack.c.l.b16 %v467
      %v1796 = vunpack.c.h.b16 %v467
      %v1797 = vunpack.c.l.b16 %v468
      %v1798 = vunpack.c.h.b16 %v468
      %v1799 = vunpack.c.l.b16 %v469
      %v1800 = vunpack.c.h.b16 %v469
      %v1801 = vunpack.c.l.b16 %v470
      %v1802 = vunpack.c.h.b16 %v470
      %v1803 = vunpack.c.l.b16 %v471
      %v1804 = vunpack.c.h.b16 %v471
      %v1805 = vunpack.c.l.b16 %v472
      %v1806 = vunpack.c.h.b16 %v472
      %v1807 = vunpack.c.l.b16 %v473
      %v1808 = vunpack.c.h.b16 %v473
      %v1809 = vunpack.c.l.b16 %v474
      %v1810 = vunpack.c.h.b16 %v474
      %v1811 = vunpack.c.l.b16 %v475
      %v1812 = vunpack.c.h.b16 %v475
      %v1813 = vunpack.c.l.b16 %v476
      %v1814 = vunpack.c.h.b16 %v476
      %v1815 = vunpack.c.l.b16 %v477
      %v1816 = vunpack.c.h.b16 %v477
      %v1817 = vunpack.c.l.b16 %v478
      %v1818 = vunpack.c.h.b16 %v478
      %v1819 = vunpack.c.l.b16 %v479
      %v1820 = vunpack.c.h.b16 %v479
      %v1821 = vunpack.c.l.b16 %v480
      %v1822 = vunpack.c.h.b16 %v480
      %v1823 = vunpack.c.l.b16 %v481
      %v1824 = vunpack.c.h.b16 %v481
      %v1825 = vunpack.c.l.b16 %v482
      %v1826 = vunpack.c.h.b16 %v482
      %v1827 = vunpack.c.l.b16 %v483
      %v1828 = vunpack.c.h.b16 %v483
      %v1829 = vunpack.c.l.b16 %v484
      %v1830 = vunpack.c.h.b16 %v484
      %v1831 = vunpack.c.l.b16 %v485
      %v1832 = vunpack.c.h.b16 %v485
      %v1833 = vunpack.c.l.b16 %v486
      %v1834 = vunpack.c.h.b16 %v486
      %v1835 = vunpack.c.l.b16 %v487
      %v1836 = vunpack.c.h.b16 %v487
      %v1837 = vunpack.c.l.b16 %v488
      %v1838 = vunpack.c.h.b16 %v488
      %v1839 = vunpack.c.l.b16 %v489
      %v1840 = vunpack.c.h.b16 %v489
      %v1841 = vunpack.c.l.b16 %v490
      %v1842 = vunpack.c.h.b16 %v490
      %v1843 = vunpack.c.l.b16 %v491
      %v1844 = vunpack.c.h.b16 %v491
      %v1845 = vunpack.c.l.b16 %v492
      %v1846 = vunpack.c.h.b16 %v492
      %v1847 = vunpack.c.l.b16 %v493
      %v1848 = vunpack.c.h.b16 %v493
      %v1849 = vunpack.c.l.b16 %v494
      %v1850 = vunpack.c.h.b16 %v494
      %v1851 = vunpack.c.l.b16 %v495
      %v1852 = vunpack.c.h.b16 %v495
      %v1853 = vunpack.c.l.b16 %v496
      %v1854 = vunpack.c.h.b16 %v496
      %v1855 = vunpack.c.l.b16 %v497
      %v1856 = vunpack.c.h.b16 %v497
      %v1857 = vunpack.c.l.b16 %v498
      %v1858 = vunpack.c.h.b16 %v498
      %v1859 = vunpack.c.l.b16 %v499
      %v1860 = vunpack.c.h.b16 %v499
      %v1861 = vunpack.c.l.b16 %v500
      %v1862 = vunpack.c.h.b16 %v500
      %v1863 = vunpack.c.l.b16 %v501
      %v1864 = vunpack.c.h.b16 %v501
      %v1865 = vunpack.c.l.b16 %v502
      %v1866 = vunpack.c.h.b16 %v502
      %v1867 = vunpack.c.l.b16 %v503
      %v1868 = vunpack.c.h.b16 %v503
      %v1869 = vunpack.c.l.b16 %v504
      %v1870 = vunpack.c.h.b16 %v504
      %v1871 = vunpack.c.l.b16 %v505
      %v1872 = vunpack.c.h.b16 %v505
      %v1873 = vunpack.c.l.b16 %v506
      %v1874 = vunpack.c.h.b16 %v506
      %v1875 = vunpack.c.l.b16 %v507
      %v1876 = vunpack.c.h.b16 %v507
      %v1877 = vunpack.c.l.b16 %v508
      %v1878 = vunpack.c.h.b16 %v508
      %v1879 = vunpack.c.l.b16 %v509
      %v1880 = vunpack.c.h.b16 %v509
      %v1881 = vunpack.c.l.b16 %v510
      %v1882 = vunpack.c.h.b16 %v510
      %v1883 = vunpack.c.l.b16 %v511
      %v1884 = vunpack.c.h.b16 %v511
      %v1885 = vunpack.c.l.b16 %v512
      %v1886 = vunpack.c.h.b16 %v512
      %v1887 = vunpack.c.l.b16 %v513
      %v1888 = vunpack.c.h.b16 %v513
      %v1889 = vunpack.c.l.b16 %v514
      %v1890 = vunpack.c.h.b16 %v514
      %v1891 = vunpack.c.l.b16 %v515
      %v1892 = vunpack.c.h.b16 %v515
      %v1893 = vunpack.c.l.b16 %v516
      %v1894 = vunpack.c.h.b16 %v516
      %v1895 = vunpack.c.l.b16 %v517
      %v1896 = vunpack.c.h.b16 %v517
      %v1897 = vunpack.c.l.b16 %v518
      %v1898 = vunpack.c.h.b16 %v518
      %v1899 = vunpack.c.l.b16 %v519
      %v1900 = vunpack.c.h.b16 %v519
      %v1901 = vunpack.c.l.b16 %v520
      %v1902 = vunpack.c.h.b16 %v520
      %v1903 = vunpack.c.l.b16 %v521
      %v1904 = vunpack.c.h.b16 %v521
      %v1905 = vunpack.c.l.b16 %v522
      %v1906 = vunpack.c.h.b16 %v522
      %v1907 = vunpack.c.l.b16 %v523
      %v1908 = vunpack.c.h.b16 %v523
      %v1909 = vunpack.c.l.b16 %v524
      %v1910 = vunpack.c.h.b16 %v524
      %v1911 = vunpack.c.l.b16 %v525
      %v1912 = vunpack.c.h.b16 %v525
      %v1913 = vunpack.c.l.b16 %v526
      %v1914 = vunpack.c.h.b16 %v526
      %v1915 = vunpack.c.l.b16 %v527
      %v1916 = vunpack.c.h.b16 %v527
      %v1917 = vunpack.c.l.b16 %v528
      %v1918 = vunpack.c.h.b16 %v528
      %v1919 = vunpack.c.l.b16 %v529
      %v1920 = vunpack.c.h.b16 %v529
      %v1921 = vunpack.c.l.b16 %v530
      %v1922 = vunpack.c.h.b16 %v530
      %v1923 = vunpack.c.l.b16 %v531
      %v1924 = vunpack.c.h.b16 %v531
      %v1925 = vunpack.c.l.b16 %v532
      %v1926 = vunpack.c.h.b16 %v532
      %v1927 = vunpack.c.l.b16 %v533
      %v1928 = vunpack.c.h.b16 %v533
      %v1929 = vunpack.c.l.b16 %v534
      %v1930 = vunpack.c.h.b16 %v534
      %v1931 = vunpack.c.l.b16 %v535
      %v1932 = vunpack.c.h.b16 %v535
      %v1933 = vunpack.c.l.b16 %v536
      %v1934 = vunpack.c.h.b16 %v536
      %v1935 = vunpack.c.l.b16 %v537
      %v1936 = vunpack.c.h.b16 %v537
      %v1937 = vunpack.c.l.b16 %v538
      %v1938 = vunpack.c.h.b16 %v538
      %v1939 = vunpack.c.l.b16 %v539
      %v1940 = vunpack.c.h.b16 %v539
      %v1941 = vunpack.c.l.b16 %v540
      %v1942 = vunpack.c.h.b16 %v540
      %v1943 = vunpack.c.l.b16 %v541
      %v1944 = vunpack.c.h.b16 %v541
      %v1945 = vunpack.c.l.b16 %v542
      %v1946 = vunpack.c.h.b16 %v542
      %v1947 = vunpack.c.l.b16 %v543
      %v1948 = vunpack.c.h.b16 %v543
      %v1949 = vunpack.c.l.b16 %v544
      %v1950 = vunpack.c.h.b16 %v544
      %v1951 = vunpack.c.l.b16 %v545
      %v1952 = vunpack.c.h.b16 %v545
      %v1953 = vunpack.c.l.b16 %v546
      %v1954 = vunpack.c.h.b16 %v546
      %v1955 = vunpack.c.l.b16 %v547
      %v1956 = vunpack.c.h.b16 %v547
      %v1957 = vunpack.c.l.b16 %v548
      %v1958 = vunpack.c.h.b16 %v548
      %v1959 = vunpack.c.l.b16 %v549
      %v1960 = vunpack.c.h.b16 %v549
      %v1961 = vunpack.c.l.b16 %v550
      %v1962 = vunpack.c.h.b16 %v550
      %v1963 = vunpack.c.l.b16 %v551
      %v1964 = vunpack.c.h.b16 %v551
      %v1965 = vunpack.c.l.b16 %v552
      %v1966 = vunpack.c.h.b16 %v552
      %v1967 = vunpack.c.l.b16 %v553
      %v1968 = vunpack.c.h.b16 %v553
      %v1969 = vunpack.c.l.b16 %v554
      %v1970 = vunpack.c.h.b16 %v554
      %v1971 = vunpack.c.l.b16 %v555
      %v1972 = vunpack.c.h.b16 %v555
      %v1973 = vunpack.c.l.b16 %v556
      %v1974 = vunpack.c.h.b16 %v556
      %v1975 = vunpack.c.l.b16 %v557
      %v1976 = vunpack.c.h.b16 %v557
      %v1977 = vunpack.c.l.b16 %v558
      %v1978 = vunpack.c.h.b16 %v558
      %v1979 = vunpack.c.l.b16 %v559
      %v1980 = vunpack.c.h.b16 %v559
      %v1981 = vunpack.c.l.b16 %v560
      %v1982 = vunpack.c.h.b16 %v560
      %v1983 = vunpack.c.l.b16 %v561
      %v1984 = vunpack.c.h.b16 %v561
      %v1985 = vunpack.c.l.b16 %v562
      %v1986 = vunpack.c.h.b16 %v562
      %v1987 = vunpack.c.l.b16 %v563
      %v1988 = vunpack.c.h.b16 %v563
      %v1989 = vunpack.c.l.b16 %v564
      %v1990 = vunpack.c.h.b16 %v564
      %v1991 = vunpack.c.l.b16 %v565
      %v1992 = vunpack.c.h.b16 %v565
      %v1993 = vunpack.c.l.b16 %v566
      %v1994 = vunpack.c.h.b16 %v566
      %v1995 = vunpack.c.l.b16 %v567
      %v1996 = vunpack.c.h.b16 %v567
      %v1997 = vunpack.c.l.b16 %v568
      %v1998 = vunpack.c.h.b16 %v568
      %v1999 = vunpack.c.l.b16 %v569
      %v2000 = vunpack.c.h.b16 %v569
      %v2001 = vunpack.c.l.b16 %v570
      %v2002 = vunpack.c.h.b16 %v570
      %v2003 = vunpack.c.l.b16 %v571
      %v2004 = vunpack.c.h.b16 %v571
      %v2005 = vunpack.c.l.b16 %v572
      %v2006 = vunpack.c.h.b16 %v572
      %v2007 = vunpack.c.l.b16 %v573
      %v2008 = vunpack.c.h.b16 %v573
      %v2009 = vunpack.c.l.b16 %v574
      %v2010 = vunpack.c.h.b16 %v574
      %v2011 = vunpack.c.l.b16 %v575
      %v2012 = vunpack.c.h.b16 %v575
      %v2013 = vunpack.c.l.b16 %v576
      %v2014 = vunpack.c.h.b16 %v576
      %v2015 = vunpack.c.l.b16 %v577
      %v2016 = vunpack.c.h.b16 %v577
      %v2017 = vunpack.c.l.b16 %v578
      %v2018 = vunpack.c.h.b16 %v578
      %v2019 = vunpack.c.l.b16 %v579
      %v2020 = vunpack.c.h.b16 %v579
      %v2021 = vunpack.c.l.b16 %v580
      %v2022 = vunpack.c.h.b16 %v580
      %v2023 = vunpack.c.l.b16 %v581
      %v2024 = vunpack.c.h.b16 %v581
      %v2025 = vunpack.c.l.b16 %v582
      %v2026 = vunpack.c.h.b16 %v582
      %v2027 = vunpack.c.l.b16 %v583
      %v2028 = vunpack.c.h.b16 %v583
      %v2029 = vunpack.c.l.b16 %v584
      %v2030 = vunpack.c.h.b16 %v584
      %v2031 = vunpack.c.l.b16 %v585
      %v2032 = vunpack.c.h.b16 %v585
      %v2033 = vunpack.c.l.b16 %v586
      %v2034 = vunpack.c.h.b16 %v586
      %v2035 = vunpack.c.l.b16 %v587
      %v2036 = vunpack.c.h.b16 %v587
      %v2037 = vunpack.c.l.b16 %v588
      %v2038 = vunpack.c.h.b16 %v588
      %v2039 = vunpack.c.l.b16 %v589
      %v2040 = vunpack.c.h.b16 %v589
      %v2041 = vunpack.c.l.b16 %v590
      %v2042 = vunpack.c.h.b16 %v590
      %v2043 = vunpack.c.l.b16 %v591
      %v2044 = vunpack.c.h.b16 %v591
      %v2045 = vunpack.c.l.b16 %v592
      %v2046 = vunpack.c.h.b16 %v592
      %v2047 = vunpack.c.l.b16 %v593
      %v2048 = vunpack.c.h.b16 %v593
      %v2049 = vunpack.c.l.b16 %v594
      %v2050 = vunpack.c.h.b16 %v594
      %v2051 = vunpack.c.l.b16 %v595
      %v2052 = vunpack.c.h.b16 %v595
      %v2053 = vunpack.c.l.b16 %v596
      %v2054 = vunpack.c.h.b16 %v596
      %v2055 = vunpack.c.l.b16 %v597
      %v2056 = vunpack.c.h.b16 %v597
      %v2057 = vunpack.c.l.b16 %v598
      %v2058 = vunpack.c.h.b16 %v598
      %v2059 = vunpack.c.l.b16 %v599
      %v2060 = vunpack.c.h.b16 %v599
      %v2061 = vunpack.c.l.b16 %v600
      %v2062 = vunpack.c.h.b16 %v600
      %v2063 = vunpack.c.l.b16 %v601
      %v2064 = vunpack.c.h.b16 %v601
      %v2065 = vunpack.c.l.b16 %v602
      %v2066 = vunpack.c.h.b16 %v602
      %v2067 = vunpack.c.l.b16 %v603
      %v2068 = vunpack.c.h.b16 %v603
      %v2069 = vunpack.c.l.b16 %v604
      %v2070 = vunpack.c.h.b16 %v604
      %v2071 = vunpack.c.l.b16 %v605
      %v2072 = vunpack.c.h.b16 %v605
      %v2073 = vunpack.c.l.b16 %v606
      %v2074 = vunpack.c.h.b16 %v606
      %v2075 = vunpack.c.l.b16 %v607
      %v2076 = vunpack.c.h.b16 %v607
      %v2077 = vunpack.c.l.b16 %v608
      %v2078 = vunpack.c.h.b16 %v608
      %v2079 = vunpack.c.l.b16 %v609
      %v2080 = vunpack.c.h.b16 %v609
      %v2081 = vunpack.c.l.b16 %v610
      %v2082 = vunpack.c.h.b16 %v610
      %v2083 = vunpack.c.l.b16 %v611
      %v2084 = vunpack.c.h.b16 %v611
      %v2085 = vunpack.c.l.b16 %v612
      %v2086 = vunpack.c.h.b16 %v612
      %v2087 = vunpack.c.l.b16 %v613
      %v2088 = vunpack.c.h.b16 %v613
      %v2089 = vunpack.c.l.b16 %v614
      %v2090 = vunpack.c.h.b16 %v614
      %v2091 = vunpack.c.l.b16 %v615
      %v2092 = vunpack.c.h.b16 %v615
      %v2093 = vunpack.c.l.b16 %v616
      %v2094 = vunpack.c.h.b16 %v616
      %v2095 = vunpack.c.l.b16 %v617
      %v2096 = vunpack.c.h.b16 %v617
      %v2097 = vunpack.c.l.b16 %v618
      %v2098 = vunpack.c.h.b16 %v618
      %v2099 = vunpack.c.l.b16 %v619
      %v2100 = vunpack.c.h.b16 %v619
      %v2101 = vunpack.c.l.b16 %v620
      %v2102 = vunpack.c.h.b16 %v620
      %v2103 = vunpack.c.l.b16 %v621
      %v2104 = vunpack.c.h.b16 %v621
      %v2105 = vunpack.c.l.b16 %v622
      %v2106 = vunpack.c.h.b16 %v622
      %v2107 = vunpack.c.l.b16 %v623
      %v2108 = vunpack.c.h.b16 %v623
      %v2109 = vunpack.c.l.b16 %v624
      %v2110 = vunpack.c.h.b16 %v624
      %v2111 = vunpack.c.l.b16 %v625
      %v2112 = vunpack.c.h.b16 %v625
      %v2113 = vunpack.c.l.b16 %v626
      %v2114 = vunpack.c.h.b16 %v626
      %v2115 = vunpack.c.l.b16 %v627
      %v2116 = vunpack.c.h.b16 %v627
      %v2117 = vunpack.c.l.b16 %v628
      %v2118 = vunpack.c.h.b16 %v628
      %v2119 = vunpack.c.l.b16 %v629
      %v2120 = vunpack.c.h.b16 %v629
      %v2121 = vunpack.c.l.b16 %v630
      %v2122 = vunpack.c.h.b16 %v630
      %v2123 = vunpack.c.l.b16 %v631
      %v2124 = vunpack.c.h.b16 %v631
      %v2125 = vunpack.c.l.b16 %v632
      %v2126 = vunpack.c.h.b16 %v632
      %v2127 = vunpack.c.l.b16 %v633
      %v2128 = vunpack.c.h.b16 %v633
      %v2129 = vunpack.c.l.b16 %v634
      %v2130 = vunpack.c.h.b16 %v634
      %v2131 = vunpack.c.l.b16 %v635
      %v2132 = vunpack.c.h.b16 %v635
      %v2133 = vunpack.c.l.b16 %v636
      %v2134 = vunpack.c.h.b16 %v636
      %v2135 = vunpack.c.l.b16 %v637
      %v2136 = vunpack.c.h.b16 %v637
      %v2137 = vunpack.c.l.b16 %v638
      %v2138 = vunpack.c.h.b16 %v638
      %v2139 = vunpack.c.l.b16 %v639
      %v2140 = vunpack.c.h.b16 %v639
      %v2141 = vunpack.c.l.b16 %v640
      %v2142 = vunpack.c.h.b16 %v640
      %v2143 = vunpack.c.l.b16 %v641
      %v2144 = vunpack.c.h.b16 %v641
      %v2145 = vunpack.c.l.b16 %v642
      %v2146 = vunpack.c.h.b16 %v642
      %v2147 = vunpack.c.l.b16 %v643
      %v2148 = vunpack.c.h.b16 %v643
      %v2149 = vunpack.c.l.b16 %v644
      %v2150 = vunpack.c.h.b16 %v644
      %v2151 = vunpack.c.l.b16 %v645
      %v2152 = vunpack.c.h.b16 %v645
      %v2153 = vunpack.c.l.b16 %v646
      %v2154 = vunpack.c.h.b16 %v646
      %v2155 = vunpack.c.l.b16 %v647
      %v2156 = vunpack.c.h.b16 %v647
      %v2157 = vunpack.c.l.b16 %v648
      %v2158 = vunpack.c.h.b16 %v648
      %v2159 = vunpack.c.l.b16 %v649
      %v2160 = vunpack.c.h.b16 %v649
      %v2161 = vunpack.c.l.b16 %v650
      %v2162 = vunpack.c.h.b16 %v650
      %v2163 = vunpack.c.l.b16 %v651
      %v2164 = vunpack.c.h.b16 %v651
      %v2165 = vunpack.c.l.b16 %v652
      %v2166 = vunpack.c.h.b16 %v652
      %v2167 = vunpack.c.l.b16 %v653
      %v2168 = vunpack.c.h.b16 %v653
      %v2169 = vunpack.c.l.b16 %v654
      %v2170 = vunpack.c.h.b16 %v654
      %v2171 = vunpack.c.l.b16 %v655
      %v2172 = vunpack.c.h.b16 %v655
      %v2173 = vunpack.c.l.b16 %v656
      %v2174 = vunpack.c.h.b16 %v656
      %v2175 = vunpack.c.l.b16 %v657
      %v2176 = vunpack.c.h.b16 %v657
      %v2177 = vunpack.c.l.b16 %v658
      %v2178 = vunpack.c.h.b16 %v658
      %v2179 = vunpack.c.l.b16 %v659
      %v2180 = vunpack.c.h.b16 %v659
      %v2181 = vunpack.c.l.b16 %v660
      %v2182 = vunpack.c.h.b16 %v660
      %v2183 = vunpack.c.l.b16 %v661
      %v2184 = vunpack.c.h.b16 %v661
      %v2185 = vunpack.c.l.b16 %v662
      %v2186 = vunpack.c.h.b16 %v662
      %v2187 = vunpack.c.l.b16 %v663
      %v2188 = vunpack.c.h.b16 %v663
      %v2189 = vunpack.c.l.b16 %v664
      %v2190 = vunpack.c.h.b16 %v664
      %v2191 = vunpack.c.l.b16 %v665
      %v2192 = vunpack.c.h.b16 %v665
      %v2193 = vunpack.c.l.b16 %v666
      %v2194 = vunpack.c.h.b16 %v666
      %v2195 = vunpack.c.l.b16 %v667
      %v2196 = vunpack.c.h.b16 %v667
      %v2197 = vunpack.c.l.b16 %v668
      %v2198 = vunpack.c.h.b16 %v668
      %v2199 = vunpack.c.l.b16 %v669
      %v2200 = vunpack.c.h.b16 %v669
      %v2201 = vunpack.c.l.b16 %v670
      %v2202 = vunpack.c.h.b16 %v670
      %v2203 = vunpack.c.l.b16 %v671
      %v2204 = vunpack.c.h.b16 %v671
      %v2205 = vunpack.c.l.b16 %v672
      %v2206 = vunpack.c.h.b16 %v672
      %v2207 = vunpack.c.l.b16 %v673
      %v2208 = vunpack.c.h.b16 %v673
      %v2209 = vunpack.c.l.b16 %v674
      %v2210 = vunpack.c.h.b16 %v674
      %v2211 = vunpack.c.l.b16 %v675
      %v2212 = vunpack.c.h.b16 %v675
      %v2213 = vunpack.c.l.b16 %v676
      %v2214 = vunpack.c.h.b16 %v676
      %v2215 = vunpack.c.l.b16 %v677
      %v2216 = vunpack.c.h.b16 %v677
      %v2217 = vunpack.c.l.b16 %v678
      %v2218 = vunpack.c.h.b16 %v678
      %v2219 = vunpack.c.l.b16 %v679
      %v2220 = vunpack.c.h.b16 %v679
      %v2221 = vunpack.c.l.b16 %v680
      %v2222 = vunpack.c.h.b16 %v680
      %v2223 = vunpack.c.l.b16 %v681
      %v2224 = vunpack.c.h.b16 %v681
      %v2225 = vunpack.c.l.b16 %v682
      %v2226 = vunpack.c.h.b16 %v682
      %v2227 = vunpack.c.l.b16 %v683
      %v2228 = vunpack.c.h.b16 %v683
      %v2229 = vunpack.c.l.b16 %v684
      %v2230 = vunpack.c.h.b16 %v684
      %v2231 = vunpack.c.l.b16 %v685
      %v2232 = vunpack.c.h.b16 %v685
      %v2233 = vunpack.c.l.b16 %v686
      %v2234 = vunpack.c.h.b16 %v686
      %v2235 = vunpack.c.l.b16 %v687
      %v2236 = vunpack.c.h.b16 %v687
      %v2237 = vunpack.c.l.b16 %v688
      %v2238 = vunpack.c.h.b16 %v688
      %v2239 = vunpack.c.l.b16 %v689
      %v2240 = vunpack.c.h.b16 %v689
      %v2241 = vunpack.c.l.b16 %v690
      %v2242 = vunpack.c.h.b16 %v690
      %v2243 = vunpack.c.l.b16 %v691
      %v2244 = vunpack.c.h.b16 %v691
      %v2245 = vunpack.c.l.b16 %v692
      %v2246 = vunpack.c.h.b16 %v692
      %v2247 = vunpack.c.l.b16 %v693
      %v2248 = vunpack.c.h.b16 %v693
      %v2249 = vunpack.c.l.b16 %v694
      %v2250 = vunpack.c.h.b16 %v694
      %v2251 = vunpack.c.l.b16 %v695
      %v2252 = vunpack.c.h.b16 %v695
      %v2253 = vunpack.c.l.b16 %v696
      %v2254 = vunpack.c.h.b16 %v696
      %v2255 = vunpack.c.l.b16 %v697
      %v2256 = vunpack.c.h.b16 %v697
      %v2257 = vunpack.c.l.b16 %v698
      %v2258 = vunpack.c.h.b16 %v698
      %v2259 = vunpack.c.l.b16 %v699
      %v2260 = vunpack.c.h.b16 %v699
      %v2261 = vunpack.c.l.b16 %v700
      %v2262 = vunpack.c.h.b16 %v700
      %v2263 = vunpack.c.l.b16 %v701
      %v2264 = vunpack.c.h.b16 %v701
      %v2265 = vunpack.c.l.b16 %v702
      %v2266 = vunpack.c.h.b16 %v702
      %v2267 = vunpack.c.l.b16 %v703
      %v2268 = vunpack.c.h.b16 %v703
      %v2269 = vunpack.c.l.b16 %v704
      %v2270 = vunpack.c.h.b16 %v704
      %v2271 = vunpack.c.l.b16 %v705
      %v2272 = vunpack.c.h.b16 %v705
      %v2273 = vunpack.c.l.b16 %v706
      %v2274 = vunpack.c.h.b16 %v706
      %v2275 = vunpack.c.l.b16 %v707
      %v2276 = vunpack.c.h.b16 %v707
      %v2277 = vunpack.c.l.b16 %v708
      %v2278 = vunpack.c.h.b16 %v708
      %v2279 = vunpack.c.l.b16 %v709
      %v2280 = vunpack.c.h.b16 %v709
      %v2281 = vunpack.c.l.b16 %v710
      %v2282 = vunpack.c.h.b16 %v710
      %v2283 = vunpack.c.l.b16 %v711
      %v2284 = vunpack.c.h.b16 %v711
      %v2285 = vunpack.c.l.b16 %v712
      %v2286 = vunpack.c.h.b16 %v712
      %v2287 = vunpack.c.l.b16 %v713
      %v2288 = vunpack.c.h.b16 %v713
      %v2289 = vunpack.c.l.b16 %v714
      %v2290 = vunpack.c.h.b16 %v714
      %v2291 = vunpack.c.l.b16 %v715
      %v2292 = vunpack.c.h.b16 %v715
      %v2293 = vunpack.c.l.b16 %v716
      %v2294 = vunpack.c.h.b16 %v716
      %v2295 = vunpack.c.l.b16 %v717
      %v2296 = vunpack.c.h.b16 %v717
      %v2297 = vunpack.c.l.b16 %v718
      %v2298 = vunpack.c.h.b16 %v718
      %v2299 = vunpack.c.l.b16 %v719
      %v2300 = vunpack.c.h.b16 %v719
      %v2301 = vunpack.c.l.b16 %v720
      %v2302 = vunpack.c.h.b16 %v720
      %v2303 = vunpack.c.l.b16 %v721
      %v2304 = vunpack.c.h.b16 %v721
      %v2305 = vunpack.c.l.b16 %v722
      %v2306 = vunpack.c.h.b16 %v722
      %v2307 = vunpack.c.l.b16 %v723
      %v2308 = vunpack.c.h.b16 %v723
      %v2309 = vunpack.c.l.b16 %v724
      %v2310 = vunpack.c.h.b16 %v724
      %v2311 = vunpack.c.l.b16 %v725
      %v2312 = vunpack.c.h.b16 %v725
      %v2313 = vunpack.c.l.b16 %v726
      %v2314 = vunpack.c.h.b16 %v726
      %v2315 = vunpack.c.l.b16 %v727
      %v2316 = vunpack.c.h.b16 %v727
      %v2317 = vunpack.c.l.b16 %v728
      %v2318 = vunpack.c.h.b16 %v728
      %v2319 = vunpack.c.l.b16 %v729
      %v2320 = vunpack.c.h.b16 %v729
      %v2321 = vunpack.c.l.b16 %v730
      %v2322 = vunpack.c.h.b16 %v730
      %v2323 = vunpack.c.l.b16 %v731
      %v2324 = vunpack.c.h.b16 %v731
      %v2325 = vunpack.c.l.b16 %v732
      %v2326 = vunpack.c.h.b16 %v732
      %v2327 = vunpack.c.l.b16 %v733
      %v2328 = vunpack.c.h.b16 %v733
      %v2329 = vunpack.c.l.b16 %v734
      %v2330 = vunpack.c.h.b16 %v734
      %v2331 = vunpack.c.l.b16 %v735
      %v2332 = vunpack.c.h.b16 %v735
      %v2333 = vunpack.c.l.b16 %v736
      %v2334 = vunpack.c.h.b16 %v736
      %v2335 = vunpack.c.l.b16 %v737
      %v2336 = vunpack.c.h.b16 %v737
      %v2337 = vunpack.c.l.b16 %v738
      %v2338 = vunpack.c.h.b16 %v738
      %v2339 = vunpack.c.l.b16 %v739
      %v2340 = vunpack.c.h.b16 %v739
      %v2341 = vunpack.c.l.b16 %v740
      %v2342 = vunpack.c.h.b16 %v740
      %v2343 = vunpack.c.l.b16 %v741
      %v2344 = vunpack.c.h.b16 %v741
      %v2345 = vunpack.c.l.b16 %v742
      %v2346 = vunpack.c.h.b16 %v742
      %v2347 = vunpack.c.l.b16 %v743
      %v2348 = vunpack.c.h.b16 %v743
      %v2349 = vunpack.c.l.b16 %v744
      %v2350 = vunpack.c.h.b16 %v744
      %v2351 = vunpack.c.l.b16 %v745
      %v2352 = vunpack.c.h.b16 %v745
      %v2353 = vunpack.c.l.b16 %v746
      %v2354 = vunpack.c.h.b16 %v746
      %v2355 = vunpack.c.l.b16 %v747
      %v2356 = vunpack.c.h.b16 %v747
      %v2357 = vunpack.c.l.b16 %v748
      %v2358 = vunpack.c.h.b16 %v748
      %v2359 = vunpack.c.l.b16 %v749
      %v2360 = vunpack.c.h.b16 %v749
      %v2361 = vunpack.c.l.b16 %v750
      %v2362 = vunpack.c.h.b16 %v750
      %v2363 = vunpack.c.l.b16 %v751
      %v2364 = vunpack.c.h.b16 %v751
      %v2365 = vunpack.c.l.b16 %v752
      %v2366 = vunpack.c.h.b16 %v752
      %v2367 = vunpack.c.l.b16 %v753
      %v2368 = vunpack.c.h.b16 %v753
      %v2369 = vunpack.c.l.b16 %v754
      %v2370 = vunpack.c.h.b16 %v754
      %v2371 = vunpack.c.l.b16 %v755
      %v2372 = vunpack.c.h.b16 %v755
      %v2373 = vunpack.c.l.b16 %v756
      %v2374 = vunpack.c.h.b16 %v756
      %v2375 = vunpack.c.l.b16 %v757
      %v2376 = vunpack.c.h.b16 %v757
      %v2377 = vunpack.c.l.b16 %v758
      %v2378 = vunpack.c.h.b16 %v758
      %v2379 = vunpack.c.l.b16 %v759
      %v2380 = vunpack.c.h.b16 %v759
      %v2381 = vunpack.c.l.b16 %v760
      %v2382 = vunpack.c.h.b16 %v760
      %v2383 = vunpack.c.l.b16 %v761
      %v2384 = vunpack.c.h.b16 %v761
      %v2385 = vpack.c.b16 %v1387, %v1385
      %v2386 = vpack.c.b16 %v1388, %v1386
      %v2387 = vpack.c.b16 %v1391, %v1389
      %v2388 = vpack.c.b16 %v1392, %v1390
      %v2389 = vpack.c.b16 %v1395, %v1393
      %v2390 = vpack.c.b16 %v1396, %v1394
      %v2391 = vpack.c.b16 %v1399, %v1397
      %v2392 = vpack.c.b16 %v1400, %v1398
      %v2393 = vpack.c.b16 %v1403, %v1401
      %v2394 = vpack.c.b16 %v1404, %v1402
      %v2395 = vpack.c.b16 %v1407, %v1405
      %v2396 = vpack.c.b16 %v1408, %v1406
      %v2397 = vpack.c.b16 %v1411, %v1409
      %v2398 = vpack.c.b16 %v1412, %v1410
      %v2399 = vpack.c.b16 %v1415, %v1413
      %v2400 = vpack.c.b16 %v1416, %v1414
      %v2401 = vpack.c.b16 %v1419, %v1417
      %v2402 = vpack.c.b16 %v1420, %v1418
      %v2403 = vpack.c.b16 %v1423, %v1421
      %v2404 = vpack.c.b16 %v1424, %v1422
      %v2405 = vpack.c.b16 %v1427, %v1425
      %v2406 = vpack.c.b16 %v1428, %v1426
      %v2407 = vpack.c.b16 %v1431, %v1429
      %v2408 = vpack.c.b16 %v1432, %v1430
      %v2409 = vpack.c.b16 %v1435, %v1433
      %v2410 = vpack.c.b16 %v1436, %v1434
      %v2411 = vpack.c.b16 %v1439, %v1437
      %v2412 = vpack.c.b16 %v1440, %v1438
      %v2413 = vpack.c.b16 %v1443, %v1441
      %v2414 = vpack.c.b16 %v1444, %v1442
      %v2415 = vpack.c.b16 %v1447, %v1445
      %v2416 = vpack.c.b16 %v1448, %v1446
      %v2417 = vpack.c.b16 %v1451, %v1449
      %v2418 = vpack.c.b16 %v1452, %v1450
      %v2419 = vpack.c.b16 %v1455, %v1453
      %v2420 = vpack.c.b16 %v1456, %v1454
      %v2421 = vpack.c.b16 %v1459, %v1457
      %v2422 = vpack.c.b16 %v1460, %v1458
      %v2423 = vpack.c.b16 %v1463, %v1461
      %v2424 = vpack.c.b16 %v1464, %v1462
      %v2425 = vpack.c.b16 %v1467, %v1465
      %v2426 = vpack.c.b16 %v1468, %v1466
      %v2427 = vpack.c.b16 %v1471, %v1469
      %v2428 = vpack.c.b16 %v1472, %v1470
      %v2429 = vpack.c.b16 %v1475, %v1473
      %v2430 = vpack.c.b16 %v1476, %v1474
      %v2431 = vpack.c.b16 %v1479, %v1477
      %v2432 = vpack.c.b16 %v1480, %v1478
      %v2433 = vpack.c.b16 %v1483, %v1481
      %v2434 = vpack.c.b16 %v1484, %v1482
      %v2435 = vpack.c.b16 %v1487, %v1485
      %v2436 = vpack.c.b16 %v1488, %v1486
      %v2437 = vpack.c.b16 %v1491, %v1489
      %v2438 = vpack.c.b16 %v1492, %v1490
      %v2439 = vpack.c.b16 %v1495, %v1493
      %v2440 = vpack.c.b16 %v1496, %v1494
      %v2441 = vpack.c.b16 %v1499, %v1497
      %v2442 = vpack.c.b16 %v1500, %v1498
      %v2443 = vpack.c.b16 %v1503, %v1501
      %v2444 = vpack.c.b16 %v1504, %v1502
      %v2445 = vpack.c.b16 %v1507, %v1505
      %v2446 = vpack.c.b16 %v1508, %v1506
      %v2447 = vpack.c.b16 %v1511, %v1509
      %v2448 = vpack.c.b16 %v1512, %v1510
      %v2449 = vpack.c.b16 %v1515, %v1513
      %v2450 = vpack.c.b16 %v1516, %v1514
      %v2451 = vpack.c.b16 %v1519, %v1517
      %v2452 = vpack.c.b16 %v1520, %v1518
      %v2453 = vpack.c.b16 %v1523, %v1521
      %v2454 = vpack.c.b16 %v1524, %v1522
      %v2455 = vpack.c.b16 %v1527, %v1525
      %v2456 = vpack.c.b16 %v1528, %v1526
      %v2457 = vpack.c.b16 %v1531, %v1529
      %v2458 = vpack.c.b16 %v1532, %v1530
      %v2459 = vpack.c.b16 %v1535, %v1533
      %v2460 = vpack.c.b16 %v1536, %v1534
      %v2461 = vpack.c.b16 %v1539, %v1537
      %v2462 = vpack.c.b16 %v1540, %v1538
      %v2463 = vpack.c.b16 %v1543, %v1541
      %v2464 = vpack.c.b16 %v1544, %v1542
      %v2465 = vpack.c.b16 %v1547, %v1545
      %v2466 = vpack.c.b16 %v1548, %v1546
      %v2467 = vpack.c.b16 %v1551, %v1549
      %v2468 = vpack.c.b16 %v1552, %v1550
      %v2469 = vpack.c.b16 %v1555, %v1553
      %v2470 = vpack.c.b16 %v1556, %v1554
      %v2471 = vpack.c.b16 %v1559, %v1557
      %v2472 = vpack.c.b16 %v1560, %v1558
      %v2473 = vpack.c.b16 %v1563, %v1561
      %v2474 = vpack.c.b16 %v1564, %v1562
      %v2475 = vpack.c.b16 %v1567, %v1565
      %v2476 = vpack.c.b16 %v1568, %v1566
      %v2477 = vpack.c.b16 %v1571, %v1569
      %v2478 = vpack.c.b16 %v1572, %v1570
      %v2479 = vpack.c.b16 %v1575, %v1573
      %v2480 = vpack.c.b16 %v1576, %v1574
      %v2481 = vpack.c.b16 %v1579, %v1577
      %v2482 = vpack.c.b16 %v1580, %v1578
      %v2483 = vpack.c.b16 %v1583, %v1581
      %v2484 = vpack.c.b16 %v1584, %v1582
      %v2485 = vpack.c.b16 %v1587, %v1585
      %v2486 = vpack.c.b16 %v1588, %v1586
      %v2487 = vpack.c.b16 %v1591, %v1589
      %v2488 = vpack.c.b16 %v1592, %v1590
      %v2489 = vpack.c.b16 %v1595, %v1593
      %v2490 = vpack.c.b16 %v1596, %v1594
      %v2491 = vpack.c.b16 %v1599, %v1597
      %v2492 = vpack.c.b16 %v1600, %v1598
      %v2493 = vpack.c.b16 %v1603, %v1601
      %v2494 = vpack.c.b16 %v1604, %v1602
      %v2495 = vpack.c.b16 %v1607, %v1605
      %v2496 = vpack.c.b16 %v1608, %v1606
      %v2497 = vpack.c.b16 %v1611, %v1609
      %v2498 = vpack.c.b16 %v1612, %v1610
      %v2499 = vpack.c.b16 %v1615, %v1613
      %v2500 = vpack.c.b16 %v1616, %v1614
      %v2501 = vpack.c.b16 %v1619, %v1617
      %v2502 = vpack.c.b16 %v1620, %v1618
      %v2503 = vpack.c.b16 %v1623, %v1621
      %v2504 = vpack.c.b16 %v1624, %v1622
      %v2505 = vpack.c.b16 %v1627, %v1625
      %v2506 = vpack.c.b16 %v1628, %v1626
      %v2507 = vpack.c.b16 %v1631, %v1629
      %v2508 = vpack.c.b16 %v1632, %v1630
      %v2509 = vpack.c.b16 %v1635, %v1633
      %v2510 = vpack.c.b16 %v1636, %v1634
      %v2511 = vpack.c.b16 %v1639, %v1637
      %v2512 = vpack.c.b16 %v1640, %v1638
      %v2513 = vpack.c.b16 %v1643, %v1641
      %v2514 = vpack.c.b16 %v1644, %v1642
      %v2515 = vpack.c.b16 %v1647, %v1645
      %v2516 = vpack.c.b16 %v1648, %v1646
      %v2517 = vpack.c.b16 %v1651, %v1649
      %v2518 = vpack.c.b16 %v1652, %v1650
      %v2519 = vpack.c.b16 %v1655, %v1653
      %v2520 = vpack.c.b16 %v1656, %v1654
      %v2521 = vpack.c.b16 %v1659, %v1657
      %v2522 = vpack.c.b16 %v1660, %v1658
      %v2523 = vpack.c.b16 %v1663, %v1661
      %v2524 = vpack.c.b16 %v1664, %v1662
      %v2525 = vpack.c.b16 %v1667, %v1665
      %v2526 = vpack.c.b16 %v1668, %v1666
      %v2527 = vpack.c.b16 %v1671, %v1669
      %v2528 = vpack.c.b16 %v1672, %v1670
      %v2529 = vpack.c.b16 %v1675, %v1673
      %v2530 = vpack.c.b16 %v1676, %v1674
      %v2531 = vpack.c.b16 %v1679, %v1677
      %v2532 = vpack.c.b16 %v1680, %v1678
      %v2533 = vpack.c.b16 %v1683, %v1681
      %v2534 = vpack.c.b16 %v1684, %v1682
      %v2535 = vpack.c.b16 %v1687, %v1685
      %v2536 = vpack.c.b16 %v1688, %v1686
      %v2537 = vpack.c.b16 %v1691, %v1689
      %v2538 = vpack.c.b16 %v1692, %v1690
      %v2539 = vpack.c.b16 %v1695, %v1693
      %v2540 = vpack.c.b16 %v1696, %v1694
      %v2541 = vpack.c.b16 %v1699, %v1697
      %v2542 = vpack.c.b16 %v1700, %v1698
      %v2543 = vpack.c.b16 %v1703, %v1701
      %v2544 = vpack.c.b16 %v1704, %v1702
      %v2545 = vpack.c.b16 %v1707, %v1705
      %v2546 = vpack.c.b16 %v1708, %v1706
      %v2547 = vpack.c.b16 %v1711, %v1709
      %v2548 = vpack.c.b16 %v1712, %v1710
      %v2549 = vpack.c.b16 %v1715, %v1713
      %v2550 = vpack.c.b16 %v1716, %v1714
      %v2551 = vpack.c.b16 %v1719, %v1717
      %v2552 = vpack.c.b16 %v1720, %v1718
      %v2553 = vpack.c.b16 %v1723, %v1721
      %v2554 = vpack.c.b16 %v1724, %v1722
      %v2555 = vpack.c.b16 %v1727, %v1725
      %v2556 = vpack.c.b16 %v1728, %v1726
      %v2557 = vpack.c.b16 %v1731, %v1729
      %v2558 = vpack.c.b16 %v1732, %v1730
      %v2559 = vpack.c.b16 %v1735, %v1733
      %v2560 = vpack.c.b16 %v1736, %v1734
      %v2561 = vpack.c.b16 %v1739, %v1737
      %v2562 = vpack.c.b16 %v1740, %v1738
      %v2563 = vpack.c.b16 %v1743, %v1741
      %v2564 = vpack.c.b16 %v1744, %v1742
      %v2565 = vpack.c.b16 %v1747, %v1745
      %v2566 = vpack.c.b16 %v1748, %v1746
      %v2567 = vpack.c.b16 %v1751, %v1749
      %v2568 = vpack.c.b16 %v1752, %v1750
      %v2569 = vpack.c.b16 %v1755, %v1753
      %v2570 = vpack.c.b16 %v1756, %v1754
      %v2571 = vpack.c.b16 %v1759, %v1757
      %v2572 = vpack.c.b16 %v1760, %v1758
      %v2573 = vpack.c.b16 %v1763, %v1761
      %v2574 = vpack.c.b16 %v1764, %v1762
      %v2575 = vpack.c.b16 %v1767, %v1765
      %v2576 = vpack.c.b16 %v1768, %v1766
      %v2577 = vpack.c.b16 %v1771, %v1769
      %v2578 = vpack.c.b16 %v1772, %v1770
      %v2579 = vpack.c.b16 %v1775, %v1773
      %v2580 = vpack.c.b16 %v1776, %v1774
      %v2581 = vpack.c.b16 %v1779, %v1777
      %v2582 = vpack.c.b16 %v1780, %v1778
      %v2583 = vpack.c.b16 %v1783, %v1781
      %v2584 = vpack.c.b16 %v1784, %v1782
      %v2585 = vpack.c.b16 %v1787, %v1785
      %v2586 = vpack.c.b16 %v1788, %v1786
      %v2587 = vpack.c.b16 %v1791, %v1789
      %v2588 = vpack.c.b16 %v1792, %v1790
      %v2589 = vpack.c.b16 %v1795, %v1793
      %v2590 = vpack.c.b16 %v1796, %v1794
      %v2591 = vpack.c.b16 %v1799, %v1797
      %v2592 = vpack.c.b16 %v1800, %v1798
      %v2593 = vpack.c.b16 %v1803, %v1801
      %v2594 = vpack.c.b16 %v1804, %v1802
      %v2595 = vpack.c.b16 %v1807, %v1805
      %v2596 = vpack.c.b16 %v1808, %v1806
      %v2597 = vpack.c.b16 %v1811, %v1809
      %v2598 = vpack.c.b16 %v1812, %v1810
      %v2599 = vpack.c.b16 %v1815, %v1813
      %v2600 = vpack.c.b16 %v1816, %v1814
      %v2601 = vpack.c.b16 %v1819, %v1817
      %v2602 = vpack.c.b16 %v1820, %v1818
      %v2603 = vpack.c.b16 %v1823, %v1821
      %v2604 = vpack.c.b16 %v1824, %v1822
      %v2605 = vpack.c.b16 %v1827, %v1825
      %v2606 = vpack.c.b16 %v1828, %v1826
      %v2607 = vpack.c.b16 %v1831, %v1829
      %v2608 = vpack.c.b16 %v1832, %v1830
      %v2609 = vpack.c.b16 %v1835, %v1833
      %v2610 = vpack.c.b16 %v1836, %v1834
      %v2611 = vpack.c.b16 %v1839, %v1837
      %v2612 = vpack.c.b16 %v1840, %v1838
      %v2613 = vpack.c.b16 %v1843, %v1841
      %v2614 = vpack.c.b16 %v1844, %v1842
      %v2615 = vpack.c.b16 %v1847, %v1845
      %v2616 = vpack.c.b16 %v1848, %v1846
      %v2617 = vpack.c.b16 %v1851, %v1849
      %v2618 = vpack.c.b16 %v1852, %v1850
      %v2619 = vpack.c.b16 %v1855, %v1853
      %v2620 = vpack.c.b16 %v1856, %v1854
      %v2621 = vpack.c.b16 %v1859, %v1857
      %v2622 = vpack.c.b16 %v1860, %v1858
      %v2623 = vpack.c.b16 %v1863, %v1861
      %v2624 = vpack.c.b16 %v1864, %v1862
      %v2625 = vpack.c.b16 %v1867, %v1865
      %v2626 = vpack.c.b16 %v1868, %v1866
      %v2627 = vpack.c.b16 %v1871, %v1869
      %v2628 = vpack.c.b16 %v1872, %v1870
      %v2629 = vpack.c.b16 %v1875, %v1873
      %v2630 = vpack.c.b16 %v1876, %v1874
      %v2631 = vpack.c.b16 %v1879, %v1877
      %v2632 = vpack.c.b16 %v1880, %v1878
      %v2633 = vpack.c.b16 %v1883, %v1881
      %v2634 = vpack.c.b16 %v1884, %v1882
      %v2635 = vpack.c.b16 %v1887, %v1885
      %v2636 = vpack.c.b16 %v1888, %v1886
      %v2637 = vpack.c.b16 %v1891, %v1889
      %v2638 = vpack.c.b16 %v1892, %v1890
      %v2639 = vpack.c.b16 %v1895, %v1893
      %v2640 = vpack.c.b16 %v1896, %v1894
      %v2641 = vpack.c.b16 %v1899, %v1897
      %v2642 = vpack.c.b16 %v1900, %v1898
      %v2643 = vpack.c.b16 %v1903, %v1901
      %v2644 = vpack.c.b16 %v1904, %v1902
      %v2645 = vpack.c.b16 %v1907, %v1905
      %v2646 = vpack.c.b16 %v1908, %v1906
      %v2647 = vpack.c.b16 %v1911, %v1909
      %v2648 = vpack.c.b16 %v1912, %v1910
      %v2649 = vpack.c.b16 %v1915, %v1913
      %v2650 = vpack.c.b16 %v1916, %v1914
      %v2651 = vpack.c.b16 %v1919, %v1917
      %v2652 = vpack.c.b16 %v1920, %v1918
      %v2653 = vpack.c.b16 %v1923, %v1921
      %v2654 = vpack.c.b16 %v1924, %v1922
      %v2655 = vpack.c.b16 %v1927, %v1925
      %v2656 = vpack.c.b16 %v1928, %v1926
      %v2657 = vpack.c.b16 %v1931, %v1929
      %v2658 = vpack.c.b16 %v1932, %v1930
      %v2659 = vpack.c.b16 %v1935, %v1933
      %v2660 = vpack.c.b16 %v1936, %v1934
      %v2661 = vpack.c.b16 %v1939, %v1937
      %v2662 = vpack.c.b16 %v1940, %v1938
      %v2663 = vpack.c.b16 %v1943, %v1941
      %v2664 = vpack.c.b16 %v1944, %v1942
      %v2665 = vpack.c.b16 %v1947, %v1945
      %v2666 = vpack.c.b16 %v1948, %v1946
      %v2667 = vpack.c.b16 %v1951, %v1949
      %v2668 = vpack.c.b16 %v1952, %v1950
      %v2669 = vpack.c.b16 %v1955, %v1953
      %v2670 = vpack.c.b16 %v1956, %v1954
      %v2671 = vpack.c.b16 %v1959, %v1957
      %v2672 = vpack.c.b16 %v1960, %v1958
      %v2673 = vpack.c.b16 %v1963, %v1961
      %v2674 = vpack.c.b16 %v1964, %v1962
      %v2675 = vpack.c.b16 %v1967, %v1965
      %v2676 = vpack.c.b16 %v1968, %v1966
      %v2677 = vpack.c.b16 %v1971, %v1969
      %v2678 = vpack.c.b16 %v1972, %v1970
      %v2679 = vpack.c.b16 %v1975, %v1973
      %v2680 = vpack.c.b16 %v1976, %v1974
      %v2681 = vpack.c.b16 %v1979, %v1977
      %v2682 = vpack.c.b16 %v1980, %v1978
      %v2683 = vpack.c.b16 %v1983, %v1981
      %v2684 = vpack.c.b16 %v1984, %v1982
      %v2685 = vpack.c.b16 %v1987, %v1985
      %v2686 = vpack.c.b16 %v1988, %v1986
      %v2687 = vpack.c.b16 %v1991, %v1989
      %v2688 = vpack.c.b16 %v1992, %v1990
      %v2689 = vpack.c.b16 %v1995, %v1993
      %v2690 = vpack.c.b16 %v1996, %v1994
      %v2691 = vpack.c.b16 %v1999, %v1997
      %v2692 = vpack.c.b16 %v2000, %v1998
      %v2693 = vpack.c.b16 %v2003, %v2001
      %v2694 = vpack.c.b16 %v2004, %v2002
      %v2695 = vpack.c.b16 %v2007, %v2005
      %v2696 = vpack.c.b16 %v2008, %v2006
      %v2697 = vpack.c.b16 %v2011, %v2009
      %v2698 = vpack.c.b16 %v2012, %v2010
      %v2699 = vpack.c.b16 %v2015, %v2013
      %v2700 = vpack.c.b16 %v2016, %v2014
      %v2701 = vpack.c.b16 %v2019, %v2017
      %v2702 = vpack.c.b16 %v2020, %v2018
      %v2703 = vpack.c.b16 %v2023, %v2021
      %v2704 = vpack.c.b16 %v2024, %v2022
      %v2705 = vpack.c.b16 %v2027, %v2025
      %v2706 = vpack.c.b16 %v2028, %v2026
      %v2707 = vpack.c.b16 %v2031, %v2029
      %v2708 = vpack.c.b16 %v2032, %v2030
      %v2709 = vpack.c.b16 %v2035, %v2033
      %v2710 = vpack.c.b16 %v2036, %v2034
      %v2711 = vpack.c.b16 %v2039, %v2037
      %v2712 = vpack.c.b16 %v2040, %v2038
      %v2713 = vpack.c.b16 %v2043, %v2041
      %v2714 = vpack.c.b16 %v2044, %v2042
      %v2715 = vpack.c.b16 %v2047, %v2045
      %v2716 = vpack.c.b16 %v2048, %v2046
      %v2717 = vpack.c.b16 %v2051, %v2049
      %v2718 = vpack.c.b16 %v2052, %v2050
      %v2719 = vpack.c.b16 %v2055, %v2053
      %v2720 = vpack.c.b16 %v2056, %v2054
      %v2721 = vpack.c.b16 %v2059, %v2057
      %v2722 = vpack.c.b16 %v2060, %v2058
      %v2723 = vpack.c.b16 %v2063, %v2061
      %v2724 = vpack.c.b16 %v2064, %v2062
      %v2725 = vpack.c.b16 %v2067, %v2065
      %v2726 = vpack.c.b16 %v2068, %v2066
      %v2727 = vpack.c.b16 %v2071, %v2069
      %v2728 = vpack.c.b16 %v2072, %v2070
      %v2729 = vpack.c.b16 %v2075, %v2073
      %v2730 = vpack.c.b16 %v2076, %v2074
      %v2731 = vpack.c.b16 %v2079, %v2077
      %v2732 = vpack.c.b16 %v2080, %v2078
      %v2733 = vpack.c.b16 %v2083, %v2081
      %v2734 = vpack.c.b16 %v2084, %v2082
      %v2735 = vpack.c.b16 %v2087, %v2085
      %v2736 = vpack.c.b16 %v2088, %v2086
      %v2737 = vpack.c.b16 %v2091, %v2089
      %v2738 = vpack.c.b16 %v2092, %v2090
      %v2739 = vpack.c.b16 %v2095, %v2093
      %v2740 = vpack.c.b16 %v2096, %v2094
      %v2741 = vpack.c.b16 %v2099, %v2097
      %v2742 = vpack.c.b16 %v2100, %v2098
      %v2743 = vpack.c.b16 %v2103, %v2101
      %v2744 = vpack.c.b16 %v2104, %v2102
      %v2745 = vpack.c.b16 %v2107, %v2105
      %v2746 = vpack.c.b16 %v2108, %v2106
      %v2747 = vpack.c.b16 %v2111, %v2109
      %v2748 = vpack.c.b16 %v2112, %v2110
      %v2749 = vpack.c.b16 %v2115, %v2113
      %v2750 = vpack.c.b16 %v2116, %v2114
      %v2751 = vpack.c.b16 %v2119, %v2117
      %v2752 = vpack.c.b16 %v2120, %v2118
      %v2753 = vpack.c.b16 %v2123, %v2121
      %v2754 = vpack.c.b16 %v2124, %v2122
      %v2755 = vpack.c.b16 %v2127, %v2125
      %v2756 = vpack.c.b16 %v2128, %v2126
      %v2757 = vpack.c.b16 %v2131, %v2129
      %v2758 = vpack.c.b16 %v2132, %v2130
      %v2759 = vpack.c.b16 %v2135, %v2133
      %v2760 = vpack.c.b16 %v2136, %v2134
      %v2761 = vpack.c.b16 %v2139, %v2137
      %v2762 = vpack.c.b16 %v2140, %v2138
      %v2763 = vpack.c.b16 %v2143, %v2141
      %v2764 = vpack.c.b16 %v2144, %v2142
      %v2765 = vpack.c.b16 %v2147, %v2145
      %v2766 = vpack.c.b16 %v2148, %v2146
      %v2767 = vpack.c.b16 %v2151, %v2149
      %v2768 = vpack.c.b16 %v2152, %v2150
      %v2769 = vpack.c.b16 %v2155, %v2153
      %v2770 = vpack.c.b16 %v2156, %v2154
      %v2771 = vpack.c.b16 %v2159, %v2157
      %v2772 = vpack.c.b16 %v2160, %v2158
      %v2773 = vpack.c.b16 %v2163, %v2161
      %v2774 = vpack.c.b16 %v2164, %v2162
      %v2775 = vpack.c.b16 %v2167, %v2165
      %v2776 = vpack.c.b16 %v2168, %v2166
      %v2777 = vpack.c.b16 %v2171, %v2169
      %v2778 = vpack.c.b16 %v2172, %v2170
      %v2779 = vpack.c.b16 %v2175, %v2173
      %v2780 = vpack.c.b16 %v2176, %v2174
      %v2781 = vpack.c.b16 %v2179, %v2177
      %v2782 = vpack.c.b16 %v2180, %v2178
      %v2783 = vpack.c.b16 %v2183, %v2181
      %v2784 = vpack.c.b16 %v2184, %v2182
      %v2785 = vpack.c.b16 %v2187, %v2185
      %v2786 = vpack.c.b16 %v2188, %v2186
      %v2787 = vpack.c.b16 %v2191, %v2189
      %v2788 = vpack.c.b16 %v2192, %v2190
      %v2789 = vpack.c.b16 %v2195, %v2193
      %v2790 = vpack.c.b16 %v2196, %v2194
      %v2791 = vpack.c.b16 %v2199, %v2197
      %v2792 = vpack.c.b16 %v2200, %v2198
      %v2793 = vpack.c.b16 %v2203, %v2201
      %v2794 = vpack.c.b16 %v2204, %v2202
      %v2795 = vpack.c.b16 %v2207, %v2205
      %v2796 = vpack.c.b16 %v2208, %v2206
      %v2797 = vpack.c.b16 %v2211, %v2209
      %v2798 = vpack.c.b16 %v2212, %v2210
      %v2799 = vpack.c.b16 %v2215, %v2213
      %v2800 = vpack.c.b16 %v2216, %v2214
      %v2801 = vpack.c.b16 %v2219, %v2217
      %v2802 = vpack.c.b16 %v2220, %v2218
      %v2803 = vpack.c.b16 %v2223, %v2221
      %v2804 = vpack.c.b16 %v2224, %v2222
      %v2805 = vpack.c.b16 %v2227, %v2225
      %v2806 = vpack.c.b16 %v2228, %v2226
      %v2807 = vpack.c.b16 %v2231, %v2229
      %v2808 = vpack.c.b16 %v2232, %v2230
      %v2809 = vpack.c.b16 %v2235, %v2233
      %v2810 = vpack.c.b16 %v2236, %v2234
      %v2811 = vpack.c.b16 %v2239, %v2237
      %v2812 = vpack.c.b16 %v2240, %v2238
      %v2813 = vpack.c.b16 %v2243, %v2241
      %v2814 = vpack.c.b16 %v2244, %v2242
      %v2815 = vpack.c.b16 %v2247, %v2245
      %v2816 = vpack.c.b16 %v2248, %v2246
      %v2817 = vpack.c.b16 %v2251, %v2249
      %v2818 = vpack.c.b16 %v2252, %v2250
      %v2819 = vpack.c.b16 %v2255, %v2253
      %v2820 = vpack.c.b16 %v2256, %v2254
      %v2821 = vpack.c.b16 %v2259, %v2257
      %v2822 = vpack.c.b16 %v2260, %v2258
      %v2823 = vpack.c.b16 %v2263, %v2261
      %v2824 = vpack.c.b16 %v2264, %v2262
      %v2825 = vpack.c.b16 %v2267, %v2265
      %v2826 = vpack.c.b16 %v2268, %v2266
      %v2827 = vpack.c.b16 %v2271, %v2269
      %v2828 = vpack.c.b16 %v2272, %v2270
      %v2829 = vpack.c.b16 %v2275, %v2273
      %v2830 = vpack.c.b16 %v2276, %v2274
      %v2831 = vpack.c.b16 %v2279, %v2277
      %v2832 = vpack.c.b16 %v2280, %v2278
      %v2833 = vpack.c.b16 %v2283, %v2281
      %v2834 = vpack.c.b16 %v2284, %v2282
      %v2835 = vpack.c.b16 %v2287, %v2285
      %v2836 = vpack.c.b16 %v2288, %v2286
      %v2837 = vpack.c.b16 %v2291, %v2289
      %v2838 = vpack.c.b16 %v2292, %v2290
      %v2839 = vpack.c.b16 %v2295, %v2293
      %v2840 = vpack.c.b16 %v2296, %v2294
      %v2841 = vpack.c.b16 %v2299, %v2297
      %v2842 = vpack.c.b16 %v2300, %v2298
      %v2843 = vpack.c.b16 %v2303, %v2301
      %v2844 = vpack.c.b16 %v2304, %v2302
      %v2845 = vpack.c.b16 %v2307, %v2305
      %v2846 = vpack.c.b16 %v2308, %v2306
      %v2847 = vpack.c.b16 %v2311, %v2309
      %v2848 = vpack.c.b16 %v2312, %v2310
      %v2849 = vpack.c.b16 %v2315, %v2313
      %v2850 = vpack.c.b16 %v2316, %v2314
      %v2851 = vpack.c.b16 %v2319, %v2317
      %v2852 = vpack.c.b16 %v2320, %v2318
      %v2853 = vpack.c.b16 %v2323, %v2321
      %v2854 = vpack.c.b16 %v2324, %v2322
      %v2855 = vpack.c.b16 %v2327, %v2325
      %v2856 = vpack.c.b16 %v2328, %v2326
      %v2857 = vpack.c.b16 %v2331, %v2329
      %v2858 = vpack.c.b16 %v2332, %v2330
      %v2859 = vpack.c.b16 %v2335, %v2333
      %v2860 = vpack.c.b16 %v2336, %v2334
      %v2861 = vpack.c.b16 %v2339, %v2337
      %v2862 = vpack.c.b16 %v2340, %v2338
      %v2863 = vpack.c.b16 %v2343, %v2341
      %v2864 = vpack.c.b16 %v2344, %v2342
      %v2865 = vpack.c.b16 %v2347, %v2345
      %v2866 = vpack.c.b16 %v2348, %v2346
      %v2867 = vpack.c.b16 %v2351, %v2349
      %v2868 = vpack.c.b16 %v2352, %v2350
      %v2869 = vpack.c.b16 %v2355, %v2353
      %v2870 = vpack.c.b16 %v2356, %v2354
      %v2871 = vpack.c.b16 %v2359, %v2357
      %v2872 = vpack.c.b16 %v2360, %v2358
      %v2873 = vpack.c.b16 %v2363, %v2361
      %v2874 = vpack.c.b16 %v2364, %v2362
      %v2875 = vpack.c.b16 %v2367, %v2365
      %v2876 = vpack.c.b16 %v2368, %v2366
      %v2877 = vpack.c.b16 %v2371, %v2369
      %v2878 = vpack.c.b16 %v2372, %v2370
      %v2879 = vpack.c.b16 %v2375, %v2373
      %v2880 = vpack.c.b16 %v2376, %v2374
      %v2881 = vpack.c.b16 %v2379, %v2377
      %v2882 = vpack.c.b16 %v2380, %v2378
      %v2883 = vpack.c.b16 %v2383, %v2381
      %v2884 = vpack.c.b16 %v2384, %v2382
      %vm3385 = vcmask 261120
      %v3387 = vsel %vm3385, %v853, 0
      %3389 = vmatprep.subr.bf16.mxu0 %v2386
      %3390 = vmatpush1.bf16.msra.mxu0 %v2385
      %3391 = vmatprep.subr.bf16.mxu0 %v2388
      %3392 = vmatpush1.bf16.msra.mxu0 %v2387
      %3393 = vmatprep.subr.bf16.mxu0 %v2390
      %3394 = vmatpush1.bf16.msra.mxu0 %v2389
      %3395 = vmatprep.subr.bf16.mxu0 %v2392
      %3396 = vmatpush1.bf16.msra.mxu0 %v2391
      %3397 = vmatprep.subr.bf16.mxu0 %v2394
      %3398 = vmatpush1.bf16.msra.mxu0 %v2393
      %3399 = vmatprep.subr.bf16.mxu0 %v2396
      %3400 = vmatpush1.bf16.msra.mxu0 %v2395
      %3401 = vmatprep.subr.bf16.mxu0 %v2398
      %3402 = vmatpush1.bf16.msra.mxu0 %v2397
      %3403 = vmatprep.subr.bf16.mxu0 %v2400
      %3404 = vmatpush1.bf16.msra.mxu0 %v2399
      %3405 = vmatprep.subr.bf16.mxu0 %v2402
      %3406 = vmatpush1.bf16.msra.mxu0 %v2401
      %3407 = vmatprep.subr.bf16.mxu0 %v2404
      %3408 = vmatpush1.bf16.msra.mxu0 %v2403
      %3409 = vmatprep.subr.bf16.mxu0 %v2406
      %3410 = vmatpush1.bf16.msra.mxu0 %v2405
      %3411 = vmatprep.subr.bf16.mxu0 %v2408
      %3412 = vmatpush1.bf16.msra.mxu0 %v2407
      %3413 = vmatprep.subr.bf16.mxu0 %v2410
      %3414 = vmatpush1.bf16.msra.mxu0 %v2409
      %3415 = vmatprep.subr.bf16.mxu0 %v2412
      %3416 = vmatpush1.bf16.msra.mxu0 %v2411
      %3417 = vmatprep.subr.bf16.mxu0 %v2414
      %3418 = vmatpush1.bf16.msra.mxu0 %v2413
      %3419 = vmatprep.subr.bf16.mxu0 %v2416
      %3420 = vmatpush1.bf16.msra.mxu0 %v2415
      %3421 = vmatprep.mubr.bf16.mxu0 %v823
      %3422 = vmatmul.mubr.bf16.gmra.mrb[0].mxu0 %v822
      %v3423 = vpop.f32.mrb[0].mxu0
      %v3424 = vadd.f32 %v767, %v3423
      %v3425 = vpop.f32.mrb[0].mxu0
      %v3426 = vadd.f32 %v771, %v3425
      %v3427 = vpop.f32.mrb[0].mxu0
      %v3428 = vpop.f32.mrb[0].mxu0
      %3429 = vdwg.mxu0
      %3430 = vmatprep.subr.bf16.mxu0 %v2418
      %3431 = vmatpush1.bf16.msra.mxu0 %v2417
      %3432 = vmatprep.subr.bf16.mxu0 %v2420
      %3433 = vmatpush1.bf16.msra.mxu0 %v2419
      %3434 = vmatprep.subr.bf16.mxu0 %v2422
      %3435 = vmatpush1.bf16.msra.mxu0 %v2421
      %3436 = vmatprep.subr.bf16.mxu0 %v2424
      %3437 = vmatpush1.bf16.msra.mxu0 %v2423
      %3438 = vmatprep.subr.bf16.mxu0 %v2426
      %3439 = vmatpush1.bf16.msra.mxu0 %v2425
      %3440 = vmatprep.subr.bf16.mxu0 %v2428
      %3441 = vmatpush1.bf16.msra.mxu0 %v2427
      %3442 = vmatprep.subr.bf16.mxu0 %v2430
      %3443 = vmatpush1.bf16.msra.mxu0 %v2429
      %3444 = vmatprep.subr.bf16.mxu0 %v2432
      %3445 = vmatpush1.bf16.msra.mxu0 %v2431
      %3446 = vmatprep.subr.bf16.mxu0 %v2434
      %3447 = vmatpush1.bf16.msra.mxu0 %v2433
      %3448 = vmatprep.subr.bf16.mxu0 %v2436
      %3449 = vmatpush1.bf16.msra.mxu0 %v2435
      %3450 = vmatprep.subr.bf16.mxu0 %v2438
      %3451 = vmatpush1.bf16.msra.mxu0 %v2437
      %3452 = vmatprep.subr.bf16.mxu0 %v2440
      %3453 = vmatpush1.bf16.msra.mxu0 %v2439
      %3454 = vmatprep.subr.bf16.mxu0 %v2442
      %3455 = vmatpush1.bf16.msra.mxu0 %v2441
      %3456 = vmatprep.subr.bf16.mxu0 %v2444
      %3457 = vmatpush1.bf16.msra.mxu0 %v2443
      %3458 = vmatprep.subr.bf16.mxu0 %v2446
      %3459 = vmatpush1.bf16.msra.mxu0 %v2445
      %3460 = vmatprep.subr.bf16.mxu0 %v2448
      %3461 = vmatpush1.bf16.msra.mxu0 %v2447
      %3462 = vmatprep.mubr.bf16.mxu0 %v825
      %3463 = vmatmul.mubr.bf16.gmra.mrb[0].mxu0 %v824
      %v3464 = vpop.f32.mrb[0].mxu0
      %v3465 = vadd.f32 %v3424, %v3464
      %v3466 = vpop.f32.mrb[0].mxu0
      %v3467 = vadd.f32 %v3426, %v3466
      %v3468 = vpop.f32.mrb[0].mxu0
      %v3469 = vpop.f32.mrb[0].mxu0
      %3470 = vdwg.mxu0
      %3471 = vmatprep.subr.bf16.mxu0 %v2450
      %3472 = vmatpush1.bf16.msra.mxu0 %v2449
      %3473 = vmatprep.subr.bf16.mxu0 %v2452
      %3474 = vmatpush1.bf16.msra.mxu0 %v2451
      %3475 = vmatprep.subr.bf16.mxu0 %v2454
      %3476 = vmatpush1.bf16.msra.mxu0 %v2453
      %3477 = vmatprep.subr.bf16.mxu0 %v2456
      %3478 = vmatpush1.bf16.msra.mxu0 %v2455
      %3479 = vmatprep.subr.bf16.mxu0 %v2458
      %3480 = vmatpush1.bf16.msra.mxu0 %v2457
      %3481 = vmatprep.subr.bf16.mxu0 %v2460
      %3482 = vmatpush1.bf16.msra.mxu0 %v2459
      %3483 = vmatprep.subr.bf16.mxu0 %v2462
      %3484 = vmatpush1.bf16.msra.mxu0 %v2461
      %3485 = vmatprep.subr.bf16.mxu0 %v2464
      %3486 = vmatpush1.bf16.msra.mxu0 %v2463
      %3487 = vmatprep.subr.bf16.mxu0 %v2466
      %3488 = vmatpush1.bf16.msra.mxu0 %v2465
      %3489 = vmatprep.subr.bf16.mxu0 %v2468
      %3490 = vmatpush1.bf16.msra.mxu0 %v2467
      %3491 = vmatprep.subr.bf16.mxu0 %v2470
      %3492 = vmatpush1.bf16.msra.mxu0 %v2469
      %3493 = vmatprep.subr.bf16.mxu0 %v2472
      %3494 = vmatpush1.bf16.msra.mxu0 %v2471
      %3495 = vmatprep.subr.bf16.mxu0 %v2474
      %3496 = vmatpush1.bf16.msra.mxu0 %v2473
      %3497 = vmatprep.subr.bf16.mxu0 %v2476
      %3498 = vmatpush1.bf16.msra.mxu0 %v2475
      %3499 = vmatprep.subr.bf16.mxu0 %v2478
      %3500 = vmatpush1.bf16.msra.mxu0 %v2477
      %3501 = vmatprep.subr.bf16.mxu0 %v2480
      %3502 = vmatpush1.bf16.msra.mxu0 %v2479
      %3503 = vmatprep.mubr.bf16.mxu0 %v827
      %3504 = vmatmul.mubr.bf16.gmra.mrb[0].mxu0 %v826
      %v3505 = vpop.f32.mrb[0].mxu0
      %v3506 = vadd.f32 %v3465, %v3505
      %v3507 = vpop.f32.mrb[0].mxu0
      %v3508 = vadd.f32 %v3467, %v3507
      %v3509 = vpop.f32.mrb[0].mxu0
      %v3510 = vpop.f32.mrb[0].mxu0
      %3511 = vdwg.mxu0
      %3512 = vmatprep.subr.bf16.mxu0 %v2482
      %3513 = vmatpush1.bf16.msra.mxu0 %v2481
      %3514 = vmatprep.subr.bf16.mxu0 %v2484
      %3515 = vmatpush1.bf16.msra.mxu0 %v2483
      %3516 = vmatprep.subr.bf16.mxu0 %v2486
      %3517 = vmatpush1.bf16.msra.mxu0 %v2485
      %3518 = vmatprep.subr.bf16.mxu0 %v2488
      %3519 = vmatpush1.bf16.msra.mxu0 %v2487
      %3520 = vmatprep.subr.bf16.mxu0 %v2490
      %3521 = vmatpush1.bf16.msra.mxu0 %v2489
      %3522 = vmatprep.subr.bf16.mxu0 %v2492
      %3523 = vmatpush1.bf16.msra.mxu0 %v2491
      %3524 = vmatprep.subr.bf16.mxu0 %v2494
      %3525 = vmatpush1.bf16.msra.mxu0 %v2493
      %3526 = vmatprep.subr.bf16.mxu0 %v2496
      %3527 = vmatpush1.bf16.msra.mxu0 %v2495
      %3528 = vmatprep.subr.bf16.mxu0 %v2498
      %3529 = vmatpush1.bf16.msra.mxu0 %v2497
      %3530 = vmatprep.subr.bf16.mxu0 %v2500
      %3531 = vmatpush1.bf16.msra.mxu0 %v2499
      %3532 = vmatprep.subr.bf16.mxu0 %v2502
      %3533 = vmatpush1.bf16.msra.mxu0 %v2501
      %3534 = vmatprep.subr.bf16.mxu0 %v2504
      %3535 = vmatpush1.bf16.msra.mxu0 %v2503
      %3536 = vmatprep.subr.bf16.mxu0 %v2506
      %3537 = vmatpush1.bf16.msra.mxu0 %v2505
      %3538 = vmatprep.subr.bf16.mxu0 %v2508
      %3539 = vmatpush1.bf16.msra.mxu0 %v2507
      %3540 = vmatprep.subr.bf16.mxu0 %v2510
      %3541 = vmatpush1.bf16.msra.mxu0 %v2509
      %3542 = vmatprep.subr.bf16.mxu0 %v2512
      %3543 = vmatpush1.bf16.msra.mxu0 %v2511
      %3544 = vmatprep.mubr.bf16.mxu0 %v829
      %3545 = vmatmul.mubr.bf16.gmra.mrb[0].mxu0 %v828
      %v3546 = vpop.f32.mrb[0].mxu0
      %v3547 = vadd.f32 %v3506, %v3546
      %v3548 = vpop.f32.mrb[0].mxu0
      %v3549 = vadd.f32 %v3508, %v3548
      %v3550 = vpop.f32.mrb[0].mxu0
      %v3551 = vpop.f32.mrb[0].mxu0
      %3552 = vdwg.mxu0
      %3553 = vmatprep.subr.bf16.mxu0 %v2514
      %3554 = vmatpush1.bf16.msra.mxu0 %v2513
      %3555 = vmatprep.subr.bf16.mxu0 %v2516
      %3556 = vmatpush1.bf16.msra.mxu0 %v2515
      %3557 = vmatprep.subr.bf16.mxu0 %v2518
      %3558 = vmatpush1.bf16.msra.mxu0 %v2517
      %3559 = vmatprep.subr.bf16.mxu0 %v2520
      %3560 = vmatpush1.bf16.msra.mxu0 %v2519
      %3561 = vmatprep.subr.bf16.mxu0 %v2522
      %3562 = vmatpush1.bf16.msra.mxu0 %v2521
      %3563 = vmatprep.subr.bf16.mxu0 %v2524
      %3564 = vmatpush1.bf16.msra.mxu0 %v2523
      %3565 = vmatprep.subr.bf16.mxu0 %v2526
      %3566 = vmatpush1.bf16.msra.mxu0 %v2525
      %3567 = vmatprep.subr.bf16.mxu0 %v2528
      %3568 = vmatpush1.bf16.msra.mxu0 %v2527
      %3569 = vmatprep.subr.bf16.mxu0 %v2530
      %3570 = vmatpush1.bf16.msra.mxu0 %v2529
      %3571 = vmatprep.subr.bf16.mxu0 %v2532
      %3572 = vmatpush1.bf16.msra.mxu0 %v2531
      %3573 = vmatprep.subr.bf16.mxu0 %v2534
      %3574 = vmatpush1.bf16.msra.mxu0 %v2533
      %3575 = vmatprep.subr.bf16.mxu0 %v2536
      %3576 = vmatpush1.bf16.msra.mxu0 %v2535
      %3577 = vmatprep.subr.bf16.mxu0 %v2538
      %3578 = vmatpush1.bf16.msra.mxu0 %v2537
      %3579 = vmatprep.subr.bf16.mxu0 %v2540
      %3580 = vmatpush1.bf16.msra.mxu0 %v2539
      %3581 = vmatprep.subr.bf16.mxu0 %v2542
      %3582 = vmatpush1.bf16.msra.mxu0 %v2541
      %3583 = vmatprep.subr.bf16.mxu0 %v2544
      %3584 = vmatpush1.bf16.msra.mxu0 %v2543
      %3585 = vmatprep.mubr.bf16.mxu0 %v831
      %3586 = vmatmul.mubr.bf16.gmra.mrb[0].mxu0 %v830
      %v3587 = vpop.f32.mrb[0].mxu0
      %v3588 = vadd.f32 %v3547, %v3587
      %v3589 = vpop.f32.mrb[0].mxu0
      %v3590 = vadd.f32 %v3549, %v3589
      %v3591 = vpop.f32.mrb[0].mxu0
      %v3592 = vpop.f32.mrb[0].mxu0
      %3593 = vdwg.mxu0
      %3594 = vmatprep.subr.bf16.mxu0 %v2546
      %3595 = vmatpush1.bf16.msra.mxu0 %v2545
      %3596 = vmatprep.subr.bf16.mxu0 %v2548
      %3597 = vmatpush1.bf16.msra.mxu0 %v2547
      %3598 = vmatprep.subr.bf16.mxu0 %v2550
      %3599 = vmatpush1.bf16.msra.mxu0 %v2549
      %3600 = vmatprep.subr.bf16.mxu0 %v2552
      %3601 = vmatpush1.bf16.msra.mxu0 %v2551
      %3602 = vmatprep.subr.bf16.mxu0 %v2554
      %3603 = vmatpush1.bf16.msra.mxu0 %v2553
      %3604 = vmatprep.subr.bf16.mxu0 %v2556
      %3605 = vmatpush1.bf16.msra.mxu0 %v2555
      %3606 = vmatprep.subr.bf16.mxu0 %v2558
      %3607 = vmatpush1.bf16.msra.mxu0 %v2557
      %3608 = vmatprep.subr.bf16.mxu0 %v2560
      %3609 = vmatpush1.bf16.msra.mxu0 %v2559
      %3610 = vmatprep.subr.bf16.mxu0 %v2562
      %3611 = vmatpush1.bf16.msra.mxu0 %v2561
      %3612 = vmatprep.subr.bf16.mxu0 %v2564
      %3613 = vmatpush1.bf16.msra.mxu0 %v2563
      %3614 = vmatprep.subr.bf16.mxu0 %v2566
      %3615 = vmatpush1.bf16.msra.mxu0 %v2565
      %3616 = vmatprep.subr.bf16.mxu0 %v2568
      %3617 = vmatpush1.bf16.msra.mxu0 %v2567
      %3618 = vmatprep.subr.bf16.mxu0 %v2570
      %3619 = vmatpush1.bf16.msra.mxu0 %v2569
      %3620 = vmatprep.subr.bf16.mxu0 %v2572
      %3621 = vmatpush1.bf16.msra.mxu0 %v2571
      %3622 = vmatprep.subr.bf16.mxu0 %v2574
      %3623 = vmatpush1.bf16.msra.mxu0 %v2573
      %3624 = vmatprep.subr.bf16.mxu0 %v2576
      %3625 = vmatpush1.bf16.msra.mxu0 %v2575
      %3626 = vmatprep.mubr.bf16.mxu0 %v833
      %3627 = vmatmul.mubr.bf16.gmra.mrb[0].mxu0 %v832
      %v3628 = vpop.f32.mrb[0].mxu0
      %v3629 = vadd.f32 %v3588, %v3628
      %v3630 = vpop.f32.mrb[0].mxu0
      %v3631 = vadd.f32 %v3590, %v3630
      %v3632 = vpop.f32.mrb[0].mxu0
      %v3633 = vpop.f32.mrb[0].mxu0
      %3634 = vdwg.mxu0
      %3635 = vmatprep.subr.bf16.mxu0 %v2578
      %3636 = vmatpush1.bf16.msra.mxu0 %v2577
      %3637 = vmatprep.subr.bf16.mxu0 %v2580
      %3638 = vmatpush1.bf16.msra.mxu0 %v2579
      %3639 = vmatprep.subr.bf16.mxu0 %v2582
      %3640 = vmatpush1.bf16.msra.mxu0 %v2581
      %3641 = vmatprep.subr.bf16.mxu0 %v2584
      %3642 = vmatpush1.bf16.msra.mxu0 %v2583
      %3643 = vmatprep.subr.bf16.mxu0 %v2586
      %3644 = vmatpush1.bf16.msra.mxu0 %v2585
      %3645 = vmatprep.subr.bf16.mxu0 %v2588
      %3646 = vmatpush1.bf16.msra.mxu0 %v2587
      %3647 = vmatprep.subr.bf16.mxu0 %v2590
      %3648 = vmatpush1.bf16.msra.mxu0 %v2589
      %3649 = vmatprep.subr.bf16.mxu0 %v2592
      %3650 = vmatpush1.bf16.msra.mxu0 %v2591
      %3651 = vmatprep.subr.bf16.mxu0 %v2594
      %3652 = vmatpush1.bf16.msra.mxu0 %v2593
      %3653 = vmatprep.subr.bf16.mxu0 %v2596
      %3654 = vmatpush1.bf16.msra.mxu0 %v2595
      %3655 = vmatprep.subr.bf16.mxu0 %v2598
      %3656 = vmatpush1.bf16.msra.mxu0 %v2597
      %3657 = vmatprep.subr.bf16.mxu0 %v2600
      %3658 = vmatpush1.bf16.msra.mxu0 %v2599
      %3659 = vmatprep.subr.bf16.mxu0 %v2602
      %3660 = vmatpush1.bf16.msra.mxu0 %v2601
      %3661 = vmatprep.subr.bf16.mxu0 %v2604
      %3662 = vmatpush1.bf16.msra.mxu0 %v2603
      %3663 = vmatprep.subr.bf16.mxu0 %v2606
      %3664 = vmatpush1.bf16.msra.mxu0 %v2605
      %3665 = vmatprep.subr.bf16.mxu0 %v2608
      %3666 = vmatpush1.bf16.msra.mxu0 %v2607
      %3667 = vmatprep.mubr.bf16.mxu0 %v835
      %3668 = vmatmul.mubr.bf16.gmra.mrb[0].mxu0 %v834
      %v3669 = vpop.f32.mrb[0].mxu0
      %v3670 = vadd.f32 %v3629, %v3669
      %v3671 = vpop.f32.mrb[0].mxu0
      %v3672 = vadd.f32 %v3631, %v3671
      %v3673 = vpop.f32.mrb[0].mxu0
      %v3674 = vpop.f32.mrb[0].mxu0
      %3675 = vdwg.mxu0
      %3676 = vmatprep.subr.bf16.mxu0 %v2610
      %3677 = vmatpush1.bf16.msra.mxu0 %v2609
      %3678 = vmatprep.subr.bf16.mxu0 %v2612
      %3679 = vmatpush1.bf16.msra.mxu0 %v2611
      %3680 = vmatprep.subr.bf16.mxu0 %v2614
      %3681 = vmatpush1.bf16.msra.mxu0 %v2613
      %3682 = vmatprep.subr.bf16.mxu0 %v2616
      %3683 = vmatpush1.bf16.msra.mxu0 %v2615
      %3684 = vmatprep.subr.bf16.mxu0 %v2618
      %3685 = vmatpush1.bf16.msra.mxu0 %v2617
      %3686 = vmatprep.subr.bf16.mxu0 %v2620
      %3687 = vmatpush1.bf16.msra.mxu0 %v2619
      %3688 = vmatprep.subr.bf16.mxu0 %v2622
      %3689 = vmatpush1.bf16.msra.mxu0 %v2621
      %3690 = vmatprep.subr.bf16.mxu0 %v2624
      %3691 = vmatpush1.bf16.msra.mxu0 %v2623
      %3692 = vmatprep.subr.bf16.mxu0 %v2626
      %3693 = vmatpush1.bf16.msra.mxu0 %v2625
      %3694 = vmatprep.subr.bf16.mxu0 %v2628
      %3695 = vmatpush1.bf16.msra.mxu0 %v2627
      %3696 = vmatprep.subr.bf16.mxu0 %v2630
      %3697 = vmatpush1.bf16.msra.mxu0 %v2629
      %3698 = vmatprep.subr.bf16.mxu0 %v2632
      %3699 = vmatpush1.bf16.msra.mxu0 %v2631
      %3700 = vmatprep.subr.bf16.mxu0 %v2634
      %3701 = vmatpush1.bf16.msra.mxu0 %v2633
      %3702 = vmatprep.subr.bf16.mxu0 %v2636
      %3703 = vmatpush1.bf16.msra.mxu0 %v2635
      %3704 = vmatprep.subr.bf16.mxu0 %v2638
      %3705 = vmatpush1.bf16.msra.mxu0 %v2637
      %3706 = vmatprep.subr.bf16.mxu0 %v2640
      %3707 = vmatpush1.bf16.msra.mxu0 %v2639
      %3708 = vmatprep.mubr.bf16.mxu0 %v837
      %3709 = vmatmul.mubr.bf16.gmra.mrb[0].mxu0 %v836
      %v3710 = vpop.f32.mrb[0].mxu0
      %v3711 = vadd.f32 %v3670, %v3710
      %v3712 = vpop.f32.mrb[0].mxu0
      %v3713 = vadd.f32 %v3672, %v3712
      %v3714 = vpop.f32.mrb[0].mxu0
      %v3715 = vpop.f32.mrb[0].mxu0
      %3716 = vdwg.mxu0
      %3717 = vmatprep.subr.bf16.mxu0 %v2642
      %3718 = vmatpush1.bf16.msra.mxu0 %v2641
      %3719 = vmatprep.subr.bf16.mxu0 %v2644
      %3720 = vmatpush1.bf16.msra.mxu0 %v2643
      %3721 = vmatprep.subr.bf16.mxu0 %v2646
      %3722 = vmatpush1.bf16.msra.mxu0 %v2645
      %3723 = vmatprep.subr.bf16.mxu0 %v2648
      %3724 = vmatpush1.bf16.msra.mxu0 %v2647
      %3725 = vmatprep.subr.bf16.mxu0 %v2650
      %3726 = vmatpush1.bf16.msra.mxu0 %v2649
      %3727 = vmatprep.subr.bf16.mxu0 %v2652
      %3728 = vmatpush1.bf16.msra.mxu0 %v2651
      %3729 = vmatprep.subr.bf16.mxu0 %v2654
      %3730 = vmatpush1.bf16.msra.mxu0 %v2653
      %3731 = vmatprep.subr.bf16.mxu0 %v2656
      %3732 = vmatpush1.bf16.msra.mxu0 %v2655
      %3733 = vmatprep.subr.bf16.mxu0 %v2658
      %3734 = vmatpush1.bf16.msra.mxu0 %v2657
      %3735 = vmatprep.subr.bf16.mxu0 %v2660
      %3736 = vmatpush1.bf16.msra.mxu0 %v2659
      %3737 = vmatprep.subr.bf16.mxu0 %v2662
      %3738 = vmatpush1.bf16.msra.mxu0 %v2661
      %3739 = vmatprep.subr.bf16.mxu0 %v2664
      %3740 = vmatpush1.bf16.msra.mxu0 %v2663
      %3741 = vmatprep.subr.bf16.mxu0 %v2666
      %3742 = vmatpush1.bf16.msra.mxu0 %v2665
      %3743 = vmatprep.subr.bf16.mxu0 %v2668
      %3744 = vmatpush1.bf16.msra.mxu0 %v2667
      %3745 = vmatprep.subr.bf16.mxu0 %v2670
      %3746 = vmatpush1.bf16.msra.mxu0 %v2669
      %3747 = vmatprep.subr.bf16.mxu0 %v2672
      %3748 = vmatpush1.bf16.msra.mxu0 %v2671
      %3749 = vmatprep.mubr.bf16.mxu0 %v839
      %3750 = vmatmul.mubr.bf16.gmra.mrb[0].mxu0 %v838
      %v3751 = vpop.f32.mrb[0].mxu0
      %v3752 = vadd.f32 %v3711, %v3751
      %v3753 = vpop.f32.mrb[0].mxu0
      %v3754 = vadd.f32 %v3713, %v3753
      %v3755 = vpop.f32.mrb[0].mxu0
      %v3756 = vpop.f32.mrb[0].mxu0
      %3757 = vdwg.mxu0
      %3758 = vmatprep.subr.bf16.mxu0 %v2674
      %3759 = vmatpush1.bf16.msra.mxu0 %v2673
      %3760 = vmatprep.subr.bf16.mxu0 %v2676
      %3761 = vmatpush1.bf16.msra.mxu0 %v2675
      %3762 = vmatprep.subr.bf16.mxu0 %v2678
      %3763 = vmatpush1.bf16.msra.mxu0 %v2677
      %3764 = vmatprep.subr.bf16.mxu0 %v2680
      %3765 = vmatpush1.bf16.msra.mxu0 %v2679
      %3766 = vmatprep.subr.bf16.mxu0 %v2682
      %3767 = vmatpush1.bf16.msra.mxu0 %v2681
      %3768 = vmatprep.subr.bf16.mxu0 %v2684
      %3769 = vmatpush1.bf16.msra.mxu0 %v2683
      %3770 = vmatprep.subr.bf16.mxu0 %v2686
      %3771 = vmatpush1.bf16.msra.mxu0 %v2685
      %3772 = vmatprep.subr.bf16.mxu0 %v2688
      %3773 = vmatpush1.bf16.msra.mxu0 %v2687
      %3774 = vmatprep.subr.bf16.mxu0 %v2690
      %3775 = vmatpush1.bf16.msra.mxu0 %v2689
      %3776 = vmatprep.subr.bf16.mxu0 %v2692
      %3777 = vmatpush1.bf16.msra.mxu0 %v2691
      %3778 = vmatprep.subr.bf16.mxu0 %v2694
      %3779 = vmatpush1.bf16.msra.mxu0 %v2693
      %3780 = vmatprep.subr.bf16.mxu0 %v2696
      %3781 = vmatpush1.bf16.msra.mxu0 %v2695
      %3782 = vmatprep.subr.bf16.mxu0 %v2698
      %3783 = vmatpush1.bf16.msra.mxu0 %v2697
      %3784 = vmatprep.subr.bf16.mxu0 %v2700
      %3785 = vmatpush1.bf16.msra.mxu0 %v2699
      %3786 = vmatprep.subr.bf16.mxu0 %v2702
      %3787 = vmatpush1.bf16.msra.mxu0 %v2701
      %3788 = vmatprep.subr.bf16.mxu0 %v2704
      %3789 = vmatpush1.bf16.msra.mxu0 %v2703
      %3790 = vmatprep.mubr.bf16.mxu0 %v841
      %3791 = vmatmul.mubr.bf16.gmra.mrb[0].mxu0 %v840
      %v3792 = vpop.f32.mrb[0].mxu0
      %v3793 = vadd.f32 %v3752, %v3792
      %v3794 = vpop.f32.mrb[0].mxu0
      %v3795 = vadd.f32 %v3754, %v3794
      %v3796 = vpop.f32.mrb[0].mxu0
      %v3797 = vpop.f32.mrb[0].mxu0
      %3798 = vdwg.mxu0
      %3799 = vmatprep.subr.bf16.mxu0 %v2706
      %3800 = vmatpush1.bf16.msra.mxu0 %v2705
      %3801 = vmatprep.subr.bf16.mxu0 %v2708
      %3802 = vmatpush1.bf16.msra.mxu0 %v2707
      %3803 = vmatprep.subr.bf16.mxu0 %v2710
      %3804 = vmatpush1.bf16.msra.mxu0 %v2709
      %3805 = vmatprep.subr.bf16.mxu0 %v2712
      %3806 = vmatpush1.bf16.msra.mxu0 %v2711
      %3807 = vmatprep.subr.bf16.mxu0 %v2714
      %3808 = vmatpush1.bf16.msra.mxu0 %v2713
      %3809 = vmatprep.subr.bf16.mxu0 %v2716
      %3810 = vmatpush1.bf16.msra.mxu0 %v2715
      %3811 = vmatprep.subr.bf16.mxu0 %v2718
      %3812 = vmatpush1.bf16.msra.mxu0 %v2717
      %3813 = vmatprep.subr.bf16.mxu0 %v2720
      %3814 = vmatpush1.bf16.msra.mxu0 %v2719
      %3815 = vmatprep.subr.bf16.mxu0 %v2722
      %3816 = vmatpush1.bf16.msra.mxu0 %v2721
      %3817 = vmatprep.subr.bf16.mxu0 %v2724
      %3818 = vmatpush1.bf16.msra.mxu0 %v2723
      %3819 = vmatprep.subr.bf16.mxu0 %v2726
      %3820 = vmatpush1.bf16.msra.mxu0 %v2725
      %3821 = vmatprep.subr.bf16.mxu0 %v2728
      %3822 = vmatpush1.bf16.msra.mxu0 %v2727
      %3823 = vmatprep.subr.bf16.mxu0 %v2730
      %3824 = vmatpush1.bf16.msra.mxu0 %v2729
      %3825 = vmatprep.subr.bf16.mxu0 %v2732
      %3826 = vmatpush1.bf16.msra.mxu0 %v2731
      %3827 = vmatprep.subr.bf16.mxu0 %v2734
      %3828 = vmatpush1.bf16.msra.mxu0 %v2733
      %3829 = vmatprep.subr.bf16.mxu0 %v2736
      %3830 = vmatpush1.bf16.msra.mxu0 %v2735
      %3831 = vmatprep.mubr.bf16.mxu0 %v843
      %3832 = vmatmul.mubr.bf16.gmra.mrb[0].mxu0 %v842
      %v3833 = vpop.f32.mrb[0].mxu0
      %v3834 = vadd.f32 %v3793, %v3833
      %v3835 = vpop.f32.mrb[0].mxu0
      %v3836 = vadd.f32 %v3795, %v3835
      %v3837 = vpop.f32.mrb[0].mxu0
      %v3838 = vpop.f32.mrb[0].mxu0
      %3839 = vdwg.mxu0
      %3840 = vmatprep.subr.bf16.mxu0 %v2738
      %3841 = vmatpush1.bf16.msra.mxu0 %v2737
      %3842 = vmatprep.subr.bf16.mxu0 %v2740
      %3843 = vmatpush1.bf16.msra.mxu0 %v2739
      %3844 = vmatprep.subr.bf16.mxu0 %v2742
      %3845 = vmatpush1.bf16.msra.mxu0 %v2741
      %3846 = vmatprep.subr.bf16.mxu0 %v2744
      %3847 = vmatpush1.bf16.msra.mxu0 %v2743
      %3848 = vmatprep.subr.bf16.mxu0 %v2746
      %3849 = vmatpush1.bf16.msra.mxu0 %v2745
      %3850 = vmatprep.subr.bf16.mxu0 %v2748
      %3851 = vmatpush1.bf16.msra.mxu0 %v2747
      %3852 = vmatprep.subr.bf16.mxu0 %v2750
      %3853 = vmatpush1.bf16.msra.mxu0 %v2749
      %3854 = vmatprep.subr.bf16.mxu0 %v2752
      %3855 = vmatpush1.bf16.msra.mxu0 %v2751
      %3856 = vmatprep.subr.bf16.mxu0 %v2754
      %3857 = vmatpush1.bf16.msra.mxu0 %v2753
      %3858 = vmatprep.subr.bf16.mxu0 %v2756
      %3859 = vmatpush1.bf16.msra.mxu0 %v2755
      %3860 = vmatprep.subr.bf16.mxu0 %v2758
      %3861 = vmatpush1.bf16.msra.mxu0 %v2757
      %3862 = vmatprep.subr.bf16.mxu0 %v2760
      %3863 = vmatpush1.bf16.msra.mxu0 %v2759
      %3864 = vmatprep.subr.bf16.mxu0 %v2762
      %3865 = vmatpush1.bf16.msra.mxu0 %v2761
      %3866 = vmatprep.subr.bf16.mxu0 %v2764
      %3867 = vmatpush1.bf16.msra.mxu0 %v2763
      %3868 = vmatprep.subr.bf16.mxu0 %v2766
      %3869 = vmatpush1.bf16.msra.mxu0 %v2765
      %3870 = vmatprep.subr.bf16.mxu0 %v2768
      %3871 = vmatpush1.bf16.msra.mxu0 %v2767
      %3872 = vmatprep.mubr.bf16.mxu0 %v845
      %3873 = vmatmul.mubr.bf16.gmra.mrb[0].mxu0 %v844
      %v3874 = vpop.f32.mrb[0].mxu0
      %v3875 = vadd.f32 %v3834, %v3874
      %v3876 = vpop.f32.mrb[0].mxu0
      %v3877 = vadd.f32 %v3836, %v3876
      %v3878 = vpop.f32.mrb[0].mxu0
      %v3879 = vpop.f32.mrb[0].mxu0
      %3880 = vdwg.mxu0
      %3881 = vmatprep.subr.bf16.mxu0 %v2770
      %3882 = vmatpush1.bf16.msra.mxu0 %v2769
      %3883 = vmatprep.subr.bf16.mxu0 %v2772
      %3884 = vmatpush1.bf16.msra.mxu0 %v2771
      %3885 = vmatprep.subr.bf16.mxu0 %v2774
      %3886 = vmatpush1.bf16.msra.mxu0 %v2773
      %3887 = vmatprep.subr.bf16.mxu0 %v2776
      %3888 = vmatpush1.bf16.msra.mxu0 %v2775
      %3889 = vmatprep.subr.bf16.mxu0 %v2778
      %3890 = vmatpush1.bf16.msra.mxu0 %v2777
      %3891 = vmatprep.subr.bf16.mxu0 %v2780
      %3892 = vmatpush1.bf16.msra.mxu0 %v2779
      %3893 = vmatprep.subr.bf16.mxu0 %v2782
      %3894 = vmatpush1.bf16.msra.mxu0 %v2781
      %3895 = vmatprep.subr.bf16.mxu0 %v2784
      %3896 = vmatpush1.bf16.msra.mxu0 %v2783
      %3897 = vmatprep.subr.bf16.mxu0 %v2786
      %3898 = vmatpush1.bf16.msra.mxu0 %v2785
      %3899 = vmatprep.subr.bf16.mxu0 %v2788
      %3900 = vmatpush1.bf16.msra.mxu0 %v2787
      %3901 = vmatprep.subr.bf16.mxu0 %v2790
      %3902 = vmatpush1.bf16.msra.mxu0 %v2789
      %3903 = vmatprep.subr.bf16.mxu0 %v2792
      %3904 = vmatpush1.bf16.msra.mxu0 %v2791
      %3905 = vmatprep.subr.bf16.mxu0 %v2794
      %3906 = vmatpush1.bf16.msra.mxu0 %v2793
      %3907 = vmatprep.subr.bf16.mxu0 %v2796
      %3908 = vmatpush1.bf16.msra.mxu0 %v2795
      %3909 = vmatprep.subr.bf16.mxu0 %v2798
      %3910 = vmatpush1.bf16.msra.mxu0 %v2797
      %3911 = vmatprep.subr.bf16.mxu0 %v2800
      %3912 = vmatpush1.bf16.msra.mxu0 %v2799
      %3913 = vmatprep.mubr.bf16.mxu0 %v847
      %3914 = vmatmul.mubr.bf16.gmra.mrb[0].mxu0 %v846
      %v3915 = vpop.f32.mrb[0].mxu0
      %v3916 = vadd.f32 %v3875, %v3915
      %v3917 = vpop.f32.mrb[0].mxu0
      %v3918 = vadd.f32 %v3877, %v3917
      %v3919 = vpop.f32.mrb[0].mxu0
      %v3920 = vpop.f32.mrb[0].mxu0
      %3921 = vdwg.mxu0
      %3922 = vmatprep.subr.bf16.mxu0 %v2802
      %3923 = vmatpush1.bf16.msra.mxu0 %v2801
      %3924 = vmatprep.subr.bf16.mxu0 %v2804
      %3925 = vmatpush1.bf16.msra.mxu0 %v2803
      %3926 = vmatprep.subr.bf16.mxu0 %v2806
      %3927 = vmatpush1.bf16.msra.mxu0 %v2805
      %3928 = vmatprep.subr.bf16.mxu0 %v2808
      %3929 = vmatpush1.bf16.msra.mxu0 %v2807
      %3930 = vmatprep.subr.bf16.mxu0 %v2810
      %3931 = vmatpush1.bf16.msra.mxu0 %v2809
      %3932 = vmatprep.subr.bf16.mxu0 %v2812
      %3933 = vmatpush1.bf16.msra.mxu0 %v2811
      %3934 = vmatprep.subr.bf16.mxu0 %v2814
      %3935 = vmatpush1.bf16.msra.mxu0 %v2813
      %3936 = vmatprep.subr.bf16.mxu0 %v2816
      %3937 = vmatpush1.bf16.msra.mxu0 %v2815
      %3938 = vmatprep.subr.bf16.mxu0 %v2818
      %3939 = vmatpush1.bf16.msra.mxu0 %v2817
      %3940 = vmatprep.subr.bf16.mxu0 %v2820
      %3941 = vmatpush1.bf16.msra.mxu0 %v2819
      %3942 = vmatprep.subr.bf16.mxu0 %v2822
      %3943 = vmatpush1.bf16.msra.mxu0 %v2821
      %3944 = vmatprep.subr.bf16.mxu0 %v2824
      %3945 = vmatpush1.bf16.msra.mxu0 %v2823
      %3946 = vmatprep.subr.bf16.mxu0 %v2826
      %3947 = vmatpush1.bf16.msra.mxu0 %v2825
      %3948 = vmatprep.subr.bf16.mxu0 %v2828
      %3949 = vmatpush1.bf16.msra.mxu0 %v2827
      %3950 = vmatprep.subr.bf16.mxu0 %v2830
      %3951 = vmatpush1.bf16.msra.mxu0 %v2829
      %3952 = vmatprep.subr.bf16.mxu0 %v2832
      %3953 = vmatpush1.bf16.msra.mxu0 %v2831
      %3954 = vmatprep.mubr.bf16.mxu0 %v849
      %3955 = vmatmul.mubr.bf16.gmra.mrb[0].mxu0 %v848
      %v3956 = vpop.f32.mrb[0].mxu0
      %v3957 = vadd.f32 %v3916, %v3956
      %v3958 = vpop.f32.mrb[0].mxu0
      %v3959 = vadd.f32 %v3918, %v3958
      %v3960 = vpop.f32.mrb[0].mxu0
      %v3961 = vpop.f32.mrb[0].mxu0
      %3962 = vdwg.mxu0
      %3963 = vmatprep.subr.bf16.mxu0 %v2834
      %3964 = vmatpush1.bf16.msra.mxu0 %v2833
      %3965 = vmatprep.subr.bf16.mxu0 %v2836
      %3966 = vmatpush1.bf16.msra.mxu0 %v2835
      %3967 = vmatprep.subr.bf16.mxu0 %v2838
      %3968 = vmatpush1.bf16.msra.mxu0 %v2837
      %3969 = vmatprep.subr.bf16.mxu0 %v2840
      %3970 = vmatpush1.bf16.msra.mxu0 %v2839
      %3971 = vmatprep.subr.bf16.mxu0 %v2842
      %3972 = vmatpush1.bf16.msra.mxu0 %v2841
      %3973 = vmatprep.subr.bf16.mxu0 %v2844
      %3974 = vmatpush1.bf16.msra.mxu0 %v2843
      %3975 = vmatprep.subr.bf16.mxu0 %v2846
      %3976 = vmatpush1.bf16.msra.mxu0 %v2845
      %3977 = vmatprep.subr.bf16.mxu0 %v2848
      %3978 = vmatpush1.bf16.msra.mxu0 %v2847
      %3979 = vmatprep.subr.bf16.mxu0 %v2850
      %3980 = vmatpush1.bf16.msra.mxu0 %v2849
      %3981 = vmatprep.subr.bf16.mxu0 %v2852
      %3982 = vmatpush1.bf16.msra.mxu0 %v2851
      %3983 = vmatprep.subr.bf16.mxu0 %v2854
      %3984 = vmatpush1.bf16.msra.mxu0 %v2853
      %3985 = vmatprep.subr.bf16.mxu0 %v2856
      %3986 = vmatpush1.bf16.msra.mxu0 %v2855
      %3987 = vmatprep.subr.bf16.mxu0 %v2858
      %3988 = vmatpush1.bf16.msra.mxu0 %v2857
      %3989 = vmatprep.subr.bf16.mxu0 %v2860
      %3990 = vmatpush1.bf16.msra.mxu0 %v2859
      %3991 = vmatprep.subr.bf16.mxu0 %v2862
      %3992 = vmatpush1.bf16.msra.mxu0 %v2861
      %3993 = vmatprep.subr.bf16.mxu0 %v2864
      %3994 = vmatpush1.bf16.msra.mxu0 %v2863
      %3995 = vmatprep.mubr.bf16.mxu0 %v851
      %3996 = vmatmul.mubr.bf16.gmra.mrb[0].mxu0 %v850
      %v3997 = vpop.f32.mrb[0].mxu0
      %v3998 = vadd.f32 %v3957, %v3997
      %v3999 = vpop.f32.mrb[0].mxu0
      %v4000 = vadd.f32 %v3959, %v3999
      %v4001 = vpop.f32.mrb[0].mxu0
      %v4002 = vpop.f32.mrb[0].mxu0
      %4003 = vdwg.mxu0
      %4004 = vmatprep.subr.bf16.mxu0 %v2866
      %4005 = vmatpush1.bf16.msra.mxu0 %v2865
      %4006 = vmatprep.subr.bf16.mxu0 %v2868
      %4007 = vmatpush1.bf16.msra.mxu0 %v2867
      %4008 = vmatprep.subr.bf16.mxu0 %v2870
      %4009 = vmatpush1.bf16.msra.mxu0 %v2869
      %4010 = vmatprep.subr.bf16.mxu0 %v2872
      %4011 = vmatpush1.bf16.msra.mxu0 %v2871
      %4012 = vmatprep.subr.bf16.mxu0 %v2874
      %4013 = vmatpush1.bf16.msra.mxu0 %v2873
      %4014 = vmatprep.subr.bf16.mxu0 %v2876
      %4015 = vmatpush1.bf16.msra.mxu0 %v2875
      %4016 = vmatprep.subr.bf16.mxu0 %v2878
      %4017 = vmatpush1.bf16.msra.mxu0 %v2877
      %4018 = vmatprep.subr.bf16.mxu0 %v2880
      %4019 = vmatpush1.bf16.msra.mxu0 %v2879
      %4020 = vmatprep.subr.bf16.mxu0 %v2882
      %4021 = vmatpush1.bf16.msra.mxu0 %v2881
      %4022 = vmatprep.subr.bf16.mxu0 %v2884
      %4023 = vmatpush1.bf16.msra.mxu0 %v2883
      %4024 = vmatprep.subr.bf16.mxu0 0
      %4025 = vmatpush1.bf16.msra.mxu0 0
      %4026 = vmatprep.subr.bf16.mxu0 0
      %4027 = vmatpush1.bf16.msra.mxu0 0
      %4028 = vmatprep.subr.bf16.mxu0 0
      %4029 = vmatpush1.bf16.msra.mxu0 0
      %4030 = vmatprep.subr.bf16.mxu0 0
      %4031 = vmatpush1.bf16.msra.mxu0 0
      %4032 = vmatprep.subr.bf16.mxu0 0
      %4033 = vmatpush1.bf16.msra.mxu0 0
      %4034 = vmatprep.subr.bf16.mxu0 0
      %4035 = vmatpush1.bf16.msra.mxu0 0
      %4036 = vmatprep.mubr.bf16.mxu0 %v3387
      %4037 = vmatmul.mubr.bf16.gmra.mrb[0].mxu0 %v852
      %v4038 = vpop.f32.mrb[0].mxu0
      %v4039 = vadd.f32 %v3998, %v4038
      %v4040 = vpop.f32.mrb[0].mxu0
      %v4041 = vadd.f32 %v4000, %v4040
      %v4042 = vpop.f32.mrb[0].mxu0
      %v4043 = vpop.f32.mrb[0].mxu0
      %4044 = vdwg.mxu0
      %v4045 = vmax.f32 %v4039, 0.0
      %v4046 = vxor.u32 %v4041, 2147483648
      %v4047 = vmul.f32 %v4046, 1.442695
      %v4048 = vpow.pop %v4047
      %v4049 = vadd.f32 %v4048, 1.0
      %v4050 = vrcp.pop %v4049
      %v4051 = vmul.f32 1.0, %v4050
      %v4052 = vmul.f32 %v4045, %v4051
      %s4053 = smul.u32 %s240, 8
      %s4054 = sadd.s32 %s4053, 8
      %p4055 = scmp.le.s32.totalorder %s4054, 21
      // Predicated region
      $region37: #{malconv_forward.1} parent=31 // pred_check
        %p4056 = pneg %p4055
      $region38: #{malconv_forward.1} parent=31 // pred_check_branch
        %4058 = sbr.rel (%p4056) target = $region40
      $region39: #{malconv_forward.1} parent=31 // pred_region
        %v4059 = vld [vmem:[%s237] sm:$0x1]
        %v4060 = vrot.slane %v4052, 4
        %v4061 = vmax.f32 %v4052, %v4060
        %v4062 = vrot.slane %v4061, 2
        %v4063 = vmax.f32 %v4061, %v4062
        %v4064 = vrot.slane %v4063, 1
        %v4065 = vmax.f32 %v4063, %v4064
        %v4066 = vmax.f32 %v4059, %v4065
        %4067 = vst [vmem:[%s237] sm:$0x1] %v4066
      $region40: #{malconv_forward.1} parent=31 // pred_fallthru
        _
      %p4068 = scmp.gt.s32.totalorder %s4054, 21
      // Predicated region
      $region41: #{malconv_forward.1} parent=31 // pred_check
        %p4069 = pneg %p4068
      $region42: #{malconv_forward.1} parent=31 // pred_check_branch
        %4071 = sbr.rel (%p4069) target = $region44
      $region43: #{malconv_forward.1} parent=31 // pred_region
        %v4072 = vlaneseq
        %v4073 = vshrl.u32 %v4072, 7
        %v4074 = vstv %s4053
        %v4075 = vadd.s32 %v4074, %v4073
        %vm4076 = vcmp.lt.s32.totalorder %v4075, 21
        %v4077 = vsel %vm4076, 1, 0
        %vm4078 = vcmp.eq.s32.totalorder %v4077, 1
        %v4079 = vsel %vm4078, %v4052, 0.0
        %v4080 = vld [vmem:[%s237] sm:$0x1]
        %v4081 = vrot.slane %v4079, 4
        %v4082 = vmax.f32 %v4079, %v4081
        %v4083 = vrot.slane %v4082, 2
        %v4084 = vmax.f32 %v4082, %v4083
        %v4085 = vrot.slane %v4084, 1
        %v4086 = vmax.f32 %v4084, %v4085
        %v4087 = vmax.f32 %v4080, %v4086
        %4088 = vst [vmem:[%s237] sm:$0x1] %v4087
      $region44: #{malconv_forward.1} parent=31 // pred_fallthru
        _
      %p4089 = scmp.lt.s32.totalorder %s19, 1
      %s4090 = scalar_select %p4089, %s19, 1
      %p4091 = scmp.lt.s32.totalorder %s20, 1
      %s4092 = scalar_select %p4091, %s20, 1
      %s4093 = smul.addr %s4090, 2
      %s4094 = sadd.s32 %s4092, %s4093
      %s4095 = scalar_lea.vmem %s3, %s4094
      // Predicated region
      $region45: #{malconv_forward.1} parent=31 // pred_check
        %p4096 = pneg %p131
      $region46: #{malconv_forward.1} parent=31 // pred_check_branch
        %4098 = sbr.rel (%p4096) target = $region48
      $region47: #{malconv_forward.1} parent=31 // pred_region
        _
      $region48: #{malconv_forward.1} parent=31 // pred_fallthru
        _
    $region32: #{malconv_forward.1} parent=5 // pred_fallthru
      _
    %p4099 = scmp.le.s32.totalorder 2, %s9
    // Predicated region
    $region49: #{malconv_forward.1} parent=5 // pred_check
      %p4100 = pneg %p4099
    $region50: #{malconv_forward.1} parent=5 // pred_check_branch
      %4102 = sbr.rel (%p4100) target = $region52
    $region51: #{malconv_forward.1} parent=5 // pred_region
      %s4103 = ssub.s32 %s9, 2
      // Predicated region
      $region53: #{malconv_forward.1} parent=51 // pred_check
        %p4104 = pneg %p137
      $region54: #{malconv_forward.1} parent=51 // pred_check_branch
        %4106 = sbr.rel (%p4104) target = $region56
      $region55: #{malconv_forward.1} parent=51 // pred_region
        %p4107 = scmp.lt.s32.totalorder %s22, 1
        %s4108 = scalar_select %p4107, %s22, 1
        %p4109 = scmp.lt.s32.totalorder %s23, 1
        %s4110 = scalar_select %p4109, %s23, 1
        %s4111 = smul.addr %s4108, 2
        %s4112 = sadd.s32 %s4110, %s4111
        %s4113 = scalar_lea.vmem %s3, %s4112
      $region56: #{malconv_forward.1} parent=51 // pred_fallthru
        _
    $region52: #{malconv_forward.1} parent=5 // pred_fallthru
      _
  $region6: #{malconv_forward.1} parent=0 // loop_footer
    %s13 = sadd.s32 1, %s9
  $region7: #{malconv_forward.1} parent=0 // loop_footer_branch
    %8 = sbr.rel target = $region3
  $region8: #{malconv_forward.1} parent=0 // loop_exit
    _

</llo_original>
